<compile_context>
chip_gen: v7x
topology: tpu7x:2x2x1
jax: 0.10.0
libtpu: 0.0.40
codegen_flags: <defaults>
</compile_context>

<pallas_src>
import math
import functools

import jax
import jax.numpy as jnp
from jax import lax
from jax.experimental import pallas as pl
from jax.experimental.pallas import tpu as pltpu

LN_EPS = 1e-5
_MASK_NEG = -1e30  # large finite negative: avoids -inf 0/0 NaN for masked rows


def _layer_norm(h, gamma, beta):
    mu = jnp.mean(h, axis=-1, keepdims=True)
    var = jnp.mean((h - mu) ** 2, axis=-1, keepdims=True)
    return (h - mu) * lax.rsqrt(var + LN_EPS) * gamma + beta


def _gelu_exact(x):
    # PyTorch nn.GELU() default: exact erf-based GELU (f32, VPU/EUP).
    return 0.5 * x * (1.0 + lax.erf(x * (1.0 / math.sqrt(2.0))))


def _transformer_layer_kernel(
    # inputs
    x_q_ref, x_kv_ref,
    wq_ref, bq_ref, wk_ref, bk_ref, wv_ref, bv_ref, wo_ref,
    g1_ref, be1_ref,
    w1_ref, b1_ref, w2_ref, b2_ref,
    g2_ref, be2_ref,
    # output
    o_ref,
    *, n_heads, d_k, d_v, mask, compute_dtype, approx_recip, hidden_chunk,
):
    xq = x_q_ref[0]        # (tq, D)  query rows handled by this grid step (f32)
    xkv = x_kv_ref[0]      # (N,  D)  full sequence for K/V (f32)
    tq, D = xq.shape
    N = xkv.shape[0]
    H = n_heads
    cd = compute_dtype

    # Broadcast activations over heads so all projections are canonical
    # leading-batch matmuls (no in-kernel reshape/transpose relayouts).
    xq_b = jnp.broadcast_to(xq.astype(cd)[None], (H, tq, D))
    xkv_b = jnp.broadcast_to(xkv.astype(cd)[None], (H, N, D))

    # ---- per-head QKV projections (batched MXU matmuls, f32 accumulation) ----
    q3 = jnp.einsum('htd,hdk->htk', xq_b, wq_ref[...],
                    preferred_element_type=jnp.float32) + bq_ref[...]
    k3 = jnp.einsum('hnd,hdk->hnk', xkv_b, wk_ref[...],
                    preferred_element_type=jnp.float32) + bk_ref[...]
    v3 = jnp.einsum('hnd,hdk->hnk', xkv_b, wv_ref[...],
                    preferred_element_type=jnp.float32) + bv_ref[...]

    q3 = q3 * (1.0 / math.sqrt(d_k))          # scale in f32 before the cast

    # ---- scores: contract the last dims directly (no explicit K transpose) ----
    s = jnp.einsum('hqd,hkd->hqk', q3.astype(cd), k3.astype(cd),
                   preferred_element_type=jnp.float32)    # (H, tq, N) f32

    if mask == 'causal':
        q0 = pl.program_id(1) * tq
        row = q0 + lax.broadcasted_iota(jnp.int32, s.shape, 1)
        col = lax.broadcasted_iota(jnp.int32, s.shape, 2)
        s = jnp.where(col <= row, s, jnp.float32(_MASK_NEG))

    # ---- softmax (f32 elementwise; reciprocal on EUP when approx_recip) ----
    s = s - jnp.max(s, axis=-1, keepdims=True)
    e = jnp.exp(s)
    p = e * pl.reciprocal(jnp.sum(e, axis=-1, keepdims=True), approx=approx_recip)

    ctx3 = jnp.einsum('hqk,hkd->hqd', p.astype(cd), v3.astype(cd),
                      preferred_element_type=jnp.float32)  # (H, tq, d_v)

    # per-head output projection, reduced over heads:
    #   sum_h ctx_h @ Wo_h == concat_h(ctx_h) @ Wo   (Linear(..., bias=False))
    attn_out = jnp.sum(
        jnp.einsum('hqd,hdm->hqm', ctx3.astype(cd), wo_ref[...],
                   preferred_element_type=jnp.float32),
        axis=0)                                            # (tq, D)

    h1 = _layer_norm(xq + attn_out, g1_ref[...], be1_ref[...])

    # ---- MLP: Linear -> GELU -> Linear, chunked over d_hidden ----
    d_hidden = w1_ref.shape[1]
    h1_c = h1.astype(cd)
    mlp = jnp.zeros((tq, D), jnp.float32)
    for c0 in range(0, d_hidden, hidden_chunk):
        c1 = min(c0 + hidden_chunk, d_hidden)
        m = jnp.dot(h1_c, w1_ref[:, c0:c1],
                    preferred_element_type=jnp.float32) + b1_ref[:, c0:c1]
        m = _gelu_exact(m)
        mlp = mlp + jnp.dot(m.astype(cd), w2_ref[c0:c1, :],
                            preferred_element_type=jnp.float32)
    mlp = mlp + b2_ref[...]

    out = _layer_norm(h1 + mlp, g2_ref[...], be2_ref[...])
    o_ref[0] = out.astype(o_ref.dtype)


def transformer_layer(x, params, *, n_heads, d_k, d_v, mask='none',
                      q_tile=None, hidden_chunk=512, precise=False):
    """x: (batch, n_ctx, d_model) f32 -> (batch, n_ctx, d_model) f32."""
    assert mask in ('none', 'causal')
    B, N, D = x.shape

    compute_dtype = jnp.float32 if precise else jnp.bfloat16
    approx_recip = not precise

    # q-row tiling: bounds score/activation VMEM at O(tq * N) and gives the
    # grid >= 2 parallel points (v7x dual TC / megacore).
    if q_tile is None:
        q_tile = N if N <= 128 else 128
    tq = min(q_tile, N)
    assert N % tq == 0 and (tq == N or tq % 8 == 0)
    n_qt = N // tq

    d_hidden = params['w1'].shape[1]
    hidden_chunk = min(hidden_chunk, d_hidden)

    def as_compute(w):
        return w.astype(compute_dtype)

    f32 = jnp.float32
    # Pre-split QKV/O weights & biases to head-major outside the kernel
    # (plain XLA reshapes, free) so the kernel never relayouts activations.
    wq_h = as_compute(params['wq'].reshape(D, n_heads, d_k).transpose(1, 0, 2))
    wk_h = as_compute(params['wk'].reshape(D, n_heads, d_k).transpose(1, 0, 2))
    wv_h = as_compute(params['wv'].reshape(D, n_heads, d_v).transpose(1, 0, 2))
    wo_h = as_compute(params['wo'].reshape(n_heads, d_v, D))
    bq_h = params['bq'].reshape(n_heads, 1, d_k).astype(f32)
    bk_h = params['bk'].reshape(n_heads, 1, d_k).astype(f32)
    bv_h = params['bv'].reshape(n_heads, 1, d_v).astype(f32)

    param_list = [
        wq_h, bq_h, wk_h, bk_h, wv_h, bv_h, wo_h,
        params['ln1_g'].astype(f32), params['ln1_b'].astype(f32),
        as_compute(params['w1']), params['b1'].astype(f32),
        as_compute(params['w2']), params['b2'].astype(f32),
        params['ln2_g'].astype(f32), params['ln2_b'].astype(f32),
    ]

    def full_spec(a):
        nd = a.ndim
        # Constant index map -> fetched once for the whole grid.
        return pl.BlockSpec(a.shape, lambda b, qt, _nd=nd: (0,) * _nd)

    kernel = functools.partial(
        _transformer_layer_kernel,
        n_heads=n_heads, d_k=d_k, d_v=d_v, mask=mask,
        compute_dtype=compute_dtype, approx_recip=approx_recip,
        hidden_chunk=hidden_chunk)

    # ---- VMEM budget (explicit) and advisory cost estimate ----
    c_item = jnp.dtype(compute_dtype).itemsize
    param_bytes = sum(int(a.size) * a.dtype.itemsize for a in param_list)
    block_bytes = 4 * (2 * tq * D + N * D)                       # x_q, out, x_kv
    act_bytes = (
        c_item * n_heads * (tq + N) * D                          # head-broadcast x
        + (4 + c_item) * n_heads * (tq * d_k + N * (d_k + d_v))  # q3/k3/v3 (+casts)
        + (3 * 4 + c_item) * n_heads * tq * N                    # s / e / p
        + 4 * n_heads * tq * (d_v + D)                           # ctx3, per-head out
        + 4 * tq * (4 * D + 2 * hidden_chunk))                   # h1/mlp/out + chunk
    vmem_needed = 2 * param_bytes + 2 * block_bytes + act_bytes + (2 << 20)
    vmem_limit = int(min(64 << 20, max(32 << 20, vmem_needed)))

    flops = 2 * B * n_qt * (
        tq * D * n_heads * d_k                   # Q proj
        + N * D * n_heads * (d_k + d_v)          # K/V proj (per q tile)
        + n_heads * tq * N * (d_k + d_v)         # scores + ctx
        + tq * n_heads * d_v * D                 # output proj
        + 2 * tq * D * d_hidden)                 # MLP
    transcendentals = B * n_qt * (n_heads * tq * N + tq * d_hidden)
    cost = pl.CostEstimate(
        flops=int(flops),
        transcendentals=int(transcendentals),
        bytes_accessed=int(2 * x.size * 4 + param_bytes + B * n_qt * N * D * 4))

    xf = x.astype(f32)
    return pl.pallas_call(
        kernel,
        out_shape=jax.ShapeDtypeStruct((B, N, D), jnp.float32),
        grid_spec=pltpu.PrefetchScalarGridSpec(
            num_scalar_prefetch=0,
            grid=(B, n_qt),
            in_specs=[pl.BlockSpec((1, tq, D), lambda b, qt: (b, qt, 0)),  # q rows
                      pl.BlockSpec((1, N, D), lambda b, qt: (b, 0, 0))]    # full seq
                     + [full_spec(p) for p in param_list],
            out_specs=pl.BlockSpec((1, tq, D), lambda b, qt: (b, qt, 0)),
        ),
        compiler_params=pltpu.CompilerParams(
            dimension_semantics=("parallel", "parallel"),
            vmem_limit_bytes=vmem_limit),
        cost_estimate=cost,
    )(xf, xf, *param_list)


# ---------------- pure-JAX reference (mirrors the PyTorch forward) ----------
def reference_forward(x, p, *, n_heads, d_k, d_v, mask='none'):
    B, N, D = x.shape
    q = x @ p['wq'] + p['bq']
    k = x @ p['wk'] + p['bk']
    v = x @ p['wv'] + p['bv']

    def split(t, dh):
        return t.reshape(B, N, n_heads, dh).transpose(0, 2, 1, 3)  # (B,H,N,dh)

    Q, K, V = split(q, d_k), split(k, d_k), split(v, d_v)
    s = jnp.einsum('bhqd,bhkd->bhqk', Q / math.sqrt(d_k), K)
    if mask == 'causal':
        tri = jnp.tril(jnp.ones((N, N), jnp.float32))
        s = s + (1.0 - 1.0 / tri)
    pattn = jax.nn.softmax(s, axis=-1)
    ctx = jnp.einsum('bhqk,bhkd->bhqd', pattn, V)
    ctx = ctx.transpose(0, 2, 1, 3).reshape(B, N, n_heads * d_v)
    attn_out = ctx @ p['wo']

    def ln(h, g, b):
        mu = h.mean(-1, keepdims=True)
        var = ((h - mu) ** 2).mean(-1, keepdims=True)
        return (h - mu) / jnp.sqrt(var + LN_EPS) * g + b

    h1 = ln(x + attn_out, p['ln1_g'], p['ln1_b'])
    m = h1 @ p['w1'] + p['b1']
    m = 0.5 * m * (1.0 + lax.erf(m / math.sqrt(2.0)))
    m = m @ p['w2'] + p['b2']
    return ln(h1 + m, p['ln2_g'], p['ln2_b'])


if __name__ == "__main__":
    # Small config consistent with the module's __init__
    B, N = 2, 8
    d_model, d_k, d_v, n_heads, d_hidden = 32, 8, 8, 4, 64

    key = jax.random.PRNGKey(0)
    ks = jax.random.split(key, 16)
    f32 = jnp.float32

    def w(k, shape, scale=0.05):
        return (scale * jax.random.normal(k, shape)).astype(f32)

    params = {
        'wq': w(ks[0], (d_model, d_k * n_heads)),
        'bq': w(ks[1], (1, d_k * n_heads)),
        'wk': w(ks[2], (d_model, d_k * n_heads)),
        'bk': w(ks[3], (1, d_k * n_heads)),
        'wv': w(ks[4], (d_model, d_v * n_heads)),
        'bv': w(ks[5], (1, d_v * n_heads)),
        'wo': w(ks[6], (d_v * n_heads, d_model)),          # Linear(..., bias=False)
        'ln1_g': (1.0 + 0.01 * jax.random.normal(ks[7], (1, d_model))).astype(f32),
        'ln1_b': w(ks[8], (1, d_model), 0.01),
        'w1': w(ks[9], (d_model, d_hidden)),
        'b1': w(ks[10], (1, d_hidden), 0.01),
        'w2': w(ks[11], (d_hidden, d_model)),
        'b2': w(ks[12], (1, d_model), 0.01),
        'ln2_g': (1.0 + 0.01 * jax.random.normal(ks[13], (1, d_model))).astype(f32),
        'ln2_b': w(ks[14], (1, d_model), 0.01),
    }
    x = jax.random.normal(ks[15], (B, N, d_model)).astype(f32)

    # 1) precise path (f32 MXU operands, exact reciprocal) -- tight tolerance.
    out = transformer_layer(x, params, n_heads=n_heads, d_k=d_k, d_v=d_v,
                            mask='none', precise=True)
    out = jax.block_until_ready(out)
    ref = reference_forward(x, params, n_heads=n_heads, d_k=d_k, d_v=d_v, mask='none')
    assert out.shape == (B, N, d_model)
    err = float(jnp.max(jnp.abs(out - ref)))
    assert jnp.allclose(out, ref, atol=2e-4, rtol=2e-4), f"f32 path max err {err}"

    # 2) perf path (bf16 MXU operands + approx EUP reciprocal), causal mask.
    out_bf = transformer_layer(x, params, n_heads=n_heads, d_k=d_k, d_v=d_v,
                               mask='causal', precise=False)
    out_bf = jax.block_until_ready(out_bf)
    ref_c = reference_forward(x, params, n_heads=n_heads, d_k=d_k, d_v=d_v,
                              mask='causal')
    err_bf = float(jnp.max(jnp.abs(out_bf - ref_c)))
    assert jnp.allclose(out_bf, ref_c, atol=5e-2, rtol=5e-2), \
        f"bf16 path max err {err_bf}"

    print("KERNEL_OK")
</pallas_src>

<mosaic_0001>
module attributes {stable_mosaic.version = 11 : i64} {
  func.func @_transformer_layer_kernel(%arg0: i32, %arg1: i32, %arg2: memref<1x8x32xf32, #tpu.memory_space<vmem>>, %arg3: memref<1x8x32xf32, #tpu.memory_space<vmem>>, %arg4: memref<4x32x8xf32, #tpu.memory_space<vmem>>, %arg5: memref<4x1x8xf32, #tpu.memory_space<vmem>>, %arg6: memref<4x32x8xf32, #tpu.memory_space<vmem>>, %arg7: memref<4x1x8xf32, #tpu.memory_space<vmem>>, %arg8: memref<4x32x8xf32, #tpu.memory_space<vmem>>, %arg9: memref<4x1x8xf32, #tpu.memory_space<vmem>>, %arg10: memref<4x8x32xf32, #tpu.memory_space<vmem>>, %arg11: memref<1x32xf32, #tpu.memory_space<vmem>>, %arg12: memref<1x32xf32, #tpu.memory_space<vmem>>, %arg13: memref<32x64xf32, #tpu.memory_space<vmem>>, %arg14: memref<1x64xf32, #tpu.memory_space<vmem>>, %arg15: memref<64x32xf32, #tpu.memory_space<vmem>>, %arg16: memref<1x32xf32, #tpu.memory_space<vmem>>, %arg17: memref<1x32xf32, #tpu.memory_space<vmem>>, %arg18: memref<1x32xf32, #tpu.memory_space<vmem>>, %arg19: memref<1x8x32xf32, #tpu.memory_space<vmem>>) attributes {dimension_semantics = [#tpu.dimension_semantics<parallel>, #tpu.dimension_semantics<parallel>], iteration_bounds = array<i64: 2, 1>, scalar_prefetch = 0 : i64, scratch_operands = 0 : i64, tpu.core_type = #tpu.core_type<tc>, window_params = [{transform_indices = @transform_0, window_bounds = array<i64: 1, 8, 32>}, {transform_indices = @transform_1, window_bounds = array<i64: 1, 8, 32>}, {pipeline_mode = #tpu.pipeline_mode<synchronous>, transform_indices = @transform_2, window_bounds = array<i64: 4, 32, 8>}, {pipeline_mode = #tpu.pipeline_mode<synchronous>, transform_indices = @transform_3, window_bounds = array<i64: 4, 1, 8>}, {pipeline_mode = #tpu.pipeline_mode<synchronous>, transform_indices = @transform_4, window_bounds = array<i64: 4, 32, 8>}, {pipeline_mode = #tpu.pipeline_mode<synchronous>, transform_indices = @transform_5, window_bounds = array<i64: 4, 1, 8>}, {pipeline_mode = #tpu.pipeline_mode<synchronous>, transform_indices = @transform_6, window_bounds = array<i64: 4, 32, 8>}, {pipeline_mode = #tpu.pipeline_mode<synchronous>, transform_indices = @transform_7, window_bounds = array<i64: 4, 1, 8>}, {pipeline_mode = #tpu.pipeline_mode<synchronous>, transform_indices = @transform_8, window_bounds = array<i64: 4, 8, 32>}, {pipeline_mode = #tpu.pipeline_mode<synchronous>, transform_indices = @transform_9, window_bounds = array<i64: 1, 32>}, {pipeline_mode = #tpu.pipeline_mode<synchronous>, transform_indices = @transform_10, window_bounds = array<i64: 1, 32>}, {pipeline_mode = #tpu.pipeline_mode<synchronous>, transform_indices = @transform_11, window_bounds = array<i64: 32, 64>}, {pipeline_mode = #tpu.pipeline_mode<synchronous>, transform_indices = @transform_12, window_bounds = array<i64: 1, 64>}, {pipeline_mode = #tpu.pipeline_mode<synchronous>, transform_indices = @transform_13, window_bounds = array<i64: 64, 32>}, {pipeline_mode = #tpu.pipeline_mode<synchronous>, transform_indices = @transform_14, window_bounds = array<i64: 1, 32>}, {pipeline_mode = #tpu.pipeline_mode<synchronous>, transform_indices = @transform_15, window_bounds = array<i64: 1, 32>}, {pipeline_mode = #tpu.pipeline_mode<synchronous>, transform_indices = @transform_16, window_bounds = array<i64: 1, 32>}, {transform_indices = @transform_17, window_bounds = array<i64: 1, 8, 32>}]} {
    %c0 = arith.constant 0 : index
    %c0_0 = arith.constant 0 : index
    %c0_1 = arith.constant 0 : index
    %0 = vector.load %arg2[%c0, %c0_0, %c0_1] : memref<1x8x32xf32, #tpu.memory_space<vmem>>, vector<1x8x32xf32>
    %1 = vector.shape_cast %0 : vector<1x8x32xf32> to vector<8x32xf32>
    %c0_2 = arith.constant 0 : index
    %c0_3 = arith.constant 0 : index
    %c0_4 = arith.constant 0 : index
    %2 = vector.load %arg3[%c0_2, %c0_3, %c0_4] : memref<1x8x32xf32, #tpu.memory_space<vmem>>, vector<1x8x32xf32>
    %3 = vector.shape_cast %2 : vector<1x8x32xf32> to vector<8x32xf32>
    %4 = vector.shape_cast %1 : vector<8x32xf32> to vector<1x8x32xf32>
    %5 = vector.shape_cast %4 : vector<1x8x32xf32> to vector<1x8x32xf32>
    %6 = vector.broadcast %5 : vector<1x8x32xf32> to vector<4x8x32xf32>
    %7 = vector.shape_cast %3 : vector<8x32xf32> to vector<1x8x32xf32>
    %8 = vector.shape_cast %7 : vector<1x8x32xf32> to vector<1x8x32xf32>
    %9 = vector.broadcast %8 : vector<1x8x32xf32> to vector<4x8x32xf32>
    %c0_5 = arith.constant 0 : index
    %c0_6 = arith.constant 0 : index
    %c0_7 = arith.constant 0 : index
    %10 = vector.load %arg4[%c0_5, %c0_6, %c0_7] : memref<4x32x8xf32, #tpu.memory_space<vmem>>, vector<4x32x8xf32>
    "tpu.trace_start"() <{level = 10 : i32, message = "htd,hdk->htk"}> : () -> ()
    %cst = arith.constant dense<0.000000e+00> : vector<4x8x8xf32>
    %11 = tpu.matmul %6, %10, %cst {dimension_numbers = #tpu.dot_dimension_numbers<[2], [1], [1], [2], [0, 0, 0, 1, 1, 2], [0], [0]>} : vector<4x8x32xf32>, vector<4x32x8xf32>, vector<4x8x8xf32> -> vector<4x8x8xf32>
    "tpu.trace_stop"() : () -> ()
    %c0_8 = arith.constant 0 : index
    %c0_9 = arith.constant 0 : index
    %c0_10 = arith.constant 0 : index
    %12 = vector.load %arg5[%c0_8, %c0_9, %c0_10] : memref<4x1x8xf32, #tpu.memory_space<vmem>>, vector<4x1x8xf32>
    %13 = vector.broadcast %12 : vector<4x1x8xf32> to vector<4x8x8xf32>
    %14 = arith.addf %11, %13 : vector<4x8x8xf32>
    %c0_11 = arith.constant 0 : index
    %c0_12 = arith.constant 0 : index
    %c0_13 = arith.constant 0 : index
    %15 = vector.load %arg6[%c0_11, %c0_12, %c0_13] : memref<4x32x8xf32, #tpu.memory_space<vmem>>, vector<4x32x8xf32>
    "tpu.trace_start"() <{level = 10 : i32, message = "hnd,hdk->hnk"}> : () -> ()
    %cst_14 = arith.constant dense<0.000000e+00> : vector<4x8x8xf32>
    %16 = tpu.matmul %9, %15, %cst_14 {dimension_numbers = #tpu.dot_dimension_numbers<[2], [1], [1], [2], [0, 0, 0, 1, 1, 2], [0], [0]>} : vector<4x8x32xf32>, vector<4x32x8xf32>, vector<4x8x8xf32> -> vector<4x8x8xf32>
    "tpu.trace_stop"() : () -> ()
    %c0_15 = arith.constant 0 : index
    %c0_16 = arith.constant 0 : index
    %c0_17 = arith.constant 0 : index
    %17 = vector.load %arg7[%c0_15, %c0_16, %c0_17] : memref<4x1x8xf32, #tpu.memory_space<vmem>>, vector<4x1x8xf32>
    %18 = vector.broadcast %17 : vector<4x1x8xf32> to vector<4x8x8xf32>
    %19 = arith.addf %16, %18 : vector<4x8x8xf32>
    %c0_18 = arith.constant 0 : index
    %c0_19 = arith.constant 0 : index
    %c0_20 = arith.constant 0 : index
    %20 = vector.load %arg8[%c0_18, %c0_19, %c0_20] : memref<4x32x8xf32, #tpu.memory_space<vmem>>, vector<4x32x8xf32>
    "tpu.trace_start"() <{level = 10 : i32, message = "hnd,hdk->hnk"}> : () -> ()
    %cst_21 = arith.constant dense<0.000000e+00> : vector<4x8x8xf32>
    %21 = tpu.matmul %9, %20, %cst_21 {dimension_numbers = #tpu.dot_dimension_numbers<[2], [1], [1], [2], [0, 0, 0, 1, 1, 2], [0], [0]>} : vector<4x8x32xf32>, vector<4x32x8xf32>, vector<4x8x8xf32> -> vector<4x8x8xf32>
    "tpu.trace_stop"() : () -> ()
    %c0_22 = arith.constant 0 : index
    %c0_23 = arith.constant 0 : index
    %c0_24 = arith.constant 0 : index
    %22 = vector.load %arg9[%c0_22, %c0_23, %c0_24] : memref<4x1x8xf32, #tpu.memory_space<vmem>>, vector<4x1x8xf32>
    %23 = vector.broadcast %22 : vector<4x1x8xf32> to vector<4x8x8xf32>
    %24 = arith.addf %21, %23 : vector<4x8x8xf32>
    %cst_25 = arith.constant 0.353553385 : f32
    %25 = vector.broadcast %cst_25 : f32 to vector<4x8x8xf32>
    %26 = arith.mulf %14, %25 : vector<4x8x8xf32>
    "tpu.trace_start"() <{level = 10 : i32, message = "hqd,hkd->hqk"}> : () -> ()
    %cst_26 = arith.constant dense<0.000000e+00> : vector<4x8x8xf32>
    %27 = tpu.matmul %26, %19, %cst_26 {dimension_numbers = #tpu.dot_dimension_numbers<[2], [2], [1], [1], [0, 0, 0, 1, 1, 1], [0], [0]>} : vector<4x8x8xf32>, vector<4x8x8xf32>, vector<4x8x8xf32> -> vector<4x8x8xf32>
    "tpu.trace_stop"() : () -> ()
    %cst_27 = arith.constant dense<0xFF800000> : vector<4x8xf32>
    %28 = vector.multi_reduction <maximumf>, %27, %cst_27 [2] : vector<4x8x8xf32> to vector<4x8xf32>
    %29 = vector.shape_cast %28 : vector<4x8xf32> to vector<4x8x1xf32>
    %30 = vector.broadcast %29 : vector<4x8x1xf32> to vector<4x8x8xf32>
    %31 = arith.subf %27, %30 : vector<4x8x8xf32>
    %32 = math.exp %31 : vector<4x8x8xf32>
    %cst_28 = arith.constant dense<0.000000e+00> : vector<4x8xf32>
    %33 = vector.multi_reduction <add>, %32, %cst_28 [2] : vector<4x8x8xf32> to vector<4x8xf32>
    %34 = vector.shape_cast %33 : vector<4x8xf32> to vector<4x8x1xf32>
    %35 = tpu.reciprocal %34 : vector<4x8x1xf32> -> vector<4x8x1xf32>
    %36 = vector.broadcast %35 : vector<4x8x1xf32> to vector<4x8x8xf32>
    %37 = arith.mulf %32, %36 : vector<4x8x8xf32>
    "tpu.trace_start"() <{level = 10 : i32, message = "hqk,hkd->hqd"}> : () -> ()
    %cst_29 = arith.constant dense<0.000000e+00> : vector<4x8x8xf32>
    %38 = tpu.matmul %37, %24, %cst_29 {dimension_numbers = #tpu.dot_dimension_numbers<[2], [1], [1], [2], [0, 0, 0, 1, 1, 2], [0], [0]>} : vector<4x8x8xf32>, vector<4x8x8xf32>, vector<4x8x8xf32> -> vector<4x8x8xf32>
    "tpu.trace_stop"() : () -> ()
    %c0_30 = arith.constant 0 : index
    %c0_31 = arith.constant 0 : index
    %c0_32 = arith.constant 0 : index
    %39 = vector.load %arg10[%c0_30, %c0_31, %c0_32] : memref<4x8x32xf32, #tpu.memory_space<vmem>>, vector<4x8x32xf32>
    "tpu.trace_start"() <{level = 10 : i32, message = "hqd,hdm->hqm"}> : () -> ()
    %cst_33 = arith.constant dense<0.000000e+00> : vector<4x8x32xf32>
    %40 = tpu.matmul %38, %39, %cst_33 {dimension_numbers = #tpu.dot_dimension_numbers<[2], [1], [1], [2], [0, 0, 0, 1, 1, 2], [0], [0]>} : vector<4x8x8xf32>, vector<4x8x32xf32>, vector<4x8x32xf32> -> vector<4x8x32xf32>
    "tpu.trace_stop"() : () -> ()
    %cst_34 = arith.constant dense<0.000000e+00> : vector<8x32xf32>
    %41 = vector.multi_reduction <add>, %40, %cst_34 [0] : vector<4x8x32xf32> to vector<8x32xf32>
    %42 = arith.addf %1, %41 : vector<8x32xf32>
    %c0_35 = arith.constant 0 : index
    %c0_36 = arith.constant 0 : index
    %43 = vector.load %arg11[%c0_35, %c0_36] : memref<1x32xf32, #tpu.memory_space<vmem>>, vector<1x32xf32>
    %c0_37 = arith.constant 0 : index
    %c0_38 = arith.constant 0 : index
    %44 = vector.load %arg12[%c0_37, %c0_38] : memref<1x32xf32, #tpu.memory_space<vmem>>, vector<1x32xf32>
    %cst_39 = arith.constant dense<0.000000e+00> : vector<8xf32>
    %45 = vector.multi_reduction <add>, %42, %cst_39 [1] : vector<8x32xf32> to vector<8xf32>
    %46 = vector.shape_cast %45 : vector<8xf32> to vector<8x1xf32>
    %cst_40 = arith.constant 3.200000e+01 : f32
    %47 = vector.broadcast %cst_40 : f32 to vector<8x1xf32>
    %48 = arith.divf %46, %47 : vector<8x1xf32>
    %49 = vector.broadcast %48 : vector<8x1xf32> to vector<8x32xf32>
    %50 = arith.subf %42, %49 : vector<8x32xf32>
    %51 = arith.mulf %50, %50 : vector<8x32xf32>
    %cst_41 = arith.constant dense<0.000000e+00> : vector<8xf32>
    %52 = vector.multi_reduction <add>, %51, %cst_41 [1] : vector<8x32xf32> to vector<8xf32>
    %53 = vector.shape_cast %52 : vector<8xf32> to vector<8x1xf32>
    %cst_42 = arith.constant 3.200000e+01 : f32
    %54 = vector.broadcast %cst_42 : f32 to vector<8x1xf32>
    %55 = arith.divf %53, %54 : vector<8x1xf32>
    %56 = vector.broadcast %48 : vector<8x1xf32> to vector<8x32xf32>
    %57 = arith.subf %42, %56 : vector<8x32xf32>
    %cst_43 = arith.constant 9.99999974E-6 : f32
    %58 = vector.broadcast %cst_43 : f32 to vector<8x1xf32>
    %59 = arith.addf %55, %58 : vector<8x1xf32>
    %60 = math.rsqrt %59 : vector<8x1xf32>
    %61 = vector.broadcast %60 : vector<8x1xf32> to vector<8x32xf32>
    %62 = arith.mulf %57, %61 : vector<8x32xf32>
    %63 = vector.broadcast %43 : vector<1x32xf32> to vector<8x32xf32>
    %64 = arith.mulf %62, %63 : vector<8x32xf32>
    %65 = vector.broadcast %44 : vector<1x32xf32> to vector<8x32xf32>
    %66 = arith.addf %64, %65 : vector<8x32xf32>
    %cst_44 = arith.constant 0.000000e+00 : f32
    %67 = vector.broadcast %cst_44 : f32 to vector<8x32xf32>
    %c0_45 = arith.constant 0 : index
    %c0_46 = arith.constant 0 : index
    %68 = vector.load %arg13[%c0_45, %c0_46] : memref<32x64xf32, #tpu.memory_space<vmem>>, vector<32x64xf32>
    %cst_47 = arith.constant dense<0.000000e+00> : vector<8x64xf32>
    %69 = tpu.matmul %66, %68, %cst_47 {dimension_numbers = #tpu.dot_dimension_numbers<[1], [0], [0], [1], [0, 0, 1, 1], [], []>} : vector<8x32xf32>, vector<32x64xf32>, vector<8x64xf32> -> vector<8x64xf32>
    %c0_48 = arith.constant 0 : index
    %c0_49 = arith.constant 0 : index
    %70 = vector.load %arg14[%c0_48, %c0_49] : memref<1x64xf32, #tpu.memory_space<vmem>>, vector<1x64xf32>
    %71 = vector.broadcast %70 : vector<1x64xf32> to vector<8x64xf32>
    %72 = arith.addf %69, %71 : vector<8x64xf32>
    %cst_50 = arith.constant 5.000000e-01 : f32
    %73 = vector.broadcast %cst_50 : f32 to vector<8x64xf32>
    %74 = arith.mulf %73, %72 : vector<8x64xf32>
    %cst_51 = arith.constant 0.707106769 : f32
    %75 = vector.broadcast %cst_51 : f32 to vector<8x64xf32>
    %76 = arith.mulf %72, %75 : vector<8x64xf32>
    %77 = math.erf %76 : vector<8x64xf32>
    %cst_52 = arith.constant 1.000000e+00 : f32
    %78 = vector.broadcast %cst_52 : f32 to vector<8x64xf32>
    %79 = arith.addf %78, %77 : vector<8x64xf32>
    %80 = arith.mulf %74, %79 : vector<8x64xf32>
    %c0_53 = arith.constant 0 : index
    %c0_54 = arith.constant 0 : index
    %81 = vector.load %arg15[%c0_53, %c0_54] : memref<64x32xf32, #tpu.memory_space<vmem>>, vector<64x32xf32>
    %cst_55 = arith.constant dense<0.000000e+00> : vector<8x32xf32>
    %82 = tpu.matmul %80, %81, %cst_55 {dimension_numbers = #tpu.dot_dimension_numbers<[1], [0], [0], [1], [0, 0, 1, 1], [], []>} : vector<8x64xf32>, vector<64x32xf32>, vector<8x32xf32> -> vector<8x32xf32>
    %83 = arith.addf %67, %82 : vector<8x32xf32>
    %c0_56 = arith.constant 0 : index
    %c0_57 = arith.constant 0 : index
    %84 = vector.load %arg16[%c0_56, %c0_57] : memref<1x32xf32, #tpu.memory_space<vmem>>, vector<1x32xf32>
    %85 = vector.broadcast %84 : vector<1x32xf32> to vector<8x32xf32>
    %86 = arith.addf %83, %85 : vector<8x32xf32>
    %87 = arith.addf %66, %86 : vector<8x32xf32>
    %c0_58 = arith.constant 0 : index
    %c0_59 = arith.constant 0 : index
    %88 = vector.load %arg17[%c0_58, %c0_59] : memref<1x32xf32, #tpu.memory_space<vmem>>, vector<1x32xf32>
    %c0_60 = arith.constant 0 : index
    %c0_61 = arith.constant 0 : index
    %89 = vector.load %arg18[%c0_60, %c0_61] : memref<1x32xf32, #tpu.memory_space<vmem>>, vector<1x32xf32>
    %cst_62 = arith.constant dense<0.000000e+00> : vector<8xf32>
    %90 = vector.multi_reduction <add>, %87, %cst_62 [1] : vector<8x32xf32> to vector<8xf32>
    %91 = vector.shape_cast %90 : vector<8xf32> to vector<8x1xf32>
    %cst_63 = arith.constant 3.200000e+01 : f32
    %92 = vector.broadcast %cst_63 : f32 to vector<8x1xf32>
    %93 = arith.divf %91, %92 : vector<8x1xf32>
    %94 = vector.broadcast %93 : vector<8x1xf32> to vector<8x32xf32>
    %95 = arith.subf %87, %94 : vector<8x32xf32>
    %96 = arith.mulf %95, %95 : vector<8x32xf32>
    %cst_64 = arith.constant dense<0.000000e+00> : vector<8xf32>
    %97 = vector.multi_reduction <add>, %96, %cst_64 [1] : vector<8x32xf32> to vector<8xf32>
    %98 = vector.shape_cast %97 : vector<8xf32> to vector<8x1xf32>
    %cst_65 = arith.constant 3.200000e+01 : f32
    %99 = vector.broadcast %cst_65 : f32 to vector<8x1xf32>
    %100 = arith.divf %98, %99 : vector<8x1xf32>
    %101 = vector.broadcast %93 : vector<8x1xf32> to vector<8x32xf32>
    %102 = arith.subf %87, %101 : vector<8x32xf32>
    %cst_66 = arith.constant 9.99999974E-6 : f32
    %103 = vector.broadcast %cst_66 : f32 to vector<8x1xf32>
    %104 = arith.addf %100, %103 : vector<8x1xf32>
    %105 = math.rsqrt %104 : vector<8x1xf32>
    %106 = vector.broadcast %105 : vector<8x1xf32> to vector<8x32xf32>
    %107 = arith.mulf %102, %106 : vector<8x32xf32>
    %108 = vector.broadcast %88 : vector<1x32xf32> to vector<8x32xf32>
    %109 = arith.mulf %107, %108 : vector<8x32xf32>
    %110 = vector.broadcast %89 : vector<1x32xf32> to vector<8x32xf32>
    %111 = arith.addf %109, %110 : vector<8x32xf32>
    %c0_67 = arith.constant 0 : index
    %c0_68 = arith.constant 0 : index
    %c0_69 = arith.constant 0 : index
    %112 = vector.load %arg19[%c0_67, %c0_68, %c0_69] : memref<1x8x32xf32, #tpu.memory_space<vmem>>, vector<1x8x32xf32>
    %113 = vector.shape_cast %112 : vector<1x8x32xf32> to vector<8x32xf32>
    %114 = vector.shape_cast %111 : vector<8x32xf32> to vector<1x8x32xf32>
    tpu.vector_store %arg19[%c0_67, %c0_68, %c0_69], %114 {strides = array<i32>} : memref<1x8x32xf32, #tpu.memory_space<vmem>>, vector<1x8x32xf32>,
    return
  }
  func.func @transform_0(%arg0: i32, %arg1: i32) -> (i32, i32, i32) {
    %c0_i32 = arith.constant 0 : i32
    %c0_i32_0 = arith.constant 0 : i32
    return %arg0, %arg1, %c0_i32 : i32, i32, i32
  }
  func.func @transform_1(%arg0: i32, %arg1: i32) -> (i32, i32, i32) {
    %c0_i32 = arith.constant 0 : i32
    %c0_i32_0 = arith.constant 0 : i32
    %c0_i32_1 = arith.constant 0 : i32
    return %arg0, %c0_i32, %c0_i32_0 : i32, i32, i32
  }
  func.func @transform_2(%arg0: i32, %arg1: i32) -> (i32, i32, i32) {
    %c0_i32 = arith.constant 0 : i32
    %c0_i32_0 = arith.constant 0 : i32
    %c0_i32_1 = arith.constant 0 : i32
    %c0_i32_2 = arith.constant 0 : i32
    return %c0_i32, %c0_i32_0, %c0_i32_1 : i32, i32, i32
  }
  func.func @transform_3(%arg0: i32, %arg1: i32) -> (i32, i32, i32) {
    %c0_i32 = arith.constant 0 : i32
    %c0_i32_0 = arith.constant 0 : i32
    %c0_i32_1 = arith.constant 0 : i32
    %c0_i32_2 = arith.constant 0 : i32
    return %c0_i32, %c0_i32_0, %c0_i32_1 : i32, i32, i32
  }
  func.func @transform_4(%arg0: i32, %arg1: i32) -> (i32, i32, i32) {
    %c0_i32 = arith.constant 0 : i32
    %c0_i32_0 = arith.constant 0 : i32
    %c0_i32_1 = arith.constant 0 : i32
    %c0_i32_2 = arith.constant 0 : i32
    return %c0_i32, %c0_i32_0, %c0_i32_1 : i32, i32, i32
  }
  func.func @transform_5(%arg0: i32, %arg1: i32) -> (i32, i32, i32) {
    %c0_i32 = arith.constant 0 : i32
    %c0_i32_0 = arith.constant 0 : i32
    %c0_i32_1 = arith.constant 0 : i32
    %c0_i32_2 = arith.constant 0 : i32
    return %c0_i32, %c0_i32_0, %c0_i32_1 : i32, i32, i32
  }
  func.func @transform_6(%arg0: i32, %arg1: i32) -> (i32, i32, i32) {
    %c0_i32 = arith.constant 0 : i32
    %c0_i32_0 = arith.constant 0 : i32
    %c0_i32_1 = arith.constant 0 : i32
    %c0_i32_2 = arith.constant 0 : i32
    return %c0_i32, %c0_i32_0, %c0_i32_1 : i32, i32, i32
  }
  func.func @transform_7(%arg0: i32, %arg1: i32) -> (i32, i32, i32) {
    %c0_i32 = arith.constant 0 : i32
    %c0_i32_0 = arith.constant 0 : i32
    %c0_i32_1 = arith.constant 0 : i32
    %c0_i32_2 = arith.constant 0 : i32
    return %c0_i32, %c0_i32_0, %c0_i32_1 : i32, i32, i32
  }
  func.func @transform_8(%arg0: i32, %arg1: i32) -> (i32, i32, i32) {
    %c0_i32 = arith.constant 0 : i32
    %c0_i32_0 = arith.constant 0 : i32
    %c0_i32_1 = arith.constant 0 : i32
    %c0_i32_2 = arith.constant 0 : i32
    return %c0_i32, %c0_i32_0, %c0_i32_1 : i32, i32, i32
  }
  func.func @transform_9(%arg0: i32, %arg1: i32) -> (i32, i32) {
    %c0_i32 = arith.constant 0 : i32
    %c0_i32_0 = arith.constant 0 : i32
    %c0_i32_1 = arith.constant 0 : i32
    return %c0_i32, %c0_i32_0 : i32, i32
  }
  func.func @transform_10(%arg0: i32, %arg1: i32) -> (i32, i32) {
    %c0_i32 = arith.constant 0 : i32
    %c0_i32_0 = arith.constant 0 : i32
    %c0_i32_1 = arith.constant 0 : i32
    return %c0_i32, %c0_i32_0 : i32, i32
  }
  func.func @transform_11(%arg0: i32, %arg1: i32) -> (i32, i32) {
    %c0_i32 = arith.constant 0 : i32
    %c0_i32_0 = arith.constant 0 : i32
    %c0_i32_1 = arith.constant 0 : i32
    return %c0_i32, %c0_i32_0 : i32, i32
  }
  func.func @transform_12(%arg0: i32, %arg1: i32) -> (i32, i32) {
    %c0_i32 = arith.constant 0 : i32
    %c0_i32_0 = arith.constant 0 : i32
    %c0_i32_1 = arith.constant 0 : i32
    return %c0_i32, %c0_i32_0 : i32, i32
  }
  func.func @transform_13(%arg0: i32, %arg1: i32) -> (i32, i32) {
    %c0_i32 = arith.constant 0 : i32
    %c0_i32_0 = arith.constant 0 : i32
    %c0_i32_1 = arith.constant 0 : i32
    return %c0_i32, %c0_i32_0 : i32, i32
  }
  func.func @transform_14(%arg0: i32, %arg1: i32) -> (i32, i32) {
    %c0_i32 = arith.constant 0 : i32
    %c0_i32_0 = arith.constant 0 : i32
    %c0_i32_1 = arith.constant 0 : i32
    return %c0_i32, %c0_i32_0 : i32, i32
  }
  func.func @transform_15(%arg0: i32, %arg1: i32) -> (i32, i32) {
    %c0_i32 = arith.constant 0 : i32
    %c0_i32_0 = arith.constant 0 : i32
    %c0_i32_1 = arith.constant 0 : i32
    return %c0_i32, %c0_i32_0 : i32, i32
  }
  func.func @transform_16(%arg0: i32, %arg1: i32) -> (i32, i32) {
    %c0_i32 = arith.constant 0 : i32
    %c0_i32_0 = arith.constant 0 : i32
    %c0_i32_1 = arith.constant 0 : i32
    return %c0_i32, %c0_i32_0 : i32, i32
  }
  func.func @transform_17(%arg0: i32, %arg1: i32) -> (i32, i32, i32) {
    %c0_i32 = arith.constant 0 : i32
    %c0_i32_0 = arith.constant 0 : i32
    return %arg0, %arg1, %c0_i32 : i32, i32, i32
  }
}

</mosaic_0001>

<llo_original>
// kernel: tpu_custom_call.1
$region0: #{tpu_custom_call.1}
  #allocation0 [shape = 'u32[]', space=smem, size = 0x4, offset = 0x4, fixed_abs, tag = 'smem constant byte address 0x4 - core index']
  #allocation1 [shape = 'u32[144,128]{1,0:T(1,128)}', space=vmem, size = 0x12000, scoped, tag = 'internal scratch']
  %s0 = inlined_call_operand.vmem [shape: f32[2,8,32], index: 0, kind: input, shape index: {}]
  %s1 = inlined_call_operand.vmem [shape: f32[2,8,32], index: 1, kind: input, shape index: {}]
  %s2 = inlined_call_operand.vmem [shape: f32[4,32,8], index: 2, kind: input, shape index: {}]
  %s3 = inlined_call_operand.vmem [shape: f32[4,1,8], index: 3, kind: input, shape index: {}]
  %s4 = inlined_call_operand.vmem [shape: f32[4,32,8], index: 4, kind: input, shape index: {}]
  %s5 = inlined_call_operand.vmem [shape: f32[4,1,8], index: 5, kind: input, shape index: {}]
  %s6 = inlined_call_operand.vmem [shape: f32[4,32,8], index: 6, kind: input, shape index: {}]
  %s7 = inlined_call_operand.vmem [shape: f32[4,1,8], index: 7, kind: input, shape index: {}]
  %s8 = inlined_call_operand.vmem [shape: f32[4,8,32], index: 8, kind: input, shape index: {}]
  %s9 = inlined_call_operand.vmem [shape: f32[1,32], index: 9, kind: input, shape index: {}]
  %s10 = inlined_call_operand.vmem [shape: f32[1,32], index: 10, kind: input, shape index: {}]
  %s11 = inlined_call_operand.vmem [shape: f32[32,64], index: 11, kind: input, shape index: {}]
  %s12 = inlined_call_operand.vmem [shape: f32[1,64], index: 12, kind: input, shape index: {}]
  %s13 = inlined_call_operand.vmem [shape: f32[64,32], index: 13, kind: input, shape index: {}]
  %s14 = inlined_call_operand.vmem [shape: f32[1,32], index: 14, kind: input, shape index: {}]
  %s15 = inlined_call_operand.vmem [shape: f32[1,32], index: 15, kind: input, shape index: {}]
  %s16 = inlined_call_operand.vmem [shape: f32[1,32], index: 16, kind: input, shape index: {}]
  %s17 = inlined_call_operand.hbm [shape: f32[2,8,32], index: 17, kind: output, shape index: {}]
  %s18 = sld [smem:[#allocation0]]
  $region101: #{tpu_custom_call.1} parent=0
    _
  %s20 = ssub.s32 1, %s18
  %s21 = scalar_select 0, %s20, %s18
  $region1: #{tpu_custom_call.1} parent=0
    #allocation2 [shape = 'u8[8192]{0}', space=vmem, size = 0x2000, scoped, tag = 'output window, operand 0']
    #allocation3 [shape = 's32[2]{0}', space=sflag, size = 0x8, scoped, tag = 'scoped memory for tpu_custom_call.1']
    %22 = vsyncpa [#allocation3], 0
    %s23 = scalar_lea.sflag [#allocation3], 1
    %24 = vsyncpa %s23, 0
    loop: start=0, step=1, limit=4
    $region2: #{tpu_custom_call.1} parent=1 // loop_pre_header
      _
    $region3: #{tpu_custom_call.1} parent=1 // loop_header
      %s26 = sphi 0, %s30
      %p27 = scmp.ge.s32.totalorder %s26, 4
      %s33 = sphi 0, %s45
      %s34 = sphi 0, %s41
      %s35 = sphi 0, %s33
      %s36 = sphi 0, %s34
      %s37 = sphi 0, %s35
      %s38 = sphi 0, %s36
      %s50 = sphi 0, %s52
      %s53 = sphi 0, %s50
      %s54 = sphi 0, %s53
      %s70 = sphi 0, %s54
      %s76 = sphi 0, %s78
      %s79 = sphi 0, %s76
      %s80 = sphi 0, %s79
      %s96 = sphi 0, %s80
      %s100 = sphi 0, %s100
      %s102 = sphi 0, %s100
      %s103 = sphi 0, %s102
      %s117 = sphi 0, %s103
      %s121 = sphi 0, %s121
      %s123 = sphi 0, %s121
      %s124 = sphi 0, %s123
      %s138 = sphi 0, %s124
      %s142 = sphi 0, %s142
      %s144 = sphi 0, %s142
      %s145 = sphi 0, %s144
      %s159 = sphi 0, %s145
      %s163 = sphi 0, %s163
      %s165 = sphi 0, %s163
      %s166 = sphi 0, %s165
      %s180 = sphi 0, %s166
      %s184 = sphi 0, %s184
      %s186 = sphi 0, %s184
      %s187 = sphi 0, %s186
      %s201 = sphi 0, %s187
      %s205 = sphi 0, %s205
      %s207 = sphi 0, %s205
      %s208 = sphi 0, %s207
      %s222 = sphi 0, %s208
      %s226 = sphi 0, %s226
      %s228 = sphi 0, %s226
      %s229 = sphi 0, %s228
      %s243 = sphi 0, %s229
      %s247 = sphi 0, %s247
      %s249 = sphi 0, %s247
      %s250 = sphi 0, %s249
      %s264 = sphi 0, %s250
      %s268 = sphi 0, %s268
      %s270 = sphi 0, %s268
      %s271 = sphi 0, %s270
      %s285 = sphi 0, %s271
      %s289 = sphi 0, %s289
      %s291 = sphi 0, %s289
      %s292 = sphi 0, %s291
      %s306 = sphi 0, %s292
      %s310 = sphi 0, %s310
      %s312 = sphi 0, %s310
      %s313 = sphi 0, %s312
      %s327 = sphi 0, %s313
      %s331 = sphi 0, %s331
      %s333 = sphi 0, %s331
      %s334 = sphi 0, %s333
      %s348 = sphi 0, %s334
      %s352 = sphi 0, %s352
      %s354 = sphi 0, %s352
      %s355 = sphi 0, %s354
      %s369 = sphi 0, %s355
      %s373 = sphi 0, %s373
      %s375 = sphi 0, %s373
      %s376 = sphi 0, %s375
      %s390 = sphi 0, %s376
      %s394 = sphi 0, %s394
      %s396 = sphi 0, %s394
      %s397 = sphi 0, %s396
      %s411 = sphi 0, %s397
      %s419 = sphi 0, %s421
      %s422 = sphi 0, %s419
      %s423 = sphi 0, %s422
      %s439 = sphi 0, %s423
    $region4: #{tpu_custom_call.1} parent=1 // loop_header_branch
      %29 = sbr.rel (%p27) target = $region8
    $region5: #{tpu_custom_call.1} parent=1 // loop_body
      %s31 = ssub.s32 %s26, 1
      %s32 = ssub.s32 %s26, 2
      %s39 = sadd.s32 1, %s34
      %p40 = scmp.ge.s32.totalorder %s39, 1
      %s41 = scalar_select %p40, 0, %s39
      %s42 = sadd.s32 1, %s33
      %s43 = scalar_select %p40, %s42, %s33
      %p44 = scmp.ge.s32.totalorder %s43, 2
      %s45 = scalar_select %p44, 0, %s43
      %s46 = ssub.s32 %s33, %s45
      %s47 = ssub.s32 %s34, %s41
      %s48 = sor.u32 %s46, %s47
      %p49 = scmp.eq.s32.totalorder %s48, 0
      %s51 = sadd.s32 %s50, 1
      %s52 = scalar_select %p49, %s50, %s51
      %p55 = pneg %p49
      %p56 = scmp.eq.s32.totalorder %s26, 1
      %p57 = por %p55, %p56
      %p58 = scmp.ne.s32.totalorder %s50, %s53
      %p59 = scmp.eq.s32.totalorder %s26, 0
      %p60 = por %p58, %p59
      %p61 = scmp.ne.s32.totalorder %s50, %s53
      %p62 = scmp.eq.s32.totalorder %s31, 1
      %p63 = por %p61, %p62
      %p64 = scmp.ne.s32.totalorder %s53, %s54
      %p65 = scmp.eq.s32.totalorder %s31, 0
      %p66 = por %p64, %p65
      %p67 = scmp.ne.s32.totalorder %s53, %s54
      %p68 = scmp.eq.s32.totalorder %s32, 1
      %p69 = por %p67, %p68
      %p71 = scmp.ne.s32.totalorder %s54, %s70
      %p72 = scmp.eq.s32.totalorder %s32, 0
      %p73 = por %p71, %p72
      %s74 = ssub.s32 %s33, %s45
      %p75 = scmp.eq.s32.totalorder %s74, 0
      %s77 = sadd.s32 %s76, 1
      %s78 = scalar_select %p75, %s76, %s77
      %p81 = pneg %p75
      %p82 = scmp.eq.s32.totalorder %s26, 1
      %p83 = por %p81, %p82
      %p84 = scmp.ne.s32.totalorder %s76, %s79
      %p85 = scmp.eq.s32.totalorder %s26, 0
      %p86 = por %p84, %p85
      %p87 = scmp.ne.s32.totalorder %s76, %s79
      %p88 = scmp.eq.s32.totalorder %s31, 1
      %p89 = por %p87, %p88
      %p90 = scmp.ne.s32.totalorder %s79, %s80
      %p91 = scmp.eq.s32.totalorder %s31, 0
      %p92 = por %p90, %p91
      %p93 = scmp.ne.s32.totalorder %s79, %s80
      %p94 = scmp.eq.s32.totalorder %s32, 1
      %p95 = por %p93, %p94
      %p97 = scmp.ne.s32.totalorder %s80, %s96
      %p98 = scmp.eq.s32.totalorder %s32, 0
      %p99 = por %p97, %p98
      %s101 = sadd.s32 %s100, 1
      %p104 = scmp.eq.s32.totalorder %s26, 1
      %p105 = scmp.ne.s32.totalorder %s100, %s102
      %p106 = scmp.eq.s32.totalorder %s26, 0
      %p107 = por %p105, %p106
      %p108 = scmp.ne.s32.totalorder %s100, %s102
      %p109 = scmp.eq.s32.totalorder %s31, 1
      %p110 = por %p108, %p109
      %p111 = scmp.ne.s32.totalorder %s102, %s103
      %p112 = scmp.eq.s32.totalorder %s31, 0
      %p113 = por %p111, %p112
      %p114 = scmp.ne.s32.totalorder %s102, %s103
      %p115 = scmp.eq.s32.totalorder %s32, 1
      %p116 = por %p114, %p115
      %p118 = scmp.ne.s32.totalorder %s103, %s117
      %p119 = scmp.eq.s32.totalorder %s32, 0
      %p120 = por %p118, %p119
      %s122 = sadd.s32 %s121, 1
      %p125 = scmp.eq.s32.totalorder %s26, 1
      %p126 = scmp.ne.s32.totalorder %s121, %s123
      %p127 = scmp.eq.s32.totalorder %s26, 0
      %p128 = por %p126, %p127
      %p129 = scmp.ne.s32.totalorder %s121, %s123
      %p130 = scmp.eq.s32.totalorder %s31, 1
      %p131 = por %p129, %p130
      %p132 = scmp.ne.s32.totalorder %s123, %s124
      %p133 = scmp.eq.s32.totalorder %s31, 0
      %p134 = por %p132, %p133
      %p135 = scmp.ne.s32.totalorder %s123, %s124
      %p136 = scmp.eq.s32.totalorder %s32, 1
      %p137 = por %p135, %p136
      %p139 = scmp.ne.s32.totalorder %s124, %s138
      %p140 = scmp.eq.s32.totalorder %s32, 0
      %p141 = por %p139, %p140
      %s143 = sadd.s32 %s142, 1
      %p146 = scmp.eq.s32.totalorder %s26, 1
      %p147 = scmp.ne.s32.totalorder %s142, %s144
      %p148 = scmp.eq.s32.totalorder %s26, 0
      %p149 = por %p147, %p148
      %p150 = scmp.ne.s32.totalorder %s142, %s144
      %p151 = scmp.eq.s32.totalorder %s31, 1
      %p152 = por %p150, %p151
      %p153 = scmp.ne.s32.totalorder %s144, %s145
      %p154 = scmp.eq.s32.totalorder %s31, 0
      %p155 = por %p153, %p154
      %p156 = scmp.ne.s32.totalorder %s144, %s145
      %p157 = scmp.eq.s32.totalorder %s32, 1
      %p158 = por %p156, %p157
      %p160 = scmp.ne.s32.totalorder %s145, %s159
      %p161 = scmp.eq.s32.totalorder %s32, 0
      %p162 = por %p160, %p161
      %s164 = sadd.s32 %s163, 1
      %p167 = scmp.eq.s32.totalorder %s26, 1
      %p168 = scmp.ne.s32.totalorder %s163, %s165
      %p169 = scmp.eq.s32.totalorder %s26, 0
      %p170 = por %p168, %p169
      %p171 = scmp.ne.s32.totalorder %s163, %s165
      %p172 = scmp.eq.s32.totalorder %s31, 1
      %p173 = por %p171, %p172
      %p174 = scmp.ne.s32.totalorder %s165, %s166
      %p175 = scmp.eq.s32.totalorder %s31, 0
      %p176 = por %p174, %p175
      %p177 = scmp.ne.s32.totalorder %s165, %s166
      %p178 = scmp.eq.s32.totalorder %s32, 1
      %p179 = por %p177, %p178
      %p181 = scmp.ne.s32.totalorder %s166, %s180
      %p182 = scmp.eq.s32.totalorder %s32, 0
      %p183 = por %p181, %p182
      %s185 = sadd.s32 %s184, 1
      %p188 = scmp.eq.s32.totalorder %s26, 1
      %p189 = scmp.ne.s32.totalorder %s184, %s186
      %p190 = scmp.eq.s32.totalorder %s26, 0
      %p191 = por %p189, %p190
      %p192 = scmp.ne.s32.totalorder %s184, %s186
      %p193 = scmp.eq.s32.totalorder %s31, 1
      %p194 = por %p192, %p193
      %p195 = scmp.ne.s32.totalorder %s186, %s187
      %p196 = scmp.eq.s32.totalorder %s31, 0
      %p197 = por %p195, %p196
      %p198 = scmp.ne.s32.totalorder %s186, %s187
      %p199 = scmp.eq.s32.totalorder %s32, 1
      %p200 = por %p198, %p199
      %p202 = scmp.ne.s32.totalorder %s187, %s201
      %p203 = scmp.eq.s32.totalorder %s32, 0
      %p204 = por %p202, %p203
      %s206 = sadd.s32 %s205, 1
      %p209 = scmp.eq.s32.totalorder %s26, 1
      %p210 = scmp.ne.s32.totalorder %s205, %s207
      %p211 = scmp.eq.s32.totalorder %s26, 0
      %p212 = por %p210, %p211
      %p213 = scmp.ne.s32.totalorder %s205, %s207
      %p214 = scmp.eq.s32.totalorder %s31, 1
      %p215 = por %p213, %p214
      %p216 = scmp.ne.s32.totalorder %s207, %s208
      %p217 = scmp.eq.s32.totalorder %s31, 0
      %p218 = por %p216, %p217
      %p219 = scmp.ne.s32.totalorder %s207, %s208
      %p220 = scmp.eq.s32.totalorder %s32, 1
      %p221 = por %p219, %p220
      %p223 = scmp.ne.s32.totalorder %s208, %s222
      %p224 = scmp.eq.s32.totalorder %s32, 0
      %p225 = por %p223, %p224
      %s227 = sadd.s32 %s226, 1
      %p230 = scmp.eq.s32.totalorder %s26, 1
      %p231 = scmp.ne.s32.totalorder %s226, %s228
      %p232 = scmp.eq.s32.totalorder %s26, 0
      %p233 = por %p231, %p232
      %p234 = scmp.ne.s32.totalorder %s226, %s228
      %p235 = scmp.eq.s32.totalorder %s31, 1
      %p236 = por %p234, %p235
      %p237 = scmp.ne.s32.totalorder %s228, %s229
      %p238 = scmp.eq.s32.totalorder %s31, 0
      %p239 = por %p237, %p238
      %p240 = scmp.ne.s32.totalorder %s228, %s229
      %p241 = scmp.eq.s32.totalorder %s32, 1
      %p242 = por %p240, %p241
      %p244 = scmp.ne.s32.totalorder %s229, %s243
      %p245 = scmp.eq.s32.totalorder %s32, 0
      %p246 = por %p244, %p245
      %s248 = sadd.s32 %s247, 1
      %p251 = scmp.eq.s32.totalorder %s26, 1
      %p252 = scmp.ne.s32.totalorder %s247, %s249
      %p253 = scmp.eq.s32.totalorder %s26, 0
      %p254 = por %p252, %p253
      %p255 = scmp.ne.s32.totalorder %s247, %s249
      %p256 = scmp.eq.s32.totalorder %s31, 1
      %p257 = por %p255, %p256
      %p258 = scmp.ne.s32.totalorder %s249, %s250
      %p259 = scmp.eq.s32.totalorder %s31, 0
      %p260 = por %p258, %p259
      %p261 = scmp.ne.s32.totalorder %s249, %s250
      %p262 = scmp.eq.s32.totalorder %s32, 1
      %p263 = por %p261, %p262
      %p265 = scmp.ne.s32.totalorder %s250, %s264
      %p266 = scmp.eq.s32.totalorder %s32, 0
      %p267 = por %p265, %p266
      %s269 = sadd.s32 %s268, 1
      %p272 = scmp.eq.s32.totalorder %s26, 1
      %p273 = scmp.ne.s32.totalorder %s268, %s270
      %p274 = scmp.eq.s32.totalorder %s26, 0
      %p275 = por %p273, %p274
      %p276 = scmp.ne.s32.totalorder %s268, %s270
      %p277 = scmp.eq.s32.totalorder %s31, 1
      %p278 = por %p276, %p277
      %p279 = scmp.ne.s32.totalorder %s270, %s271
      %p280 = scmp.eq.s32.totalorder %s31, 0
      %p281 = por %p279, %p280
      %p282 = scmp.ne.s32.totalorder %s270, %s271
      %p283 = scmp.eq.s32.totalorder %s32, 1
      %p284 = por %p282, %p283
      %p286 = scmp.ne.s32.totalorder %s271, %s285
      %p287 = scmp.eq.s32.totalorder %s32, 0
      %p288 = por %p286, %p287
      %s290 = sadd.s32 %s289, 1
      %p293 = scmp.eq.s32.totalorder %s26, 1
      %p294 = scmp.ne.s32.totalorder %s289, %s291
      %p295 = scmp.eq.s32.totalorder %s26, 0
      %p296 = por %p294, %p295
      %p297 = scmp.ne.s32.totalorder %s289, %s291
      %p298 = scmp.eq.s32.totalorder %s31, 1
      %p299 = por %p297, %p298
      %p300 = scmp.ne.s32.totalorder %s291, %s292
      %p301 = scmp.eq.s32.totalorder %s31, 0
      %p302 = por %p300, %p301
      %p303 = scmp.ne.s32.totalorder %s291, %s292
      %p304 = scmp.eq.s32.totalorder %s32, 1
      %p305 = por %p303, %p304
      %p307 = scmp.ne.s32.totalorder %s292, %s306
      %p308 = scmp.eq.s32.totalorder %s32, 0
      %p309 = por %p307, %p308
      %s311 = sadd.s32 %s310, 1
      %p314 = scmp.eq.s32.totalorder %s26, 1
      %p315 = scmp.ne.s32.totalorder %s310, %s312
      %p316 = scmp.eq.s32.totalorder %s26, 0
      %p317 = por %p315, %p316
      %p318 = scmp.ne.s32.totalorder %s310, %s312
      %p319 = scmp.eq.s32.totalorder %s31, 1
      %p320 = por %p318, %p319
      %p321 = scmp.ne.s32.totalorder %s312, %s313
      %p322 = scmp.eq.s32.totalorder %s31, 0
      %p323 = por %p321, %p322
      %p324 = scmp.ne.s32.totalorder %s312, %s313
      %p325 = scmp.eq.s32.totalorder %s32, 1
      %p326 = por %p324, %p325
      %p328 = scmp.ne.s32.totalorder %s313, %s327
      %p329 = scmp.eq.s32.totalorder %s32, 0
      %p330 = por %p328, %p329
      %s332 = sadd.s32 %s331, 1
      %p335 = scmp.eq.s32.totalorder %s26, 1
      %p336 = scmp.ne.s32.totalorder %s331, %s333
      %p337 = scmp.eq.s32.totalorder %s26, 0
      %p338 = por %p336, %p337
      %p339 = scmp.ne.s32.totalorder %s331, %s333
      %p340 = scmp.eq.s32.totalorder %s31, 1
      %p341 = por %p339, %p340
      %p342 = scmp.ne.s32.totalorder %s333, %s334
      %p343 = scmp.eq.s32.totalorder %s31, 0
      %p344 = por %p342, %p343
      %p345 = scmp.ne.s32.totalorder %s333, %s334
      %p346 = scmp.eq.s32.totalorder %s32, 1
      %p347 = por %p345, %p346
      %p349 = scmp.ne.s32.totalorder %s334, %s348
      %p350 = scmp.eq.s32.totalorder %s32, 0
      %p351 = por %p349, %p350
      %s353 = sadd.s32 %s352, 1
      %p356 = scmp.eq.s32.totalorder %s26, 1
      %p357 = scmp.ne.s32.totalorder %s352, %s354
      %p358 = scmp.eq.s32.totalorder %s26, 0
      %p359 = por %p357, %p358
      %p360 = scmp.ne.s32.totalorder %s352, %s354
      %p361 = scmp.eq.s32.totalorder %s31, 1
      %p362 = por %p360, %p361
      %p363 = scmp.ne.s32.totalorder %s354, %s355
      %p364 = scmp.eq.s32.totalorder %s31, 0
      %p365 = por %p363, %p364
      %p366 = scmp.ne.s32.totalorder %s354, %s355
      %p367 = scmp.eq.s32.totalorder %s32, 1
      %p368 = por %p366, %p367
      %p370 = scmp.ne.s32.totalorder %s355, %s369
      %p371 = scmp.eq.s32.totalorder %s32, 0
      %p372 = por %p370, %p371
      %s374 = sadd.s32 %s373, 1
      %p377 = scmp.eq.s32.totalorder %s26, 1
      %p378 = scmp.ne.s32.totalorder %s373, %s375
      %p379 = scmp.eq.s32.totalorder %s26, 0
      %p380 = por %p378, %p379
      %p381 = scmp.ne.s32.totalorder %s373, %s375
      %p382 = scmp.eq.s32.totalorder %s31, 1
      %p383 = por %p381, %p382
      %p384 = scmp.ne.s32.totalorder %s375, %s376
      %p385 = scmp.eq.s32.totalorder %s31, 0
      %p386 = por %p384, %p385
      %p387 = scmp.ne.s32.totalorder %s375, %s376
      %p388 = scmp.eq.s32.totalorder %s32, 1
      %p389 = por %p387, %p388
      %p391 = scmp.ne.s32.totalorder %s376, %s390
      %p392 = scmp.eq.s32.totalorder %s32, 0
      %p393 = por %p391, %p392
      %s395 = sadd.s32 %s394, 1
      %p398 = scmp.eq.s32.totalorder %s26, 1
      %p399 = scmp.ne.s32.totalorder %s394, %s396
      %p400 = scmp.eq.s32.totalorder %s26, 0
      %p401 = por %p399, %p400
      %p402 = scmp.ne.s32.totalorder %s394, %s396
      %p403 = scmp.eq.s32.totalorder %s31, 1
      %p404 = por %p402, %p403
      %p405 = scmp.ne.s32.totalorder %s396, %s397
      %p406 = scmp.eq.s32.totalorder %s31, 0
      %p407 = por %p405, %p406
      %p408 = scmp.ne.s32.totalorder %s396, %s397
      %p409 = scmp.eq.s32.totalorder %s32, 1
      %p410 = por %p408, %p409
      %p412 = scmp.ne.s32.totalorder %s397, %s411
      %p413 = scmp.eq.s32.totalorder %s32, 0
      %p414 = por %p412, %p413
      %s415 = ssub.s32 %s33, %s45
      %s416 = ssub.s32 %s34, %s41
      %s417 = sor.u32 %s415, %s416
      %p418 = scmp.eq.s32.totalorder %s417, 0
      %s420 = sadd.s32 %s419, 1
      %s421 = scalar_select %p418, %s419, %s420
      %p424 = pneg %p418
      %p425 = scmp.eq.s32.totalorder %s26, 1
      %p426 = por %p424, %p425
      %p427 = scmp.ne.s32.totalorder %s419, %s422
      %p428 = scmp.eq.s32.totalorder %s26, 0
      %p429 = por %p427, %p428
      %p430 = scmp.ne.s32.totalorder %s419, %s422
      %p431 = scmp.eq.s32.totalorder %s31, 1
      %p432 = por %p430, %p431
      %p433 = scmp.ne.s32.totalorder %s422, %s423
      %p434 = scmp.eq.s32.totalorder %s31, 0
      %p435 = por %p433, %p434
      %p436 = scmp.ne.s32.totalorder %s422, %s423
      %p437 = scmp.eq.s32.totalorder %s32, 1
      %p438 = por %p436, %p437
      %p440 = scmp.ne.s32.totalorder %s423, %s439
      %p441 = scmp.eq.s32.totalorder %s32, 0
      %p442 = por %p440, %p441
      %p443 = scmp.le.s32.totalorder 1, %s26
      %p444 = scmp.lt.s32.totalorder %s26, 3
      %p445 = pnand %p443, %p444
      %p446 = pneg %p445
      // Predicated region
      $region9: #{tpu_custom_call.1} parent=5 // pred_check
        _
      $region10: #{tpu_custom_call.1} parent=5 // pred_check_branch
        %448 = sbr.rel (%p445) target = $region12
      $region11: #{tpu_custom_call.1} parent=5 // pred_region
        %s449 = ssub.s32 %s26, 1
        // Predicated region
        $region13: #{tpu_custom_call.1} parent=11 // pred_check
          %p450 = pneg %p113
        $region14: #{tpu_custom_call.1} parent=11 // pred_check_branch
          %452 = sbr.rel (%p450) target = $region16
        $region15: #{tpu_custom_call.1} parent=11 // pred_region
          _
        $region16: #{tpu_custom_call.1} parent=11 // pred_fallthru
          _
        // Predicated region
        $region17: #{tpu_custom_call.1} parent=11 // pred_check
          %p453 = pneg %p134
        $region18: #{tpu_custom_call.1} parent=11 // pred_check_branch
          %455 = sbr.rel (%p453) target = $region20
        $region19: #{tpu_custom_call.1} parent=11 // pred_region
          _
        $region20: #{tpu_custom_call.1} parent=11 // pred_fallthru
          _
        // Predicated region
        $region21: #{tpu_custom_call.1} parent=11 // pred_check
          %p456 = pneg %p155
        $region22: #{tpu_custom_call.1} parent=11 // pred_check_branch
          %458 = sbr.rel (%p456) target = $region24
        $region23: #{tpu_custom_call.1} parent=11 // pred_region
          _
        $region24: #{tpu_custom_call.1} parent=11 // pred_fallthru
          _
        // Predicated region
        $region25: #{tpu_custom_call.1} parent=11 // pred_check
          %p459 = pneg %p176
        $region26: #{tpu_custom_call.1} parent=11 // pred_check_branch
          %461 = sbr.rel (%p459) target = $region28
        $region27: #{tpu_custom_call.1} parent=11 // pred_region
          _
        $region28: #{tpu_custom_call.1} parent=11 // pred_fallthru
          _
        // Predicated region
        $region29: #{tpu_custom_call.1} parent=11 // pred_check
          %p462 = pneg %p197
        $region30: #{tpu_custom_call.1} parent=11 // pred_check_branch
          %464 = sbr.rel (%p462) target = $region32
        $region31: #{tpu_custom_call.1} parent=11 // pred_region
          _
        $region32: #{tpu_custom_call.1} parent=11 // pred_fallthru
          _
        // Predicated region
        $region33: #{tpu_custom_call.1} parent=11 // pred_check
          %p465 = pneg %p218
        $region34: #{tpu_custom_call.1} parent=11 // pred_check_branch
          %467 = sbr.rel (%p465) target = $region36
        $region35: #{tpu_custom_call.1} parent=11 // pred_region
          _
        $region36: #{tpu_custom_call.1} parent=11 // pred_fallthru
          _
        // Predicated region
        $region37: #{tpu_custom_call.1} parent=11 // pred_check
          %p468 = pneg %p239
        $region38: #{tpu_custom_call.1} parent=11 // pred_check_branch
          %470 = sbr.rel (%p468) target = $region40
        $region39: #{tpu_custom_call.1} parent=11 // pred_region
          _
        $region40: #{tpu_custom_call.1} parent=11 // pred_fallthru
          _
        // Predicated region
        $region41: #{tpu_custom_call.1} parent=11 // pred_check
          %p471 = pneg %p260
        $region42: #{tpu_custom_call.1} parent=11 // pred_check_branch
          %473 = sbr.rel (%p471) target = $region44
        $region43: #{tpu_custom_call.1} parent=11 // pred_region
          _
        $region44: #{tpu_custom_call.1} parent=11 // pred_fallthru
          _
        // Predicated region
        $region45: #{tpu_custom_call.1} parent=11 // pred_check
          %p474 = pneg %p281
        $region46: #{tpu_custom_call.1} parent=11 // pred_check_branch
          %476 = sbr.rel (%p474) target = $region48
        $region47: #{tpu_custom_call.1} parent=11 // pred_region
          _
        $region48: #{tpu_custom_call.1} parent=11 // pred_fallthru
          _
        // Predicated region
        $region49: #{tpu_custom_call.1} parent=11 // pred_check
          %p477 = pneg %p302
        $region50: #{tpu_custom_call.1} parent=11 // pred_check_branch
          %479 = sbr.rel (%p477) target = $region52
        $region51: #{tpu_custom_call.1} parent=11 // pred_region
          _
        $region52: #{tpu_custom_call.1} parent=11 // pred_fallthru
          _
        // Predicated region
        $region53: #{tpu_custom_call.1} parent=11 // pred_check
          %p480 = pneg %p323
        $region54: #{tpu_custom_call.1} parent=11 // pred_check_branch
          %482 = sbr.rel (%p480) target = $region56
        $region55: #{tpu_custom_call.1} parent=11 // pred_region
          _
        $region56: #{tpu_custom_call.1} parent=11 // pred_fallthru
          _
        // Predicated region
        $region57: #{tpu_custom_call.1} parent=11 // pred_check
          %p483 = pneg %p344
        $region58: #{tpu_custom_call.1} parent=11 // pred_check_branch
          %485 = sbr.rel (%p483) target = $region60
        $region59: #{tpu_custom_call.1} parent=11 // pred_region
          _
        $region60: #{tpu_custom_call.1} parent=11 // pred_fallthru
          _
        // Predicated region
        $region61: #{tpu_custom_call.1} parent=11 // pred_check
          %p486 = pneg %p365
        $region62: #{tpu_custom_call.1} parent=11 // pred_check_branch
          %488 = sbr.rel (%p486) target = $region64
        $region63: #{tpu_custom_call.1} parent=11 // pred_region
          _
        $region64: #{tpu_custom_call.1} parent=11 // pred_fallthru
          _
        // Predicated region
        $region65: #{tpu_custom_call.1} parent=11 // pred_check
          %p489 = pneg %p386
        $region66: #{tpu_custom_call.1} parent=11 // pred_check_branch
          %491 = sbr.rel (%p489) target = $region68
        $region67: #{tpu_custom_call.1} parent=11 // pred_region
          _
        $region68: #{tpu_custom_call.1} parent=11 // pred_fallthru
          _
        // Predicated region
        $region69: #{tpu_custom_call.1} parent=11 // pred_check
          %p492 = pneg %p407
        $region70: #{tpu_custom_call.1} parent=11 // pred_check_branch
          %494 = sbr.rel (%p492) target = $region72
        $region71: #{tpu_custom_call.1} parent=11 // pred_region
          _
        $region72: #{tpu_custom_call.1} parent=11 // pred_fallthru
          _
      $region12: #{tpu_custom_call.1} parent=5 // pred_fallthru
        _
      %p495 = scmp.lt.s32.totalorder %s26, 2
      // Predicated region
      $region73: #{tpu_custom_call.1} parent=5 // pred_check
        %p496 = pneg %p495
      $region74: #{tpu_custom_call.1} parent=5 // pred_check_branch
        %498 = sbr.rel (%p496) target = $region76
      $region75: #{tpu_custom_call.1} parent=5 // pred_region
        // Predicated region
        $region77: #{tpu_custom_call.1} parent=75 // pred_check
          %p499 = pneg %p60
        $region78: #{tpu_custom_call.1} parent=75 // pred_check_branch
          %501 = sbr.rel (%p499) target = $region80
        $region79: #{tpu_custom_call.1} parent=75 // pred_region
          %p502 = scmp.lt.s32.totalorder %s33, 1
          %s503 = scalar_select %p502, %s33, 1
          %p504 = scmp.lt.s32.totalorder %s34, 0
          %s505 = scalar_select %p504, %s34, 0
          %s506 = sadd.s32 %s505, %s503
          %s507 = smul.addr %s506, 8
          %s508 = scalar_lea.vmem %s0, %s507
        $region80: #{tpu_custom_call.1} parent=75 // pred_fallthru
          _
        // Predicated region
        $region81: #{tpu_custom_call.1} parent=75 // pred_check
          %p509 = pneg %p86
        $region82: #{tpu_custom_call.1} parent=75 // pred_check_branch
          %511 = sbr.rel (%p509) target = $region84
        $region83: #{tpu_custom_call.1} parent=75 // pred_region
          %p512 = scmp.lt.s32.totalorder %s33, 1
          %s513 = scalar_select %p512, %s33, 1
          %s514 = smul.addr %s513, 8
          %s515 = scalar_lea.vmem %s1, %s514
        $region84: #{tpu_custom_call.1} parent=75 // pred_fallthru
          _
      $region76: #{tpu_custom_call.1} parent=5 // pred_fallthru
        _
      %p516 = scmp.le.s32.totalorder 1, %s26
      %p517 = scmp.lt.s32.totalorder %s26, 3
      %p518 = pnand %p516, %p517
      %p519 = pneg %p518
      // Predicated region
      $region85: #{tpu_custom_call.1} parent=5 // pred_check
        _
      $region86: #{tpu_custom_call.1} parent=5 // pred_check_branch
        %521 = sbr.rel (%p518) target = $region88
      $region87: #{tpu_custom_call.1} parent=5 // pred_region
        %s522 = ssub.s32 %s26, 1
        %p523 = scmp.lt.s32.totalorder %s35, 1
        %s524 = scalar_select %p523, %s35, 1
        %p525 = scmp.lt.s32.totalorder %s36, 0
        %s526 = scalar_select %p525, %s36, 0
        %s527 = sadd.s32 %s526, %s524
        %s528 = smul.addr %s527, 8
        %s529 = scalar_lea.vmem %s0, %s528
        %p530 = pneg %p66
        %p531 = pneg %p63
        %p532 = scmp.lt.s32.totalorder %s35, 1
        %s533 = scalar_select %p532, %s35, 1
        %s534 = smul.addr %s533, 8
        %s535 = scalar_lea.vmem %s1, %s534
        %p536 = pneg %p92
        %p537 = pneg %p89
        %p538 = pneg %p113
        %p539 = pneg %p110
        %p540 = pneg %p134
        %p541 = pneg %p131
        %p542 = pneg %p155
        %p543 = pneg %p152
        %p544 = pneg %p176
        %p545 = pneg %p173
        %p546 = pneg %p197
        %p547 = pneg %p194
        %p548 = pneg %p218
        %p549 = pneg %p215
        %p550 = pneg %p239
        %p551 = pneg %p236
        %p552 = pneg %p260
        %p553 = pneg %p257
        %p554 = pneg %p281
        %p555 = pneg %p278
        %p556 = pneg %p302
        %p557 = pneg %p299
        %p558 = pneg %p323
        %p559 = pneg %p320
        %p560 = pneg %p344
        %p561 = pneg %p341
        %p562 = pneg %p365
        %p563 = pneg %p362
        %p564 = pneg %p386
        %p565 = pneg %p383
        %p566 = pneg %p407
        %p567 = pneg %p404
        %p568 = pneg %p435
        %p569 = pneg %p432
        %s570 = sand.u32 %s422, 1
        %s571 = scalar_lea.sflag [#allocation3], %s570
        %s572 = sand.u32 %s422, 1
        %s573 = smul.addr %s572, 8
        %s574 = scalar_lea.vmem [#allocation2], %s573
        %p575 = scmp.lt.s32.totalorder %s35, 1
        %s576 = scalar_select %p575, %s35, 1
        %p577 = scmp.lt.s32.totalorder %s36, 0
        %s578 = scalar_select %p577, %s36, 0
        %s579 = sadd.s32 %s578, %s576
        %s580 = smul.addr %s579, 8
        %s581 = scalar_lea.vmem %s0, %s580
        %p582 = scmp.lt.s32.totalorder %s35, 1
        %s583 = scalar_select %p582, %s35, 1
        %s584 = smul.addr %s583, 8
        %s585 = scalar_lea.vmem %s1, %s584
        %v586 = vld [vmem:[%s581] sm:$0xff]
        %v587 = vld [vmem:[%s585] sm:$0xff]
        %v588 = vld [vmem:[%s2] sm:$0xff]
        %v589 = vld [vmem:[%s2 + $0x8] sm:$0xff]
        %v590 = vld [vmem:[%s2 + $0x10] sm:$0xff]
        %v591 = vld [vmem:[%s2 + $0x18] sm:$0xff]
        %v592 = vld [vmem:[%s2 + $0x20] sm:$0xff]
        %v593 = vld [vmem:[%s2 + $0x28] sm:$0xff]
        %v594 = vld [vmem:[%s2 + $0x30] sm:$0xff]
        %v595 = vld [vmem:[%s2 + $0x38] sm:$0xff]
        %v596 = vld [vmem:[%s2 + $0x40] sm:$0xff]
        %v597 = vld [vmem:[%s2 + $0x48] sm:$0xff]
        %v598 = vld [vmem:[%s2 + $0x50] sm:$0xff]
        %v599 = vld [vmem:[%s2 + $0x58] sm:$0xff]
        %v600 = vld [vmem:[%s2 + $0x60] sm:$0xff]
        %v601 = vld [vmem:[%s2 + $0x68] sm:$0xff]
        %v602 = vld [vmem:[%s2 + $0x70] sm:$0xff]
        %v603 = vld [vmem:[%s2 + $0x78] sm:$0xff]
        %v604 = vld [vmem:[%s3] sm:$0x1]
        %v605 = vld [vmem:[%s3 + $0x1] sm:$0x1]
        %v606 = vld [vmem:[%s3 + $0x2] sm:$0x1]
        %v607 = vld [vmem:[%s3 + $0x3] sm:$0x1]
        %v612 = vlaneseq
        %v613 = vshrl.u32 %v612, 7
        %v614 = vsub.s32 0, %v613
        %v615 = vrot.slane %v604, %v614
        %v616 = vlaneseq
        %v617 = vshrl.u32 %v616, 7
        %v618 = vsub.s32 0, %v617
        %v619 = vrot.slane %v605, %v618
        %v620 = vlaneseq
        %v621 = vshrl.u32 %v620, 7
        %v622 = vsub.s32 0, %v621
        %v623 = vrot.slane %v606, %v622
        %v624 = vlaneseq
        %v625 = vshrl.u32 %v624, 7
        %v626 = vsub.s32 0, %v625
        %v627 = vrot.slane %v607, %v626
        %vm632 = vcmask 261120
        %v634 = vsel %vm632, %v586, 0
        %636 = vmatprep.subr.mxu0 0.0
        %637 = vmatpush1.msra.mxu0 %v588
        %638 = vmatprep.subr.mxu0 0.0
        %639 = vmatpush1.msra.mxu0 %v589
        %640 = vmatprep.subr.mxu0 0.0
        %641 = vmatpush1.msra.mxu0 %v590
        %642 = vmatprep.subr.mxu0 0.0
        %643 = vmatpush1.msra.mxu0 %v591
        %644 = vmatprep.subr.mxu0 0.0
        %645 = vmatpush1.msra.mxu0 0.0
        %646 = vmatprep.subr.mxu0 0.0
        %647 = vmatpush1.msra.mxu0 0.0
        %648 = vmatprep.subr.mxu0 0.0
        %649 = vmatpush1.msra.mxu0 0.0
        %650 = vmatprep.subr.mxu0 0.0
        %651 = vmatpush1.msra.mxu0 0.0
        %652 = vmatprep.subr.mxu0 0.0
        %653 = vmatpush1.msra.mxu0 0.0
        %654 = vmatprep.subr.mxu0 0.0
        %655 = vmatpush1.msra.mxu0 0.0
        %656 = vmatprep.subr.mxu0 0.0
        %657 = vmatpush1.msra.mxu0 0.0
        %658 = vmatprep.subr.mxu0 0.0
        %659 = vmatpush1.msra.mxu0 0.0
        %660 = vmatprep.subr.mxu0 0.0
        %661 = vmatpush1.msra.mxu0 0.0
        %662 = vmatprep.subr.mxu0 0.0
        %663 = vmatpush1.msra.mxu0 0.0
        %664 = vmatprep.subr.mxu0 0.0
        %665 = vmatpush1.msra.mxu0 0.0
        %666 = vmatprep.subr.mxu0 0.0
        %667 = vmatpush1.msra.mxu0 0.0
        %668 = vmatprep.subr.mxu0 0.0
        %669 = vmatpush1.msra.mxu0 0.0
        %670 = vmatprep.subr.mxu0 0.0
        %671 = vmatpush1.msra.mxu0 0.0
        %672 = vmatprep.subr.mxu0 0.0
        %673 = vmatpush1.msra.mxu0 0.0
        %674 = vmatprep.subr.mxu0 0.0
        %675 = vmatpush1.msra.mxu0 0.0
        %676 = vmatprep.subr.mxu0 0.0
        %677 = vmatpush1.msra.mxu0 0.0
        %678 = vmatprep.subr.mxu0 0.0
        %679 = vmatpush1.msra.mxu0 0.0
        %680 = vmatprep.subr.mxu0 0.0
        %681 = vmatpush1.msra.mxu0 0.0
        %682 = vmatprep.subr.mxu0 0.0
        %683 = vmatpush1.msra.mxu0 0.0
        %684 = vmatprep.subr.mxu0 0.0
        %685 = vmatpush1.msra.mxu0 0.0
        %686 = vmatprep.subr.mxu0 0.0
        %687 = vmatpush1.msra.mxu0 0.0
        %688 = vmatprep.subr.mxu0 0.0
        %689 = vmatpush1.msra.mxu0 0.0
        %690 = vmatprep.subr.mxu0 0.0
        %691 = vmatpush1.msra.mxu0 0.0
        %692 = vmatprep.subr.mxu0 0.0
        %693 = vmatpush1.msra.mxu0 0.0
        %694 = vmatprep.subr.mxu0 0.0
        %695 = vmatpush1.msra.mxu0 0.0
        %696 = vmatprep.subr.mxu0 0.0
        %697 = vmatpush1.msra.mxu0 0.0
        %698 = vmatprep.subr.mxu0 0.0
        %699 = vmatpush1.msra.mxu0 0.0
        %700 = vmatprep.mubr.f32.mxu0 0.0
        %701 = vmatmul.mubr.f32.gmra.mrb[0].mxu0 %v634
        %v702 = vpop.f32.mrb[0].mxu0
        %v703 = vadd.f32 %v615, %v702
        %v704 = vpop.f32.mrb[0].mxu0
        %705 = vdwg.mxu0
        %706 = vmatprep.subr.mxu0 0.0
        %707 = vmatpush1.msra.mxu0 %v592
        %708 = vmatprep.subr.mxu0 0.0
        %709 = vmatpush1.msra.mxu0 %v593
        %710 = vmatprep.subr.mxu0 0.0
        %711 = vmatpush1.msra.mxu0 %v594
        %712 = vmatprep.subr.mxu0 0.0
        %713 = vmatpush1.msra.mxu0 %v595
        %714 = vmatprep.subr.mxu0 0.0
        %715 = vmatpush1.msra.mxu0 0.0
        %716 = vmatprep.subr.mxu0 0.0
        %717 = vmatpush1.msra.mxu0 0.0
        %718 = vmatprep.subr.mxu0 0.0
        %719 = vmatpush1.msra.mxu0 0.0
        %720 = vmatprep.subr.mxu0 0.0
        %721 = vmatpush1.msra.mxu0 0.0
        %722 = vmatprep.subr.mxu0 0.0
        %723 = vmatpush1.msra.mxu0 0.0
        %724 = vmatprep.subr.mxu0 0.0
        %725 = vmatpush1.msra.mxu0 0.0
        %726 = vmatprep.subr.mxu0 0.0
        %727 = vmatpush1.msra.mxu0 0.0
        %728 = vmatprep.subr.mxu0 0.0
        %729 = vmatpush1.msra.mxu0 0.0
        %730 = vmatprep.subr.mxu0 0.0
        %731 = vmatpush1.msra.mxu0 0.0
        %732 = vmatprep.subr.mxu0 0.0
        %733 = vmatpush1.msra.mxu0 0.0
        %734 = vmatprep.subr.mxu0 0.0
        %735 = vmatpush1.msra.mxu0 0.0
        %736 = vmatprep.subr.mxu0 0.0
        %737 = vmatpush1.msra.mxu0 0.0
        %738 = vmatprep.subr.mxu0 0.0
        %739 = vmatpush1.msra.mxu0 0.0
        %740 = vmatprep.subr.mxu0 0.0
        %741 = vmatpush1.msra.mxu0 0.0
        %742 = vmatprep.subr.mxu0 0.0
        %743 = vmatpush1.msra.mxu0 0.0
        %744 = vmatprep.subr.mxu0 0.0
        %745 = vmatpush1.msra.mxu0 0.0
        %746 = vmatprep.subr.mxu0 0.0
        %747 = vmatpush1.msra.mxu0 0.0
        %748 = vmatprep.subr.mxu0 0.0
        %749 = vmatpush1.msra.mxu0 0.0
        %750 = vmatprep.subr.mxu0 0.0
        %751 = vmatpush1.msra.mxu0 0.0
        %752 = vmatprep.subr.mxu0 0.0
        %753 = vmatpush1.msra.mxu0 0.0
        %754 = vmatprep.subr.mxu0 0.0
        %755 = vmatpush1.msra.mxu0 0.0
        %756 = vmatprep.subr.mxu0 0.0
        %757 = vmatpush1.msra.mxu0 0.0
        %758 = vmatprep.subr.mxu0 0.0
        %759 = vmatpush1.msra.mxu0 0.0
        %760 = vmatprep.subr.mxu0 0.0
        %761 = vmatpush1.msra.mxu0 0.0
        %762 = vmatprep.subr.mxu0 0.0
        %763 = vmatpush1.msra.mxu0 0.0
        %764 = vmatprep.subr.mxu0 0.0
        %765 = vmatpush1.msra.mxu0 0.0
        %766 = vmatprep.subr.mxu0 0.0
        %767 = vmatpush1.msra.mxu0 0.0
        %768 = vmatprep.subr.mxu0 0.0
        %769 = vmatpush1.msra.mxu0 0.0
        %770 = vmatprep.mubr.f32.mxu0 0.0
        %771 = vmatmul.mubr.f32.gmra.mrb[0].mxu0 %v634
        %v772 = vpop.f32.mrb[0].mxu0
        %v773 = vadd.f32 %v619, %v772
        %v774 = vpop.f32.mrb[0].mxu0
        %775 = vdwg.mxu0
        %776 = vmatprep.subr.mxu0 0.0
        %777 = vmatpush1.msra.mxu0 %v596
        %778 = vmatprep.subr.mxu0 0.0
        %779 = vmatpush1.msra.mxu0 %v597
        %780 = vmatprep.subr.mxu0 0.0
        %781 = vmatpush1.msra.mxu0 %v598
        %782 = vmatprep.subr.mxu0 0.0
        %783 = vmatpush1.msra.mxu0 %v599
        %784 = vmatprep.subr.mxu0 0.0
        %785 = vmatpush1.msra.mxu0 0.0
        %786 = vmatprep.subr.mxu0 0.0
        %787 = vmatpush1.msra.mxu0 0.0
        %788 = vmatprep.subr.mxu0 0.0
        %789 = vmatpush1.msra.mxu0 0.0
        %790 = vmatprep.subr.mxu0 0.0
        %791 = vmatpush1.msra.mxu0 0.0
        %792 = vmatprep.subr.mxu0 0.0
        %793 = vmatpush1.msra.mxu0 0.0
        %794 = vmatprep.subr.mxu0 0.0
        %795 = vmatpush1.msra.mxu0 0.0
        %796 = vmatprep.subr.mxu0 0.0
        %797 = vmatpush1.msra.mxu0 0.0
        %798 = vmatprep.subr.mxu0 0.0
        %799 = vmatpush1.msra.mxu0 0.0
        %800 = vmatprep.subr.mxu0 0.0
        %801 = vmatpush1.msra.mxu0 0.0
        %802 = vmatprep.subr.mxu0 0.0
        %803 = vmatpush1.msra.mxu0 0.0
        %804 = vmatprep.subr.mxu0 0.0
        %805 = vmatpush1.msra.mxu0 0.0
        %806 = vmatprep.subr.mxu0 0.0
        %807 = vmatpush1.msra.mxu0 0.0
        %808 = vmatprep.subr.mxu0 0.0
        %809 = vmatpush1.msra.mxu0 0.0
        %810 = vmatprep.subr.mxu0 0.0
        %811 = vmatpush1.msra.mxu0 0.0
        %812 = vmatprep.subr.mxu0 0.0
        %813 = vmatpush1.msra.mxu0 0.0
        %814 = vmatprep.subr.mxu0 0.0
        %815 = vmatpush1.msra.mxu0 0.0
        %816 = vmatprep.subr.mxu0 0.0
        %817 = vmatpush1.msra.mxu0 0.0
        %818 = vmatprep.subr.mxu0 0.0
        %819 = vmatpush1.msra.mxu0 0.0
        %820 = vmatprep.subr.mxu0 0.0
        %821 = vmatpush1.msra.mxu0 0.0
        %822 = vmatprep.subr.mxu0 0.0
        %823 = vmatpush1.msra.mxu0 0.0
        %824 = vmatprep.subr.mxu0 0.0
        %825 = vmatpush1.msra.mxu0 0.0
        %826 = vmatprep.subr.mxu0 0.0
        %827 = vmatpush1.msra.mxu0 0.0
        %828 = vmatprep.subr.mxu0 0.0
        %829 = vmatpush1.msra.mxu0 0.0
        %830 = vmatprep.subr.mxu0 0.0
        %831 = vmatpush1.msra.mxu0 0.0
        %832 = vmatprep.subr.mxu0 0.0
        %833 = vmatpush1.msra.mxu0 0.0
        %834 = vmatprep.subr.mxu0 0.0
        %835 = vmatpush1.msra.mxu0 0.0
        %836 = vmatprep.subr.mxu0 0.0
        %837 = vmatpush1.msra.mxu0 0.0
        %838 = vmatprep.subr.mxu0 0.0
        %839 = vmatpush1.msra.mxu0 0.0
        %840 = vmatprep.mubr.f32.mxu0 0.0
        %841 = vmatmul.mubr.f32.gmra.mrb[0].mxu0 %v634
        %v842 = vpop.f32.mrb[0].mxu0
        %v843 = vadd.f32 %v623, %v842
        %v844 = vpop.f32.mrb[0].mxu0
        %845 = vdwg.mxu0
        %846 = vmatprep.subr.mxu0 0.0
        %847 = vmatpush1.msra.mxu0 %v600
        %848 = vmatprep.subr.mxu0 0.0
        %849 = vmatpush1.msra.mxu0 %v601
        %850 = vmatprep.subr.mxu0 0.0
        %851 = vmatpush1.msra.mxu0 %v602
        %852 = vmatprep.subr.mxu0 0.0
        %853 = vmatpush1.msra.mxu0 %v603
        %854 = vmatprep.subr.mxu0 0.0
        %855 = vmatpush1.msra.mxu0 0.0
        %856 = vmatprep.subr.mxu0 0.0
        %857 = vmatpush1.msra.mxu0 0.0
        %858 = vmatprep.subr.mxu0 0.0
        %859 = vmatpush1.msra.mxu0 0.0
        %860 = vmatprep.subr.mxu0 0.0
        %861 = vmatpush1.msra.mxu0 0.0
        %862 = vmatprep.subr.mxu0 0.0
        %863 = vmatpush1.msra.mxu0 0.0
        %864 = vmatprep.subr.mxu0 0.0
        %865 = vmatpush1.msra.mxu0 0.0
        %866 = vmatprep.subr.mxu0 0.0
        %867 = vmatpush1.msra.mxu0 0.0
        %868 = vmatprep.subr.mxu0 0.0
        %869 = vmatpush1.msra.mxu0 0.0
        %870 = vmatprep.subr.mxu0 0.0
        %871 = vmatpush1.msra.mxu0 0.0
        %872 = vmatprep.subr.mxu0 0.0
        %873 = vmatpush1.msra.mxu0 0.0
        %874 = vmatprep.subr.mxu0 0.0
        %875 = vmatpush1.msra.mxu0 0.0
        %876 = vmatprep.subr.mxu0 0.0
        %877 = vmatpush1.msra.mxu0 0.0
        %878 = vmatprep.subr.mxu0 0.0
        %879 = vmatpush1.msra.mxu0 0.0
        %880 = vmatprep.subr.mxu0 0.0
        %881 = vmatpush1.msra.mxu0 0.0
        %882 = vmatprep.subr.mxu0 0.0
        %883 = vmatpush1.msra.mxu0 0.0
        %884 = vmatprep.subr.mxu0 0.0
        %885 = vmatpush1.msra.mxu0 0.0
        %886 = vmatprep.subr.mxu0 0.0
        %887 = vmatpush1.msra.mxu0 0.0
        %888 = vmatprep.subr.mxu0 0.0
        %889 = vmatpush1.msra.mxu0 0.0
        %890 = vmatprep.subr.mxu0 0.0
        %891 = vmatpush1.msra.mxu0 0.0
        %892 = vmatprep.subr.mxu0 0.0
        %893 = vmatpush1.msra.mxu0 0.0
        %894 = vmatprep.subr.mxu0 0.0
        %895 = vmatpush1.msra.mxu0 0.0
        %896 = vmatprep.subr.mxu0 0.0
        %897 = vmatpush1.msra.mxu0 0.0
        %898 = vmatprep.subr.mxu0 0.0
        %899 = vmatpush1.msra.mxu0 0.0
        %900 = vmatprep.subr.mxu0 0.0
        %901 = vmatpush1.msra.mxu0 0.0
        %902 = vmatprep.subr.mxu0 0.0
        %903 = vmatpush1.msra.mxu0 0.0
        %904 = vmatprep.subr.mxu0 0.0
        %905 = vmatpush1.msra.mxu0 0.0
        %906 = vmatprep.subr.mxu0 0.0
        %907 = vmatpush1.msra.mxu0 0.0
        %908 = vmatprep.subr.mxu0 0.0
        %909 = vmatpush1.msra.mxu0 0.0
        %910 = vmatprep.mubr.f32.mxu0 0.0
        %911 = vmatmul.mubr.f32.gmra.mrb[0].mxu0 %v634
        %v912 = vpop.f32.mrb[0].mxu0
        %v913 = vadd.f32 %v627, %v912
        %v914 = vpop.f32.mrb[0].mxu0
        %915 = vdwg.mxu0
        %v916 = vld [vmem:[%s4] sm:$0xff]
        %v917 = vld [vmem:[%s4 + $0x8] sm:$0xff]
        %v918 = vld [vmem:[%s4 + $0x10] sm:$0xff]
        %v919 = vld [vmem:[%s4 + $0x18] sm:$0xff]
        %v920 = vld [vmem:[%s4 + $0x20] sm:$0xff]
        %v921 = vld [vmem:[%s4 + $0x28] sm:$0xff]
        %v922 = vld [vmem:[%s4 + $0x30] sm:$0xff]
        %v923 = vld [vmem:[%s4 + $0x38] sm:$0xff]
        %v924 = vld [vmem:[%s4 + $0x40] sm:$0xff]
        %v925 = vld [vmem:[%s4 + $0x48] sm:$0xff]
        %v926 = vld [vmem:[%s4 + $0x50] sm:$0xff]
        %v927 = vld [vmem:[%s4 + $0x58] sm:$0xff]
        %v928 = vld [vmem:[%s4 + $0x60] sm:$0xff]
        %v929 = vld [vmem:[%s4 + $0x68] sm:$0xff]
        %v930 = vld [vmem:[%s4 + $0x70] sm:$0xff]
        %v931 = vld [vmem:[%s4 + $0x78] sm:$0xff]
        %v932 = vld [vmem:[%s5] sm:$0x1]
        %v933 = vld [vmem:[%s5 + $0x1] sm:$0x1]
        %v934 = vld [vmem:[%s5 + $0x2] sm:$0x1]
        %v935 = vld [vmem:[%s5 + $0x3] sm:$0x1]
        %v940 = vlaneseq
        %v941 = vshrl.u32 %v940, 7
        %v942 = vsub.s32 0, %v941
        %v943 = vrot.slane %v932, %v942
        %v944 = vlaneseq
        %v945 = vshrl.u32 %v944, 7
        %v946 = vsub.s32 0, %v945
        %v947 = vrot.slane %v933, %v946
        %v948 = vlaneseq
        %v949 = vshrl.u32 %v948, 7
        %v950 = vsub.s32 0, %v949
        %v951 = vrot.slane %v934, %v950
        %v952 = vlaneseq
        %v953 = vshrl.u32 %v952, 7
        %v954 = vsub.s32 0, %v953
        %v955 = vrot.slane %v935, %v954
        %v961 = vsel %vm632, %v587, 0
        %963 = vmatprep.subr.mxu0 0.0
        %964 = vmatpush1.msra.mxu0 %v916
        %965 = vmatprep.subr.mxu0 0.0
        %966 = vmatpush1.msra.mxu0 %v917
        %967 = vmatprep.subr.mxu0 0.0
        %968 = vmatpush1.msra.mxu0 %v918
        %969 = vmatprep.subr.mxu0 0.0
        %970 = vmatpush1.msra.mxu0 %v919
        %971 = vmatprep.subr.mxu0 0.0
        %972 = vmatpush1.msra.mxu0 0.0
        %973 = vmatprep.subr.mxu0 0.0
        %974 = vmatpush1.msra.mxu0 0.0
        %975 = vmatprep.subr.mxu0 0.0
        %976 = vmatpush1.msra.mxu0 0.0
        %977 = vmatprep.subr.mxu0 0.0
        %978 = vmatpush1.msra.mxu0 0.0
        %979 = vmatprep.subr.mxu0 0.0
        %980 = vmatpush1.msra.mxu0 0.0
        %981 = vmatprep.subr.mxu0 0.0
        %982 = vmatpush1.msra.mxu0 0.0
        %983 = vmatprep.subr.mxu0 0.0
        %984 = vmatpush1.msra.mxu0 0.0
        %985 = vmatprep.subr.mxu0 0.0
        %986 = vmatpush1.msra.mxu0 0.0
        %987 = vmatprep.subr.mxu0 0.0
        %988 = vmatpush1.msra.mxu0 0.0
        %989 = vmatprep.subr.mxu0 0.0
        %990 = vmatpush1.msra.mxu0 0.0
        %991 = vmatprep.subr.mxu0 0.0
        %992 = vmatpush1.msra.mxu0 0.0
        %993 = vmatprep.subr.mxu0 0.0
        %994 = vmatpush1.msra.mxu0 0.0
        %995 = vmatprep.subr.mxu0 0.0
        %996 = vmatpush1.msra.mxu0 0.0
        %997 = vmatprep.subr.mxu0 0.0
        %998 = vmatpush1.msra.mxu0 0.0
        %999 = vmatprep.subr.mxu0 0.0
        %1000 = vmatpush1.msra.mxu0 0.0
        %1001 = vmatprep.subr.mxu0 0.0
        %1002 = vmatpush1.msra.mxu0 0.0
        %1003 = vmatprep.subr.mxu0 0.0
        %1004 = vmatpush1.msra.mxu0 0.0
        %1005 = vmatprep.subr.mxu0 0.0
        %1006 = vmatpush1.msra.mxu0 0.0
        %1007 = vmatprep.subr.mxu0 0.0
        %1008 = vmatpush1.msra.mxu0 0.0
        %1009 = vmatprep.subr.mxu0 0.0
        %1010 = vmatpush1.msra.mxu0 0.0
        %1011 = vmatprep.subr.mxu0 0.0
        %1012 = vmatpush1.msra.mxu0 0.0
        %1013 = vmatprep.subr.mxu0 0.0
        %1014 = vmatpush1.msra.mxu0 0.0
        %1015 = vmatprep.subr.mxu0 0.0
        %1016 = vmatpush1.msra.mxu0 0.0
        %1017 = vmatprep.subr.mxu0 0.0
        %1018 = vmatpush1.msra.mxu0 0.0
        %1019 = vmatprep.subr.mxu0 0.0
        %1020 = vmatpush1.msra.mxu0 0.0
        %1021 = vmatprep.subr.mxu0 0.0
        %1022 = vmatpush1.msra.mxu0 0.0
        %1023 = vmatprep.subr.mxu0 0.0
        %1024 = vmatpush1.msra.mxu0 0.0
        %1025 = vmatprep.subr.mxu0 0.0
        %1026 = vmatpush1.msra.mxu0 0.0
        %1027 = vmatprep.mubr.f32.mxu0 0.0
        %1028 = vmatmul.mubr.f32.gmra.mrb[0].mxu0 %v961
        %v1029 = vpop.f32.mrb[0].mxu0
        %v1030 = vadd.f32 %v943, %v1029
        %v1031 = vpop.f32.mrb[0].mxu0
        %1032 = vdwg.mxu0
        %1033 = vmatprep.subr.mxu0 0.0
        %1034 = vmatpush1.msra.mxu0 %v920
        %1035 = vmatprep.subr.mxu0 0.0
        %1036 = vmatpush1.msra.mxu0 %v921
        %1037 = vmatprep.subr.mxu0 0.0
        %1038 = vmatpush1.msra.mxu0 %v922
        %1039 = vmatprep.subr.mxu0 0.0
        %1040 = vmatpush1.msra.mxu0 %v923
        %1041 = vmatprep.subr.mxu0 0.0
        %1042 = vmatpush1.msra.mxu0 0.0
        %1043 = vmatprep.subr.mxu0 0.0
        %1044 = vmatpush1.msra.mxu0 0.0
        %1045 = vmatprep.subr.mxu0 0.0
        %1046 = vmatpush1.msra.mxu0 0.0
        %1047 = vmatprep.subr.mxu0 0.0
        %1048 = vmatpush1.msra.mxu0 0.0
        %1049 = vmatprep.subr.mxu0 0.0
        %1050 = vmatpush1.msra.mxu0 0.0
        %1051 = vmatprep.subr.mxu0 0.0
        %1052 = vmatpush1.msra.mxu0 0.0
        %1053 = vmatprep.subr.mxu0 0.0
        %1054 = vmatpush1.msra.mxu0 0.0
        %1055 = vmatprep.subr.mxu0 0.0
        %1056 = vmatpush1.msra.mxu0 0.0
        %1057 = vmatprep.subr.mxu0 0.0
        %1058 = vmatpush1.msra.mxu0 0.0
        %1059 = vmatprep.subr.mxu0 0.0
        %1060 = vmatpush1.msra.mxu0 0.0
        %1061 = vmatprep.subr.mxu0 0.0
        %1062 = vmatpush1.msra.mxu0 0.0
        %1063 = vmatprep.subr.mxu0 0.0
        %1064 = vmatpush1.msra.mxu0 0.0
        %1065 = vmatprep.subr.mxu0 0.0
        %1066 = vmatpush1.msra.mxu0 0.0
        %1067 = vmatprep.subr.mxu0 0.0
        %1068 = vmatpush1.msra.mxu0 0.0
        %1069 = vmatprep.subr.mxu0 0.0
        %1070 = vmatpush1.msra.mxu0 0.0
        %1071 = vmatprep.subr.mxu0 0.0
        %1072 = vmatpush1.msra.mxu0 0.0
        %1073 = vmatprep.subr.mxu0 0.0
        %1074 = vmatpush1.msra.mxu0 0.0
        %1075 = vmatprep.subr.mxu0 0.0
        %1076 = vmatpush1.msra.mxu0 0.0
        %1077 = vmatprep.subr.mxu0 0.0
        %1078 = vmatpush1.msra.mxu0 0.0
        %1079 = vmatprep.subr.mxu0 0.0
        %1080 = vmatpush1.msra.mxu0 0.0
        %1081 = vmatprep.subr.mxu0 0.0
        %1082 = vmatpush1.msra.mxu0 0.0
        %1083 = vmatprep.subr.mxu0 0.0
        %1084 = vmatpush1.msra.mxu0 0.0
        %1085 = vmatprep.subr.mxu0 0.0
        %1086 = vmatpush1.msra.mxu0 0.0
        %1087 = vmatprep.subr.mxu0 0.0
        %1088 = vmatpush1.msra.mxu0 0.0
        %1089 = vmatprep.subr.mxu0 0.0
        %1090 = vmatpush1.msra.mxu0 0.0
        %1091 = vmatprep.subr.mxu0 0.0
        %1092 = vmatpush1.msra.mxu0 0.0
        %1093 = vmatprep.subr.mxu0 0.0
        %1094 = vmatpush1.msra.mxu0 0.0
        %1095 = vmatprep.subr.mxu0 0.0
        %1096 = vmatpush1.msra.mxu0 0.0
        %1097 = vmatprep.mubr.f32.mxu0 0.0
        %1098 = vmatmul.mubr.f32.gmra.mrb[0].mxu0 %v961
        %v1099 = vpop.f32.mrb[0].mxu0
        %v1100 = vadd.f32 %v947, %v1099
        %v1101 = vpop.f32.mrb[0].mxu0
        %1102 = vdwg.mxu0
        %1103 = vmatprep.subr.mxu0 0.0
        %1104 = vmatpush1.msra.mxu0 %v924
        %1105 = vmatprep.subr.mxu0 0.0
        %1106 = vmatpush1.msra.mxu0 %v925
        %1107 = vmatprep.subr.mxu0 0.0
        %1108 = vmatpush1.msra.mxu0 %v926
        %1109 = vmatprep.subr.mxu0 0.0
        %1110 = vmatpush1.msra.mxu0 %v927
        %1111 = vmatprep.subr.mxu0 0.0
        %1112 = vmatpush1.msra.mxu0 0.0
        %1113 = vmatprep.subr.mxu0 0.0
        %1114 = vmatpush1.msra.mxu0 0.0
        %1115 = vmatprep.subr.mxu0 0.0
        %1116 = vmatpush1.msra.mxu0 0.0
        %1117 = vmatprep.subr.mxu0 0.0
        %1118 = vmatpush1.msra.mxu0 0.0
        %1119 = vmatprep.subr.mxu0 0.0
        %1120 = vmatpush1.msra.mxu0 0.0
        %1121 = vmatprep.subr.mxu0 0.0
        %1122 = vmatpush1.msra.mxu0 0.0
        %1123 = vmatprep.subr.mxu0 0.0
        %1124 = vmatpush1.msra.mxu0 0.0
        %1125 = vmatprep.subr.mxu0 0.0
        %1126 = vmatpush1.msra.mxu0 0.0
        %1127 = vmatprep.subr.mxu0 0.0
        %1128 = vmatpush1.msra.mxu0 0.0
        %1129 = vmatprep.subr.mxu0 0.0
        %1130 = vmatpush1.msra.mxu0 0.0
        %1131 = vmatprep.subr.mxu0 0.0
        %1132 = vmatpush1.msra.mxu0 0.0
        %1133 = vmatprep.subr.mxu0 0.0
        %1134 = vmatpush1.msra.mxu0 0.0
        %1135 = vmatprep.subr.mxu0 0.0
        %1136 = vmatpush1.msra.mxu0 0.0
        %1137 = vmatprep.subr.mxu0 0.0
        %1138 = vmatpush1.msra.mxu0 0.0
        %1139 = vmatprep.subr.mxu0 0.0
        %1140 = vmatpush1.msra.mxu0 0.0
        %1141 = vmatprep.subr.mxu0 0.0
        %1142 = vmatpush1.msra.mxu0 0.0
        %1143 = vmatprep.subr.mxu0 0.0
        %1144 = vmatpush1.msra.mxu0 0.0
        %1145 = vmatprep.subr.mxu0 0.0
        %1146 = vmatpush1.msra.mxu0 0.0
        %1147 = vmatprep.subr.mxu0 0.0
        %1148 = vmatpush1.msra.mxu0 0.0
        %1149 = vmatprep.subr.mxu0 0.0
        %1150 = vmatpush1.msra.mxu0 0.0
        %1151 = vmatprep.subr.mxu0 0.0
        %1152 = vmatpush1.msra.mxu0 0.0
        %1153 = vmatprep.subr.mxu0 0.0
        %1154 = vmatpush1.msra.mxu0 0.0
        %1155 = vmatprep.subr.mxu0 0.0
        %1156 = vmatpush1.msra.mxu0 0.0
        %1157 = vmatprep.subr.mxu0 0.0
        %1158 = vmatpush1.msra.mxu0 0.0
        %1159 = vmatprep.subr.mxu0 0.0
        %1160 = vmatpush1.msra.mxu0 0.0
        %1161 = vmatprep.subr.mxu0 0.0
        %1162 = vmatpush1.msra.mxu0 0.0
        %1163 = vmatprep.subr.mxu0 0.0
        %1164 = vmatpush1.msra.mxu0 0.0
        %1165 = vmatprep.subr.mxu0 0.0
        %1166 = vmatpush1.msra.mxu0 0.0
        %1167 = vmatprep.mubr.f32.mxu0 0.0
        %1168 = vmatmul.mubr.f32.gmra.mrb[0].mxu0 %v961
        %v1169 = vpop.f32.mrb[0].mxu0
        %v1170 = vadd.f32 %v951, %v1169
        %v1171 = vpop.f32.mrb[0].mxu0
        %1172 = vdwg.mxu0
        %1173 = vmatprep.subr.mxu0 0.0
        %1174 = vmatpush1.msra.mxu0 %v928
        %1175 = vmatprep.subr.mxu0 0.0
        %1176 = vmatpush1.msra.mxu0 %v929
        %1177 = vmatprep.subr.mxu0 0.0
        %1178 = vmatpush1.msra.mxu0 %v930
        %1179 = vmatprep.subr.mxu0 0.0
        %1180 = vmatpush1.msra.mxu0 %v931
        %1181 = vmatprep.subr.mxu0 0.0
        %1182 = vmatpush1.msra.mxu0 0.0
        %1183 = vmatprep.subr.mxu0 0.0
        %1184 = vmatpush1.msra.mxu0 0.0
        %1185 = vmatprep.subr.mxu0 0.0
        %1186 = vmatpush1.msra.mxu0 0.0
        %1187 = vmatprep.subr.mxu0 0.0
        %1188 = vmatpush1.msra.mxu0 0.0
        %1189 = vmatprep.subr.mxu0 0.0
        %1190 = vmatpush1.msra.mxu0 0.0
        %1191 = vmatprep.subr.mxu0 0.0
        %1192 = vmatpush1.msra.mxu0 0.0
        %1193 = vmatprep.subr.mxu0 0.0
        %1194 = vmatpush1.msra.mxu0 0.0
        %1195 = vmatprep.subr.mxu0 0.0
        %1196 = vmatpush1.msra.mxu0 0.0
        %1197 = vmatprep.subr.mxu0 0.0
        %1198 = vmatpush1.msra.mxu0 0.0
        %1199 = vmatprep.subr.mxu0 0.0
        %1200 = vmatpush1.msra.mxu0 0.0
        %1201 = vmatprep.subr.mxu0 0.0
        %1202 = vmatpush1.msra.mxu0 0.0
        %1203 = vmatprep.subr.mxu0 0.0
        %1204 = vmatpush1.msra.mxu0 0.0
        %1205 = vmatprep.subr.mxu0 0.0
        %1206 = vmatpush1.msra.mxu0 0.0
        %1207 = vmatprep.subr.mxu0 0.0
        %1208 = vmatpush1.msra.mxu0 0.0
        %1209 = vmatprep.subr.mxu0 0.0
        %1210 = vmatpush1.msra.mxu0 0.0
        %1211 = vmatprep.subr.mxu0 0.0
        %1212 = vmatpush1.msra.mxu0 0.0
        %1213 = vmatprep.subr.mxu0 0.0
        %1214 = vmatpush1.msra.mxu0 0.0
        %1215 = vmatprep.subr.mxu0 0.0
        %1216 = vmatpush1.msra.mxu0 0.0
        %1217 = vmatprep.subr.mxu0 0.0
        %1218 = vmatpush1.msra.mxu0 0.0
        %1219 = vmatprep.subr.mxu0 0.0
        %1220 = vmatpush1.msra.mxu0 0.0
        %1221 = vmatprep.subr.mxu0 0.0
        %1222 = vmatpush1.msra.mxu0 0.0
        %1223 = vmatprep.subr.mxu0 0.0
        %1224 = vmatpush1.msra.mxu0 0.0
        %1225 = vmatprep.subr.mxu0 0.0
        %1226 = vmatpush1.msra.mxu0 0.0
        %1227 = vmatprep.subr.mxu0 0.0
        %1228 = vmatpush1.msra.mxu0 0.0
        %1229 = vmatprep.subr.mxu0 0.0
        %1230 = vmatpush1.msra.mxu0 0.0
        %1231 = vmatprep.subr.mxu0 0.0
        %1232 = vmatpush1.msra.mxu0 0.0
        %1233 = vmatprep.subr.mxu0 0.0
        %1234 = vmatpush1.msra.mxu0 0.0
        %1235 = vmatprep.subr.mxu0 0.0
        %1236 = vmatpush1.msra.mxu0 0.0
        %1237 = vmatprep.mubr.f32.mxu0 0.0
        %1238 = vmatmul.mubr.f32.gmra.mrb[0].mxu0 %v961
        %v1239 = vpop.f32.mrb[0].mxu0
        %v1240 = vadd.f32 %v955, %v1239
        %v1241 = vpop.f32.mrb[0].mxu0
        %1242 = vdwg.mxu0
        %v1243 = vld [vmem:[%s6] sm:$0xff]
        %v1244 = vld [vmem:[%s6 + $0x8] sm:$0xff]
        %v1245 = vld [vmem:[%s6 + $0x10] sm:$0xff]
        %v1246 = vld [vmem:[%s6 + $0x18] sm:$0xff]
        %v1247 = vld [vmem:[%s6 + $0x20] sm:$0xff]
        %v1248 = vld [vmem:[%s6 + $0x28] sm:$0xff]
        %v1249 = vld [vmem:[%s6 + $0x30] sm:$0xff]
        %v1250 = vld [vmem:[%s6 + $0x38] sm:$0xff]
        %v1251 = vld [vmem:[%s6 + $0x40] sm:$0xff]
        %v1252 = vld [vmem:[%s6 + $0x48] sm:$0xff]
        %v1253 = vld [vmem:[%s6 + $0x50] sm:$0xff]
        %v1254 = vld [vmem:[%s6 + $0x58] sm:$0xff]
        %v1255 = vld [vmem:[%s6 + $0x60] sm:$0xff]
        %v1256 = vld [vmem:[%s6 + $0x68] sm:$0xff]
        %v1257 = vld [vmem:[%s6 + $0x70] sm:$0xff]
        %v1258 = vld [vmem:[%s6 + $0x78] sm:$0xff]
        %v1259 = vld [vmem:[%s7] sm:$0x1]
        %v1260 = vld [vmem:[%s7 + $0x1] sm:$0x1]
        %v1261 = vld [vmem:[%s7 + $0x2] sm:$0x1]
        %v1262 = vld [vmem:[%s7 + $0x3] sm:$0x1]
        %v1267 = vlaneseq
        %v1268 = vshrl.u32 %v1267, 7
        %v1269 = vsub.s32 0, %v1268
        %v1270 = vrot.slane %v1259, %v1269
        %v1271 = vlaneseq
        %v1272 = vshrl.u32 %v1271, 7
        %v1273 = vsub.s32 0, %v1272
        %v1274 = vrot.slane %v1260, %v1273
        %v1275 = vlaneseq
        %v1276 = vshrl.u32 %v1275, 7
        %v1277 = vsub.s32 0, %v1276
        %v1278 = vrot.slane %v1261, %v1277
        %v1279 = vlaneseq
        %v1280 = vshrl.u32 %v1279, 7
        %v1281 = vsub.s32 0, %v1280
        %v1282 = vrot.slane %v1262, %v1281
        %1287 = vmatprep.subr.mxu0 0.0
        %1288 = vmatpush1.msra.mxu0 %v1243
        %1289 = vmatprep.subr.mxu0 0.0
        %1290 = vmatpush1.msra.mxu0 %v1244
        %1291 = vmatprep.subr.mxu0 0.0
        %1292 = vmatpush1.msra.mxu0 %v1245
        %1293 = vmatprep.subr.mxu0 0.0
        %1294 = vmatpush1.msra.mxu0 %v1246
        %1295 = vmatprep.subr.mxu0 0.0
        %1296 = vmatpush1.msra.mxu0 0.0
        %1297 = vmatprep.subr.mxu0 0.0
        %1298 = vmatpush1.msra.mxu0 0.0
        %1299 = vmatprep.subr.mxu0 0.0
        %1300 = vmatpush1.msra.mxu0 0.0
        %1301 = vmatprep.subr.mxu0 0.0
        %1302 = vmatpush1.msra.mxu0 0.0
        %1303 = vmatprep.subr.mxu0 0.0
        %1304 = vmatpush1.msra.mxu0 0.0
        %1305 = vmatprep.subr.mxu0 0.0
        %1306 = vmatpush1.msra.mxu0 0.0
        %1307 = vmatprep.subr.mxu0 0.0
        %1308 = vmatpush1.msra.mxu0 0.0
        %1309 = vmatprep.subr.mxu0 0.0
        %1310 = vmatpush1.msra.mxu0 0.0
        %1311 = vmatprep.subr.mxu0 0.0
        %1312 = vmatpush1.msra.mxu0 0.0
        %1313 = vmatprep.subr.mxu0 0.0
        %1314 = vmatpush1.msra.mxu0 0.0
        %1315 = vmatprep.subr.mxu0 0.0
        %1316 = vmatpush1.msra.mxu0 0.0
        %1317 = vmatprep.subr.mxu0 0.0
        %1318 = vmatpush1.msra.mxu0 0.0
        %1319 = vmatprep.subr.mxu0 0.0
        %1320 = vmatpush1.msra.mxu0 0.0
        %1321 = vmatprep.subr.mxu0 0.0
        %1322 = vmatpush1.msra.mxu0 0.0
        %1323 = vmatprep.subr.mxu0 0.0
        %1324 = vmatpush1.msra.mxu0 0.0
        %1325 = vmatprep.subr.mxu0 0.0
        %1326 = vmatpush1.msra.mxu0 0.0
        %1327 = vmatprep.subr.mxu0 0.0
        %1328 = vmatpush1.msra.mxu0 0.0
        %1329 = vmatprep.subr.mxu0 0.0
        %1330 = vmatpush1.msra.mxu0 0.0
        %1331 = vmatprep.subr.mxu0 0.0
        %1332 = vmatpush1.msra.mxu0 0.0
        %1333 = vmatprep.subr.mxu0 0.0
        %1334 = vmatpush1.msra.mxu0 0.0
        %1335 = vmatprep.subr.mxu0 0.0
        %1336 = vmatpush1.msra.mxu0 0.0
        %1337 = vmatprep.subr.mxu0 0.0
        %1338 = vmatpush1.msra.mxu0 0.0
        %1339 = vmatprep.subr.mxu0 0.0
        %1340 = vmatpush1.msra.mxu0 0.0
        %1341 = vmatprep.subr.mxu0 0.0
        %1342 = vmatpush1.msra.mxu0 0.0
        %1343 = vmatprep.subr.mxu0 0.0
        %1344 = vmatpush1.msra.mxu0 0.0
        %1345 = vmatprep.subr.mxu0 0.0
        %1346 = vmatpush1.msra.mxu0 0.0
        %1347 = vmatprep.subr.mxu0 0.0
        %1348 = vmatpush1.msra.mxu0 0.0
        %1349 = vmatprep.subr.mxu0 0.0
        %1350 = vmatpush1.msra.mxu0 0.0
        %1351 = vmatprep.mubr.f32.mxu0 0.0
        %1352 = vmatmul.mubr.f32.gmra.mrb[0].mxu0 %v961
        %v1353 = vpop.f32.mrb[0].mxu0
        %v1354 = vadd.f32 %v1270, %v1353
        %v1355 = vpop.f32.mrb[0].mxu0
        %1356 = vdwg.mxu0
        %1357 = vmatprep.subr.mxu0 0.0
        %1358 = vmatpush1.msra.mxu0 %v1247
        %1359 = vmatprep.subr.mxu0 0.0
        %1360 = vmatpush1.msra.mxu0 %v1248
        %1361 = vmatprep.subr.mxu0 0.0
        %1362 = vmatpush1.msra.mxu0 %v1249
        %1363 = vmatprep.subr.mxu0 0.0
        %1364 = vmatpush1.msra.mxu0 %v1250
        %1365 = vmatprep.subr.mxu0 0.0
        %1366 = vmatpush1.msra.mxu0 0.0
        %1367 = vmatprep.subr.mxu0 0.0
        %1368 = vmatpush1.msra.mxu0 0.0
        %1369 = vmatprep.subr.mxu0 0.0
        %1370 = vmatpush1.msra.mxu0 0.0
        %1371 = vmatprep.subr.mxu0 0.0
        %1372 = vmatpush1.msra.mxu0 0.0
        %1373 = vmatprep.subr.mxu0 0.0
        %1374 = vmatpush1.msra.mxu0 0.0
        %1375 = vmatprep.subr.mxu0 0.0
        %1376 = vmatpush1.msra.mxu0 0.0
        %1377 = vmatprep.subr.mxu0 0.0
        %1378 = vmatpush1.msra.mxu0 0.0
        %1379 = vmatprep.subr.mxu0 0.0
        %1380 = vmatpush1.msra.mxu0 0.0
        %1381 = vmatprep.subr.mxu0 0.0
        %1382 = vmatpush1.msra.mxu0 0.0
        %1383 = vmatprep.subr.mxu0 0.0
        %1384 = vmatpush1.msra.mxu0 0.0
        %1385 = vmatprep.subr.mxu0 0.0
        %1386 = vmatpush1.msra.mxu0 0.0
        %1387 = vmatprep.subr.mxu0 0.0
        %1388 = vmatpush1.msra.mxu0 0.0
        %1389 = vmatprep.subr.mxu0 0.0
        %1390 = vmatpush1.msra.mxu0 0.0
        %1391 = vmatprep.subr.mxu0 0.0
        %1392 = vmatpush1.msra.mxu0 0.0
        %1393 = vmatprep.subr.mxu0 0.0
        %1394 = vmatpush1.msra.mxu0 0.0
        %1395 = vmatprep.subr.mxu0 0.0
        %1396 = vmatpush1.msra.mxu0 0.0
        %1397 = vmatprep.subr.mxu0 0.0
        %1398 = vmatpush1.msra.mxu0 0.0
        %1399 = vmatprep.subr.mxu0 0.0
        %1400 = vmatpush1.msra.mxu0 0.0
        %1401 = vmatprep.subr.mxu0 0.0
        %1402 = vmatpush1.msra.mxu0 0.0
        %1403 = vmatprep.subr.mxu0 0.0
        %1404 = vmatpush1.msra.mxu0 0.0
        %1405 = vmatprep.subr.mxu0 0.0
        %1406 = vmatpush1.msra.mxu0 0.0
        %1407 = vmatprep.subr.mxu0 0.0
        %1408 = vmatpush1.msra.mxu0 0.0
        %1409 = vmatprep.subr.mxu0 0.0
        %1410 = vmatpush1.msra.mxu0 0.0
        %1411 = vmatprep.subr.mxu0 0.0
        %1412 = vmatpush1.msra.mxu0 0.0
        %1413 = vmatprep.subr.mxu0 0.0
        %1414 = vmatpush1.msra.mxu0 0.0
        %1415 = vmatprep.subr.mxu0 0.0
        %1416 = vmatpush1.msra.mxu0 0.0
        %1417 = vmatprep.subr.mxu0 0.0
        %1418 = vmatpush1.msra.mxu0 0.0
        %1419 = vmatprep.subr.mxu0 0.0
        %1420 = vmatpush1.msra.mxu0 0.0
        %1421 = vmatprep.mubr.f32.mxu0 0.0
        %1422 = vmatmul.mubr.f32.gmra.mrb[0].mxu0 %v961
        %v1423 = vpop.f32.mrb[0].mxu0
        %v1424 = vadd.f32 %v1274, %v1423
        %v1425 = vpop.f32.mrb[0].mxu0
        %1426 = vdwg.mxu0
        %1427 = vmatprep.subr.mxu0 0.0
        %1428 = vmatpush1.msra.mxu0 %v1251
        %1429 = vmatprep.subr.mxu0 0.0
        %1430 = vmatpush1.msra.mxu0 %v1252
        %1431 = vmatprep.subr.mxu0 0.0
        %1432 = vmatpush1.msra.mxu0 %v1253
        %1433 = vmatprep.subr.mxu0 0.0
        %1434 = vmatpush1.msra.mxu0 %v1254
        %1435 = vmatprep.subr.mxu0 0.0
        %1436 = vmatpush1.msra.mxu0 0.0
        %1437 = vmatprep.subr.mxu0 0.0
        %1438 = vmatpush1.msra.mxu0 0.0
        %1439 = vmatprep.subr.mxu0 0.0
        %1440 = vmatpush1.msra.mxu0 0.0
        %1441 = vmatprep.subr.mxu0 0.0
        %1442 = vmatpush1.msra.mxu0 0.0
        %1443 = vmatprep.subr.mxu0 0.0
        %1444 = vmatpush1.msra.mxu0 0.0
        %1445 = vmatprep.subr.mxu0 0.0
        %1446 = vmatpush1.msra.mxu0 0.0
        %1447 = vmatprep.subr.mxu0 0.0
        %1448 = vmatpush1.msra.mxu0 0.0
        %1449 = vmatprep.subr.mxu0 0.0
        %1450 = vmatpush1.msra.mxu0 0.0
        %1451 = vmatprep.subr.mxu0 0.0
        %1452 = vmatpush1.msra.mxu0 0.0
        %1453 = vmatprep.subr.mxu0 0.0
        %1454 = vmatpush1.msra.mxu0 0.0
        %1455 = vmatprep.subr.mxu0 0.0
        %1456 = vmatpush1.msra.mxu0 0.0
        %1457 = vmatprep.subr.mxu0 0.0
        %1458 = vmatpush1.msra.mxu0 0.0
        %1459 = vmatprep.subr.mxu0 0.0
        %1460 = vmatpush1.msra.mxu0 0.0
        %1461 = vmatprep.subr.mxu0 0.0
        %1462 = vmatpush1.msra.mxu0 0.0
        %1463 = vmatprep.subr.mxu0 0.0
        %1464 = vmatpush1.msra.mxu0 0.0
        %1465 = vmatprep.subr.mxu0 0.0
        %1466 = vmatpush1.msra.mxu0 0.0
        %1467 = vmatprep.subr.mxu0 0.0
        %1468 = vmatpush1.msra.mxu0 0.0
        %1469 = vmatprep.subr.mxu0 0.0
        %1470 = vmatpush1.msra.mxu0 0.0
        %1471 = vmatprep.subr.mxu0 0.0
        %1472 = vmatpush1.msra.mxu0 0.0
        %1473 = vmatprep.subr.mxu0 0.0
        %1474 = vmatpush1.msra.mxu0 0.0
        %1475 = vmatprep.subr.mxu0 0.0
        %1476 = vmatpush1.msra.mxu0 0.0
        %1477 = vmatprep.subr.mxu0 0.0
        %1478 = vmatpush1.msra.mxu0 0.0
        %1479 = vmatprep.subr.mxu0 0.0
        %1480 = vmatpush1.msra.mxu0 0.0
        %1481 = vmatprep.subr.mxu0 0.0
        %1482 = vmatpush1.msra.mxu0 0.0
        %1483 = vmatprep.subr.mxu0 0.0
        %1484 = vmatpush1.msra.mxu0 0.0
        %1485 = vmatprep.subr.mxu0 0.0
        %1486 = vmatpush1.msra.mxu0 0.0
        %1487 = vmatprep.subr.mxu0 0.0
        %1488 = vmatpush1.msra.mxu0 0.0
        %1489 = vmatprep.subr.mxu0 0.0
        %1490 = vmatpush1.msra.mxu0 0.0
        %1491 = vmatprep.mubr.f32.mxu0 0.0
        %1492 = vmatmul.mubr.f32.gmra.mrb[0].mxu0 %v961
        %v1493 = vpop.f32.mrb[0].mxu0
        %v1494 = vadd.f32 %v1278, %v1493
        %v1495 = vpop.f32.mrb[0].mxu0
        %1496 = vdwg.mxu0
        %1497 = vmatprep.subr.mxu0 0.0
        %1498 = vmatpush1.msra.mxu0 %v1255
        %1499 = vmatprep.subr.mxu0 0.0
        %1500 = vmatpush1.msra.mxu0 %v1256
        %1501 = vmatprep.subr.mxu0 0.0
        %1502 = vmatpush1.msra.mxu0 %v1257
        %1503 = vmatprep.subr.mxu0 0.0
        %1504 = vmatpush1.msra.mxu0 %v1258
        %1505 = vmatprep.subr.mxu0 0.0
        %1506 = vmatpush1.msra.mxu0 0.0
        %1507 = vmatprep.subr.mxu0 0.0
        %1508 = vmatpush1.msra.mxu0 0.0
        %1509 = vmatprep.subr.mxu0 0.0
        %1510 = vmatpush1.msra.mxu0 0.0
        %1511 = vmatprep.subr.mxu0 0.0
        %1512 = vmatpush1.msra.mxu0 0.0
        %1513 = vmatprep.subr.mxu0 0.0
        %1514 = vmatpush1.msra.mxu0 0.0
        %1515 = vmatprep.subr.mxu0 0.0
        %1516 = vmatpush1.msra.mxu0 0.0
        %1517 = vmatprep.subr.mxu0 0.0
        %1518 = vmatpush1.msra.mxu0 0.0
        %1519 = vmatprep.subr.mxu0 0.0
        %1520 = vmatpush1.msra.mxu0 0.0
        %1521 = vmatprep.subr.mxu0 0.0
        %1522 = vmatpush1.msra.mxu0 0.0
        %1523 = vmatprep.subr.mxu0 0.0
        %1524 = vmatpush1.msra.mxu0 0.0
        %1525 = vmatprep.subr.mxu0 0.0
        %1526 = vmatpush1.msra.mxu0 0.0
        %1527 = vmatprep.subr.mxu0 0.0
        %1528 = vmatpush1.msra.mxu0 0.0
        %1529 = vmatprep.subr.mxu0 0.0
        %1530 = vmatpush1.msra.mxu0 0.0
        %1531 = vmatprep.subr.mxu0 0.0
        %1532 = vmatpush1.msra.mxu0 0.0
        %1533 = vmatprep.subr.mxu0 0.0
        %1534 = vmatpush1.msra.mxu0 0.0
        %1535 = vmatprep.subr.mxu0 0.0
        %1536 = vmatpush1.msra.mxu0 0.0
        %1537 = vmatprep.subr.mxu0 0.0
        %1538 = vmatpush1.msra.mxu0 0.0
        %1539 = vmatprep.subr.mxu0 0.0
        %1540 = vmatpush1.msra.mxu0 0.0
        %1541 = vmatprep.subr.mxu0 0.0
        %1542 = vmatpush1.msra.mxu0 0.0
        %1543 = vmatprep.subr.mxu0 0.0
        %1544 = vmatpush1.msra.mxu0 0.0
        %1545 = vmatprep.subr.mxu0 0.0
        %1546 = vmatpush1.msra.mxu0 0.0
        %1547 = vmatprep.subr.mxu0 0.0
        %1548 = vmatpush1.msra.mxu0 0.0
        %1549 = vmatprep.subr.mxu0 0.0
        %1550 = vmatpush1.msra.mxu0 0.0
        %1551 = vmatprep.subr.mxu0 0.0
        %1552 = vmatpush1.msra.mxu0 0.0
        %1553 = vmatprep.subr.mxu0 0.0
        %1554 = vmatpush1.msra.mxu0 0.0
        %1555 = vmatprep.subr.mxu0 0.0
        %1556 = vmatpush1.msra.mxu0 0.0
        %1557 = vmatprep.subr.mxu0 0.0
        %1558 = vmatpush1.msra.mxu0 0.0
        %1559 = vmatprep.subr.mxu0 0.0
        %1560 = vmatpush1.msra.mxu0 0.0
        %1561 = vmatprep.mubr.f32.mxu0 0.0
        %1562 = vmatmul.mubr.f32.gmra.mrb[0].mxu0 %v961
        %v1563 = vpop.f32.mrb[0].mxu0
        %v1564 = vadd.f32 %v1282, %v1563
        %v1565 = vpop.f32.mrb[0].mxu0
        %1566 = vdwg.mxu0
        %v1567 = vmul.f32 %v703, 0.35355338
        %v1568 = vmul.f32 %v773, 0.35355338
        %v1569 = vmul.f32 %v843, 0.35355338
        %v1570 = vmul.f32 %v913, 0.35355338
        %vm1571 = vcmask 64512
        %v1573 = vsel %vm1571, %v1567, 0
        %v1576 = vsel %vm1571, %v1030, 0
        %1578 = vmatprep.subr.mxu0 0.0
        %1579 = vmatpush1.xpose.msra.mxu0 %v1576
        %1580 = vmatprep.subr.mxu0 0.0
        %1581 = vmatpush1.xpose.msra.mxu0 0.0
        %1582 = vmatprep.subr.mxu0 0.0
        %1583 = vmatpush1.xpose.msra.mxu0 0.0
        %1584 = vmatprep.subr.mxu0 0.0
        %1585 = vmatpush1.xpose.msra.mxu0 0.0
        %1586 = vmatprep.subr.mxu0 0.0
        %1587 = vmatpush1.xpose.msra.mxu0 0.0
        %1588 = vmatprep.subr.mxu0 0.0
        %1589 = vmatpush1.xpose.msra.mxu0 0.0
        %1590 = vmatprep.subr.mxu0 0.0
        %1591 = vmatpush1.xpose.msra.mxu0 0.0
        %1592 = vmatprep.subr.mxu0 0.0
        %1593 = vmatpush1.xpose.msra.mxu0 0.0
        %1594 = vmatprep.subr.mxu0 0.0
        %1595 = vmatpush1.xpose.msra.mxu0 0.0
        %1596 = vmatprep.subr.mxu0 0.0
        %1597 = vmatpush1.xpose.msra.mxu0 0.0
        %1598 = vmatprep.subr.mxu0 0.0
        %1599 = vmatpush1.xpose.msra.mxu0 0.0
        %1600 = vmatprep.subr.mxu0 0.0
        %1601 = vmatpush1.xpose.msra.mxu0 0.0
        %1602 = vmatprep.subr.mxu0 0.0
        %1603 = vmatpush1.xpose.msra.mxu0 0.0
        %1604 = vmatprep.subr.mxu0 0.0
        %1605 = vmatpush1.xpose.msra.mxu0 0.0
        %1606 = vmatprep.subr.mxu0 0.0
        %1607 = vmatpush1.xpose.msra.mxu0 0.0
        %1608 = vmatprep.subr.mxu0 0.0
        %1609 = vmatpush1.xpose.msra.mxu0 0.0
        %1610 = vmatprep.subr.mxu0 0.0
        %1611 = vmatpush1.xpose.msra.mxu0 0.0
        %1612 = vmatprep.subr.mxu0 0.0
        %1613 = vmatpush1.xpose.msra.mxu0 0.0
        %1614 = vmatprep.subr.mxu0 0.0
        %1615 = vmatpush1.xpose.msra.mxu0 0.0
        %1616 = vmatprep.subr.mxu0 0.0
        %1617 = vmatpush1.xpose.msra.mxu0 0.0
        %1618 = vmatprep.subr.mxu0 0.0
        %1619 = vmatpush1.xpose.msra.mxu0 0.0
        %1620 = vmatprep.subr.mxu0 0.0
        %1621 = vmatpush1.xpose.msra.mxu0 0.0
        %1622 = vmatprep.subr.mxu0 0.0
        %1623 = vmatpush1.xpose.msra.mxu0 0.0
        %1624 = vmatprep.subr.mxu0 0.0
        %1625 = vmatpush1.xpose.msra.mxu0 0.0
        %1626 = vmatprep.subr.mxu0 0.0
        %1627 = vmatpush1.xpose.msra.mxu0 0.0
        %1628 = vmatprep.subr.mxu0 0.0
        %1629 = vmatpush1.xpose.msra.mxu0 0.0
        %1630 = vmatprep.subr.mxu0 0.0
        %1631 = vmatpush1.xpose.msra.mxu0 0.0
        %1632 = vmatprep.subr.mxu0 0.0
        %1633 = vmatpush1.xpose.msra.mxu0 0.0
        %1634 = vmatprep.subr.mxu0 0.0
        %1635 = vmatpush1.xpose.msra.mxu0 0.0
        %1636 = vmatprep.subr.mxu0 0.0
        %1637 = vmatpush1.xpose.msra.mxu0 0.0
        %1638 = vmatprep.subr.mxu0 0.0
        %1639 = vmatpush1.xpose.msra.mxu0 0.0
        %1640 = vmatprep.subr.mxu0 0.0
        %1641 = vmatpush1.xpose.msra.mxu0 0.0
        %1642 = vmatprep.mubr.f32.mxu0 0.0
        %1643 = vmatmul.mubr.f32.gmra.mrb[0].mxu0 %v1573
        %v1644 = vpop.f32.mrb[0].mxu0
        %v1645 = vadd.f32 0.0, %v1644
        %v1646 = vpop.f32.mrb[0].mxu0
        %1647 = vdwg.mxu0
        %v1649 = vsel %vm1571, %v1568, 0
        %v1652 = vsel %vm1571, %v1100, 0
        %1654 = vmatprep.subr.mxu0 0.0
        %1655 = vmatpush1.xpose.msra.mxu0 %v1652
        %1656 = vmatprep.subr.mxu0 0.0
        %1657 = vmatpush1.xpose.msra.mxu0 0.0
        %1658 = vmatprep.subr.mxu0 0.0
        %1659 = vmatpush1.xpose.msra.mxu0 0.0
        %1660 = vmatprep.subr.mxu0 0.0
        %1661 = vmatpush1.xpose.msra.mxu0 0.0
        %1662 = vmatprep.subr.mxu0 0.0
        %1663 = vmatpush1.xpose.msra.mxu0 0.0
        %1664 = vmatprep.subr.mxu0 0.0
        %1665 = vmatpush1.xpose.msra.mxu0 0.0
        %1666 = vmatprep.subr.mxu0 0.0
        %1667 = vmatpush1.xpose.msra.mxu0 0.0
        %1668 = vmatprep.subr.mxu0 0.0
        %1669 = vmatpush1.xpose.msra.mxu0 0.0
        %1670 = vmatprep.subr.mxu0 0.0
        %1671 = vmatpush1.xpose.msra.mxu0 0.0
        %1672 = vmatprep.subr.mxu0 0.0
        %1673 = vmatpush1.xpose.msra.mxu0 0.0
        %1674 = vmatprep.subr.mxu0 0.0
        %1675 = vmatpush1.xpose.msra.mxu0 0.0
        %1676 = vmatprep.subr.mxu0 0.0
        %1677 = vmatpush1.xpose.msra.mxu0 0.0
        %1678 = vmatprep.subr.mxu0 0.0
        %1679 = vmatpush1.xpose.msra.mxu0 0.0
        %1680 = vmatprep.subr.mxu0 0.0
        %1681 = vmatpush1.xpose.msra.mxu0 0.0
        %1682 = vmatprep.subr.mxu0 0.0
        %1683 = vmatpush1.xpose.msra.mxu0 0.0
        %1684 = vmatprep.subr.mxu0 0.0
        %1685 = vmatpush1.xpose.msra.mxu0 0.0
        %1686 = vmatprep.subr.mxu0 0.0
        %1687 = vmatpush1.xpose.msra.mxu0 0.0
        %1688 = vmatprep.subr.mxu0 0.0
        %1689 = vmatpush1.xpose.msra.mxu0 0.0
        %1690 = vmatprep.subr.mxu0 0.0
        %1691 = vmatpush1.xpose.msra.mxu0 0.0
        %1692 = vmatprep.subr.mxu0 0.0
        %1693 = vmatpush1.xpose.msra.mxu0 0.0
        %1694 = vmatprep.subr.mxu0 0.0
        %1695 = vmatpush1.xpose.msra.mxu0 0.0
        %1696 = vmatprep.subr.mxu0 0.0
        %1697 = vmatpush1.xpose.msra.mxu0 0.0
        %1698 = vmatprep.subr.mxu0 0.0
        %1699 = vmatpush1.xpose.msra.mxu0 0.0
        %1700 = vmatprep.subr.mxu0 0.0
        %1701 = vmatpush1.xpose.msra.mxu0 0.0
        %1702 = vmatprep.subr.mxu0 0.0
        %1703 = vmatpush1.xpose.msra.mxu0 0.0
        %1704 = vmatprep.subr.mxu0 0.0
        %1705 = vmatpush1.xpose.msra.mxu0 0.0
        %1706 = vmatprep.subr.mxu0 0.0
        %1707 = vmatpush1.xpose.msra.mxu0 0.0
        %1708 = vmatprep.subr.mxu0 0.0
        %1709 = vmatpush1.xpose.msra.mxu0 0.0
        %1710 = vmatprep.subr.mxu0 0.0
        %1711 = vmatpush1.xpose.msra.mxu0 0.0
        %1712 = vmatprep.subr.mxu0 0.0
        %1713 = vmatpush1.xpose.msra.mxu0 0.0
        %1714 = vmatprep.subr.mxu0 0.0
        %1715 = vmatpush1.xpose.msra.mxu0 0.0
        %1716 = vmatprep.subr.mxu0 0.0
        %1717 = vmatpush1.xpose.msra.mxu0 0.0
        %1718 = vmatprep.mubr.f32.mxu0 0.0
        %1719 = vmatmul.mubr.f32.gmra.mrb[0].mxu0 %v1649
        %v1720 = vpop.f32.mrb[0].mxu0
        %v1721 = vadd.f32 0.0, %v1720
        %v1722 = vpop.f32.mrb[0].mxu0
        %1723 = vdwg.mxu0
        %v1725 = vsel %vm1571, %v1569, 0
        %v1728 = vsel %vm1571, %v1170, 0
        %1730 = vmatprep.subr.mxu0 0.0
        %1731 = vmatpush1.xpose.msra.mxu0 %v1728
        %1732 = vmatprep.subr.mxu0 0.0
        %1733 = vmatpush1.xpose.msra.mxu0 0.0
        %1734 = vmatprep.subr.mxu0 0.0
        %1735 = vmatpush1.xpose.msra.mxu0 0.0
        %1736 = vmatprep.subr.mxu0 0.0
        %1737 = vmatpush1.xpose.msra.mxu0 0.0
        %1738 = vmatprep.subr.mxu0 0.0
        %1739 = vmatpush1.xpose.msra.mxu0 0.0
        %1740 = vmatprep.subr.mxu0 0.0
        %1741 = vmatpush1.xpose.msra.mxu0 0.0
        %1742 = vmatprep.subr.mxu0 0.0
        %1743 = vmatpush1.xpose.msra.mxu0 0.0
        %1744 = vmatprep.subr.mxu0 0.0
        %1745 = vmatpush1.xpose.msra.mxu0 0.0
        %1746 = vmatprep.subr.mxu0 0.0
        %1747 = vmatpush1.xpose.msra.mxu0 0.0
        %1748 = vmatprep.subr.mxu0 0.0
        %1749 = vmatpush1.xpose.msra.mxu0 0.0
        %1750 = vmatprep.subr.mxu0 0.0
        %1751 = vmatpush1.xpose.msra.mxu0 0.0
        %1752 = vmatprep.subr.mxu0 0.0
        %1753 = vmatpush1.xpose.msra.mxu0 0.0
        %1754 = vmatprep.subr.mxu0 0.0
        %1755 = vmatpush1.xpose.msra.mxu0 0.0
        %1756 = vmatprep.subr.mxu0 0.0
        %1757 = vmatpush1.xpose.msra.mxu0 0.0
        %1758 = vmatprep.subr.mxu0 0.0
        %1759 = vmatpush1.xpose.msra.mxu0 0.0
        %1760 = vmatprep.subr.mxu0 0.0
        %1761 = vmatpush1.xpose.msra.mxu0 0.0
        %1762 = vmatprep.subr.mxu0 0.0
        %1763 = vmatpush1.xpose.msra.mxu0 0.0
        %1764 = vmatprep.subr.mxu0 0.0
        %1765 = vmatpush1.xpose.msra.mxu0 0.0
        %1766 = vmatprep.subr.mxu0 0.0
        %1767 = vmatpush1.xpose.msra.mxu0 0.0
        %1768 = vmatprep.subr.mxu0 0.0
        %1769 = vmatpush1.xpose.msra.mxu0 0.0
        %1770 = vmatprep.subr.mxu0 0.0
        %1771 = vmatpush1.xpose.msra.mxu0 0.0
        %1772 = vmatprep.subr.mxu0 0.0
        %1773 = vmatpush1.xpose.msra.mxu0 0.0
        %1774 = vmatprep.subr.mxu0 0.0
        %1775 = vmatpush1.xpose.msra.mxu0 0.0
        %1776 = vmatprep.subr.mxu0 0.0
        %1777 = vmatpush1.xpose.msra.mxu0 0.0
        %1778 = vmatprep.subr.mxu0 0.0
        %1779 = vmatpush1.xpose.msra.mxu0 0.0
        %1780 = vmatprep.subr.mxu0 0.0
        %1781 = vmatpush1.xpose.msra.mxu0 0.0
        %1782 = vmatprep.subr.mxu0 0.0
        %1783 = vmatpush1.xpose.msra.mxu0 0.0
        %1784 = vmatprep.subr.mxu0 0.0
        %1785 = vmatpush1.xpose.msra.mxu0 0.0
        %1786 = vmatprep.subr.mxu0 0.0
        %1787 = vmatpush1.xpose.msra.mxu0 0.0
        %1788 = vmatprep.subr.mxu0 0.0
        %1789 = vmatpush1.xpose.msra.mxu0 0.0
        %1790 = vmatprep.subr.mxu0 0.0
        %1791 = vmatpush1.xpose.msra.mxu0 0.0
        %1792 = vmatprep.subr.mxu0 0.0
        %1793 = vmatpush1.xpose.msra.mxu0 0.0
        %1794 = vmatprep.mubr.f32.mxu0 0.0
        %1795 = vmatmul.mubr.f32.gmra.mrb[0].mxu0 %v1725
        %v1796 = vpop.f32.mrb[0].mxu0
        %v1797 = vadd.f32 0.0, %v1796
        %v1798 = vpop.f32.mrb[0].mxu0
        %1799 = vdwg.mxu0
        %v1801 = vsel %vm1571, %v1570, 0
        %v1804 = vsel %vm1571, %v1240, 0
        %1806 = vmatprep.subr.mxu0 0.0
        %1807 = vmatpush1.xpose.msra.mxu0 %v1804
        %1808 = vmatprep.subr.mxu0 0.0
        %1809 = vmatpush1.xpose.msra.mxu0 0.0
        %1810 = vmatprep.subr.mxu0 0.0
        %1811 = vmatpush1.xpose.msra.mxu0 0.0
        %1812 = vmatprep.subr.mxu0 0.0
        %1813 = vmatpush1.xpose.msra.mxu0 0.0
        %1814 = vmatprep.subr.mxu0 0.0
        %1815 = vmatpush1.xpose.msra.mxu0 0.0
        %1816 = vmatprep.subr.mxu0 0.0
        %1817 = vmatpush1.xpose.msra.mxu0 0.0
        %1818 = vmatprep.subr.mxu0 0.0
        %1819 = vmatpush1.xpose.msra.mxu0 0.0
        %1820 = vmatprep.subr.mxu0 0.0
        %1821 = vmatpush1.xpose.msra.mxu0 0.0
        %1822 = vmatprep.subr.mxu0 0.0
        %1823 = vmatpush1.xpose.msra.mxu0 0.0
        %1824 = vmatprep.subr.mxu0 0.0
        %1825 = vmatpush1.xpose.msra.mxu0 0.0
        %1826 = vmatprep.subr.mxu0 0.0
        %1827 = vmatpush1.xpose.msra.mxu0 0.0
        %1828 = vmatprep.subr.mxu0 0.0
        %1829 = vmatpush1.xpose.msra.mxu0 0.0
        %1830 = vmatprep.subr.mxu0 0.0
        %1831 = vmatpush1.xpose.msra.mxu0 0.0
        %1832 = vmatprep.subr.mxu0 0.0
        %1833 = vmatpush1.xpose.msra.mxu0 0.0
        %1834 = vmatprep.subr.mxu0 0.0
        %1835 = vmatpush1.xpose.msra.mxu0 0.0
        %1836 = vmatprep.subr.mxu0 0.0
        %1837 = vmatpush1.xpose.msra.mxu0 0.0
        %1838 = vmatprep.subr.mxu0 0.0
        %1839 = vmatpush1.xpose.msra.mxu0 0.0
        %1840 = vmatprep.subr.mxu0 0.0
        %1841 = vmatpush1.xpose.msra.mxu0 0.0
        %1842 = vmatprep.subr.mxu0 0.0
        %1843 = vmatpush1.xpose.msra.mxu0 0.0
        %1844 = vmatprep.subr.mxu0 0.0
        %1845 = vmatpush1.xpose.msra.mxu0 0.0
        %1846 = vmatprep.subr.mxu0 0.0
        %1847 = vmatpush1.xpose.msra.mxu0 0.0
        %1848 = vmatprep.subr.mxu0 0.0
        %1849 = vmatpush1.xpose.msra.mxu0 0.0
        %1850 = vmatprep.subr.mxu0 0.0
        %1851 = vmatpush1.xpose.msra.mxu0 0.0
        %1852 = vmatprep.subr.mxu0 0.0
        %1853 = vmatpush1.xpose.msra.mxu0 0.0
        %1854 = vmatprep.subr.mxu0 0.0
        %1855 = vmatpush1.xpose.msra.mxu0 0.0
        %1856 = vmatprep.subr.mxu0 0.0
        %1857 = vmatpush1.xpose.msra.mxu0 0.0
        %1858 = vmatprep.subr.mxu0 0.0
        %1859 = vmatpush1.xpose.msra.mxu0 0.0
        %1860 = vmatprep.subr.mxu0 0.0
        %1861 = vmatpush1.xpose.msra.mxu0 0.0
        %1862 = vmatprep.subr.mxu0 0.0
        %1863 = vmatpush1.xpose.msra.mxu0 0.0
        %1864 = vmatprep.subr.mxu0 0.0
        %1865 = vmatpush1.xpose.msra.mxu0 0.0
        %1866 = vmatprep.subr.mxu0 0.0
        %1867 = vmatpush1.xpose.msra.mxu0 0.0
        %1868 = vmatprep.subr.mxu0 0.0
        %1869 = vmatpush1.xpose.msra.mxu0 0.0
        %1870 = vmatprep.mubr.f32.mxu0 0.0
        %1871 = vmatmul.mubr.f32.gmra.mrb[0].mxu0 %v1801
        %v1872 = vpop.f32.mrb[0].mxu0
        %v1873 = vadd.f32 0.0, %v1872
        %v1874 = vpop.f32.mrb[0].mxu0
        %1875 = vdwg.mxu0
        %v1876 = vsel %vm1571, %v1645, -inf
        %1877 = vmax.xlane.f32.xlu0 %v1876
        %v1878 = vpop.xlane.xlu0 %1877
        %v1879 = vsel %vm1571, %v1721, -inf
        %1880 = vmax.xlane.f32.xlu0 %v1879
        %v1881 = vpop.xlane.xlu0 %1880
        %v1882 = vsel %vm1571, %v1797, -inf
        %1883 = vmax.xlane.f32.xlu0 %v1882
        %v1884 = vpop.xlane.xlu0 %1883
        %v1885 = vsel %vm1571, %v1873, -inf
        %1886 = vmax.xlane.f32.xlu0 %v1885
        %v1887 = vpop.xlane.xlu0 %1886
        %v1888 = vsub.f32 %v1645, %v1878
        %v1889 = vsub.f32 %v1721, %v1881
        %v1890 = vsub.f32 %v1797, %v1884
        %v1891 = vsub.f32 %v1873, %v1887
        %v1892 = vmul.f32 %v1888, 1.442695
        %v1893 = vpow.pop %v1892
        %v1894 = vmul.f32 %v1889, 1.442695
        %v1895 = vpow.pop %v1894
        %v1896 = vmul.f32 %v1890, 1.442695
        %v1897 = vpow.pop %v1896
        %v1898 = vmul.f32 %v1891, 1.442695
        %v1899 = vpow.pop %v1898
        %v1900 = vsel %vm1571, %v1893, 0.0
        %1901 = vadd.xlane.f32.xlu0 %v1900
        %v1902 = vpop.xlane.xlu0 %1901
        %v1903 = vsel %vm1571, %v1895, 0.0
        %1904 = vadd.xlane.f32.xlu0 %v1903
        %v1905 = vpop.xlane.xlu0 %1904
        %v1906 = vsel %vm1571, %v1897, 0.0
        %1907 = vadd.xlane.f32.xlu0 %v1906
        %v1908 = vpop.xlane.xlu0 %1907
        %v1909 = vsel %vm1571, %v1899, 0.0
        %1910 = vadd.xlane.f32.xlu0 %v1909
        %v1911 = vpop.xlane.xlu0 %1910
        %v1912 = vrcp.pop %v1902
        %v1913 = vrcp.pop %v1905
        %v1914 = vrcp.pop %v1908
        %v1915 = vrcp.pop %v1911
        %v1916 = vmul.f32 %v1893, %v1912
        %v1917 = vmul.f32 %v1895, %v1913
        %v1918 = vmul.f32 %v1897, %v1914
        %v1919 = vmul.f32 %v1899, %v1915
        %v1921 = vsel %vm1571, %v1916, 0
        %1923 = vmatprep.subr.mxu0 0.0
        %1924 = vmatpush1.msra.mxu0 %v1354
        %1925 = vmatprep.subr.mxu0 0.0
        %1926 = vmatpush1.msra.mxu0 0.0
        %1927 = vmatprep.subr.mxu0 0.0
        %1928 = vmatpush1.msra.mxu0 0.0
        %1929 = vmatprep.subr.mxu0 0.0
        %1930 = vmatpush1.msra.mxu0 0.0
        %1931 = vmatprep.subr.mxu0 0.0
        %1932 = vmatpush1.msra.mxu0 0.0
        %1933 = vmatprep.subr.mxu0 0.0
        %1934 = vmatpush1.msra.mxu0 0.0
        %1935 = vmatprep.subr.mxu0 0.0
        %1936 = vmatpush1.msra.mxu0 0.0
        %1937 = vmatprep.subr.mxu0 0.0
        %1938 = vmatpush1.msra.mxu0 0.0
        %1939 = vmatprep.subr.mxu0 0.0
        %1940 = vmatpush1.msra.mxu0 0.0
        %1941 = vmatprep.subr.mxu0 0.0
        %1942 = vmatpush1.msra.mxu0 0.0
        %1943 = vmatprep.subr.mxu0 0.0
        %1944 = vmatpush1.msra.mxu0 0.0
        %1945 = vmatprep.subr.mxu0 0.0
        %1946 = vmatpush1.msra.mxu0 0.0
        %1947 = vmatprep.subr.mxu0 0.0
        %1948 = vmatpush1.msra.mxu0 0.0
        %1949 = vmatprep.subr.mxu0 0.0
        %1950 = vmatpush1.msra.mxu0 0.0
        %1951 = vmatprep.subr.mxu0 0.0
        %1952 = vmatpush1.msra.mxu0 0.0
        %1953 = vmatprep.subr.mxu0 0.0
        %1954 = vmatpush1.msra.mxu0 0.0
        %1955 = vmatprep.subr.mxu0 0.0
        %1956 = vmatpush1.msra.mxu0 0.0
        %1957 = vmatprep.subr.mxu0 0.0
        %1958 = vmatpush1.msra.mxu0 0.0
        %1959 = vmatprep.subr.mxu0 0.0
        %1960 = vmatpush1.msra.mxu0 0.0
        %1961 = vmatprep.subr.mxu0 0.0
        %1962 = vmatpush1.msra.mxu0 0.0
        %1963 = vmatprep.subr.mxu0 0.0
        %1964 = vmatpush1.msra.mxu0 0.0
        %1965 = vmatprep.subr.mxu0 0.0
        %1966 = vmatpush1.msra.mxu0 0.0
        %1967 = vmatprep.subr.mxu0 0.0
        %1968 = vmatpush1.msra.mxu0 0.0
        %1969 = vmatprep.subr.mxu0 0.0
        %1970 = vmatpush1.msra.mxu0 0.0
        %1971 = vmatprep.subr.mxu0 0.0
        %1972 = vmatpush1.msra.mxu0 0.0
        %1973 = vmatprep.subr.mxu0 0.0
        %1974 = vmatpush1.msra.mxu0 0.0
        %1975 = vmatprep.subr.mxu0 0.0
        %1976 = vmatpush1.msra.mxu0 0.0
        %1977 = vmatprep.subr.mxu0 0.0
        %1978 = vmatpush1.msra.mxu0 0.0
        %1979 = vmatprep.subr.mxu0 0.0
        %1980 = vmatpush1.msra.mxu0 0.0
        %1981 = vmatprep.subr.mxu0 0.0
        %1982 = vmatpush1.msra.mxu0 0.0
        %1983 = vmatprep.subr.mxu0 0.0
        %1984 = vmatpush1.msra.mxu0 0.0
        %1985 = vmatprep.subr.mxu0 0.0
        %1986 = vmatpush1.msra.mxu0 0.0
        %1987 = vmatprep.mubr.f32.mxu0 0.0
        %1988 = vmatmul.mubr.f32.gmra.mrb[0].mxu0 %v1921
        %v1989 = vpop.f32.mrb[0].mxu0
        %v1990 = vadd.f32 0.0, %v1989
        %v1991 = vpop.f32.mrb[0].mxu0
        %1992 = vdwg.mxu0
        %v1994 = vsel %vm1571, %v1917, 0
        %1996 = vmatprep.subr.mxu0 0.0
        %1997 = vmatpush1.msra.mxu0 %v1424
        %1998 = vmatprep.subr.mxu0 0.0
        %1999 = vmatpush1.msra.mxu0 0.0
        %2000 = vmatprep.subr.mxu0 0.0
        %2001 = vmatpush1.msra.mxu0 0.0
        %2002 = vmatprep.subr.mxu0 0.0
        %2003 = vmatpush1.msra.mxu0 0.0
        %2004 = vmatprep.subr.mxu0 0.0
        %2005 = vmatpush1.msra.mxu0 0.0
        %2006 = vmatprep.subr.mxu0 0.0
        %2007 = vmatpush1.msra.mxu0 0.0
        %2008 = vmatprep.subr.mxu0 0.0
        %2009 = vmatpush1.msra.mxu0 0.0
        %2010 = vmatprep.subr.mxu0 0.0
        %2011 = vmatpush1.msra.mxu0 0.0
        %2012 = vmatprep.subr.mxu0 0.0
        %2013 = vmatpush1.msra.mxu0 0.0
        %2014 = vmatprep.subr.mxu0 0.0
        %2015 = vmatpush1.msra.mxu0 0.0
        %2016 = vmatprep.subr.mxu0 0.0
        %2017 = vmatpush1.msra.mxu0 0.0
        %2018 = vmatprep.subr.mxu0 0.0
        %2019 = vmatpush1.msra.mxu0 0.0
        %2020 = vmatprep.subr.mxu0 0.0
        %2021 = vmatpush1.msra.mxu0 0.0
        %2022 = vmatprep.subr.mxu0 0.0
        %2023 = vmatpush1.msra.mxu0 0.0
        %2024 = vmatprep.subr.mxu0 0.0
        %2025 = vmatpush1.msra.mxu0 0.0
        %2026 = vmatprep.subr.mxu0 0.0
        %2027 = vmatpush1.msra.mxu0 0.0
        %2028 = vmatprep.subr.mxu0 0.0
        %2029 = vmatpush1.msra.mxu0 0.0
        %2030 = vmatprep.subr.mxu0 0.0
        %2031 = vmatpush1.msra.mxu0 0.0
        %2032 = vmatprep.subr.mxu0 0.0
        %2033 = vmatpush1.msra.mxu0 0.0
        %2034 = vmatprep.subr.mxu0 0.0
        %2035 = vmatpush1.msra.mxu0 0.0
        %2036 = vmatprep.subr.mxu0 0.0
        %2037 = vmatpush1.msra.mxu0 0.0
        %2038 = vmatprep.subr.mxu0 0.0
        %2039 = vmatpush1.msra.mxu0 0.0
        %2040 = vmatprep.subr.mxu0 0.0
        %2041 = vmatpush1.msra.mxu0 0.0
        %2042 = vmatprep.subr.mxu0 0.0
        %2043 = vmatpush1.msra.mxu0 0.0
        %2044 = vmatprep.subr.mxu0 0.0
        %2045 = vmatpush1.msra.mxu0 0.0
        %2046 = vmatprep.subr.mxu0 0.0
        %2047 = vmatpush1.msra.mxu0 0.0
        %2048 = vmatprep.subr.mxu0 0.0
        %2049 = vmatpush1.msra.mxu0 0.0
        %2050 = vmatprep.subr.mxu0 0.0
        %2051 = vmatpush1.msra.mxu0 0.0
        %2052 = vmatprep.subr.mxu0 0.0
        %2053 = vmatpush1.msra.mxu0 0.0
        %2054 = vmatprep.subr.mxu0 0.0
        %2055 = vmatpush1.msra.mxu0 0.0
        %2056 = vmatprep.subr.mxu0 0.0
        %2057 = vmatpush1.msra.mxu0 0.0
        %2058 = vmatprep.subr.mxu0 0.0
        %2059 = vmatpush1.msra.mxu0 0.0
        %2060 = vmatprep.mubr.f32.mxu0 0.0
        %2061 = vmatmul.mubr.f32.gmra.mrb[0].mxu0 %v1994
        %v2062 = vpop.f32.mrb[0].mxu0
        %v2063 = vadd.f32 0.0, %v2062
        %v2064 = vpop.f32.mrb[0].mxu0
        %2065 = vdwg.mxu0
        %v2067 = vsel %vm1571, %v1918, 0
        %2069 = vmatprep.subr.mxu0 0.0
        %2070 = vmatpush1.msra.mxu0 %v1494
        %2071 = vmatprep.subr.mxu0 0.0
        %2072 = vmatpush1.msra.mxu0 0.0
        %2073 = vmatprep.subr.mxu0 0.0
        %2074 = vmatpush1.msra.mxu0 0.0
        %2075 = vmatprep.subr.mxu0 0.0
        %2076 = vmatpush1.msra.mxu0 0.0
        %2077 = vmatprep.subr.mxu0 0.0
        %2078 = vmatpush1.msra.mxu0 0.0
        %2079 = vmatprep.subr.mxu0 0.0
        %2080 = vmatpush1.msra.mxu0 0.0
        %2081 = vmatprep.subr.mxu0 0.0
        %2082 = vmatpush1.msra.mxu0 0.0
        %2083 = vmatprep.subr.mxu0 0.0
        %2084 = vmatpush1.msra.mxu0 0.0
        %2085 = vmatprep.subr.mxu0 0.0
        %2086 = vmatpush1.msra.mxu0 0.0
        %2087 = vmatprep.subr.mxu0 0.0
        %2088 = vmatpush1.msra.mxu0 0.0
        %2089 = vmatprep.subr.mxu0 0.0
        %2090 = vmatpush1.msra.mxu0 0.0
        %2091 = vmatprep.subr.mxu0 0.0
        %2092 = vmatpush1.msra.mxu0 0.0
        %2093 = vmatprep.subr.mxu0 0.0
        %2094 = vmatpush1.msra.mxu0 0.0
        %2095 = vmatprep.subr.mxu0 0.0
        %2096 = vmatpush1.msra.mxu0 0.0
        %2097 = vmatprep.subr.mxu0 0.0
        %2098 = vmatpush1.msra.mxu0 0.0
        %2099 = vmatprep.subr.mxu0 0.0
        %2100 = vmatpush1.msra.mxu0 0.0
        %2101 = vmatprep.subr.mxu0 0.0
        %2102 = vmatpush1.msra.mxu0 0.0
        %2103 = vmatprep.subr.mxu0 0.0
        %2104 = vmatpush1.msra.mxu0 0.0
        %2105 = vmatprep.subr.mxu0 0.0
        %2106 = vmatpush1.msra.mxu0 0.0
        %2107 = vmatprep.subr.mxu0 0.0
        %2108 = vmatpush1.msra.mxu0 0.0
        %2109 = vmatprep.subr.mxu0 0.0
        %2110 = vmatpush1.msra.mxu0 0.0
        %2111 = vmatprep.subr.mxu0 0.0
        %2112 = vmatpush1.msra.mxu0 0.0
        %2113 = vmatprep.subr.mxu0 0.0
        %2114 = vmatpush1.msra.mxu0 0.0
        %2115 = vmatprep.subr.mxu0 0.0
        %2116 = vmatpush1.msra.mxu0 0.0
        %2117 = vmatprep.subr.mxu0 0.0
        %2118 = vmatpush1.msra.mxu0 0.0
        %2119 = vmatprep.subr.mxu0 0.0
        %2120 = vmatpush1.msra.mxu0 0.0
        %2121 = vmatprep.subr.mxu0 0.0
        %2122 = vmatpush1.msra.mxu0 0.0
        %2123 = vmatprep.subr.mxu0 0.0
        %2124 = vmatpush1.msra.mxu0 0.0
        %2125 = vmatprep.subr.mxu0 0.0
        %2126 = vmatpush1.msra.mxu0 0.0
        %2127 = vmatprep.subr.mxu0 0.0
        %2128 = vmatpush1.msra.mxu0 0.0
        %2129 = vmatprep.subr.mxu0 0.0
        %2130 = vmatpush1.msra.mxu0 0.0
        %2131 = vmatprep.subr.mxu0 0.0
        %2132 = vmatpush1.msra.mxu0 0.0
        %2133 = vmatprep.mubr.f32.mxu0 0.0
        %2134 = vmatmul.mubr.f32.gmra.mrb[0].mxu0 %v2067
        %v2135 = vpop.f32.mrb[0].mxu0
        %v2136 = vadd.f32 0.0, %v2135
        %v2137 = vpop.f32.mrb[0].mxu0
        %2138 = vdwg.mxu0
        %v2140 = vsel %vm1571, %v1919, 0
        %2142 = vmatprep.subr.mxu0 0.0
        %2143 = vmatpush1.msra.mxu0 %v1564
        %2144 = vmatprep.subr.mxu0 0.0
        %2145 = vmatpush1.msra.mxu0 0.0
        %2146 = vmatprep.subr.mxu0 0.0
        %2147 = vmatpush1.msra.mxu0 0.0
        %2148 = vmatprep.subr.mxu0 0.0
        %2149 = vmatpush1.msra.mxu0 0.0
        %2150 = vmatprep.subr.mxu0 0.0
        %2151 = vmatpush1.msra.mxu0 0.0
        %2152 = vmatprep.subr.mxu0 0.0
        %2153 = vmatpush1.msra.mxu0 0.0
        %2154 = vmatprep.subr.mxu0 0.0
        %2155 = vmatpush1.msra.mxu0 0.0
        %2156 = vmatprep.subr.mxu0 0.0
        %2157 = vmatpush1.msra.mxu0 0.0
        %2158 = vmatprep.subr.mxu0 0.0
        %2159 = vmatpush1.msra.mxu0 0.0
        %2160 = vmatprep.subr.mxu0 0.0
        %2161 = vmatpush1.msra.mxu0 0.0
        %2162 = vmatprep.subr.mxu0 0.0
        %2163 = vmatpush1.msra.mxu0 0.0
        %2164 = vmatprep.subr.mxu0 0.0
        %2165 = vmatpush1.msra.mxu0 0.0
        %2166 = vmatprep.subr.mxu0 0.0
        %2167 = vmatpush1.msra.mxu0 0.0
        %2168 = vmatprep.subr.mxu0 0.0
        %2169 = vmatpush1.msra.mxu0 0.0
        %2170 = vmatprep.subr.mxu0 0.0
        %2171 = vmatpush1.msra.mxu0 0.0
        %2172 = vmatprep.subr.mxu0 0.0
        %2173 = vmatpush1.msra.mxu0 0.0
        %2174 = vmatprep.subr.mxu0 0.0
        %2175 = vmatpush1.msra.mxu0 0.0
        %2176 = vmatprep.subr.mxu0 0.0
        %2177 = vmatpush1.msra.mxu0 0.0
        %2178 = vmatprep.subr.mxu0 0.0
        %2179 = vmatpush1.msra.mxu0 0.0
        %2180 = vmatprep.subr.mxu0 0.0
        %2181 = vmatpush1.msra.mxu0 0.0
        %2182 = vmatprep.subr.mxu0 0.0
        %2183 = vmatpush1.msra.mxu0 0.0
        %2184 = vmatprep.subr.mxu0 0.0
        %2185 = vmatpush1.msra.mxu0 0.0
        %2186 = vmatprep.subr.mxu0 0.0
        %2187 = vmatpush1.msra.mxu0 0.0
        %2188 = vmatprep.subr.mxu0 0.0
        %2189 = vmatpush1.msra.mxu0 0.0
        %2190 = vmatprep.subr.mxu0 0.0
        %2191 = vmatpush1.msra.mxu0 0.0
        %2192 = vmatprep.subr.mxu0 0.0
        %2193 = vmatpush1.msra.mxu0 0.0
        %2194 = vmatprep.subr.mxu0 0.0
        %2195 = vmatpush1.msra.mxu0 0.0
        %2196 = vmatprep.subr.mxu0 0.0
        %2197 = vmatpush1.msra.mxu0 0.0
        %2198 = vmatprep.subr.mxu0 0.0
        %2199 = vmatpush1.msra.mxu0 0.0
        %2200 = vmatprep.subr.mxu0 0.0
        %2201 = vmatpush1.msra.mxu0 0.0
        %2202 = vmatprep.subr.mxu0 0.0
        %2203 = vmatpush1.msra.mxu0 0.0
        %2204 = vmatprep.subr.mxu0 0.0
        %2205 = vmatpush1.msra.mxu0 0.0
        %2206 = vmatprep.mubr.f32.mxu0 0.0
        %2207 = vmatmul.mubr.f32.gmra.mrb[0].mxu0 %v2140
        %v2208 = vpop.f32.mrb[0].mxu0
        %v2209 = vadd.f32 0.0, %v2208
        %v2210 = vpop.f32.mrb[0].mxu0
        %2211 = vdwg.mxu0
        %v2212 = vld [vmem:[%s8] sm:$0xff]
        %v2213 = vld [vmem:[%s8 + $0x8] sm:$0xff]
        %v2214 = vld [vmem:[%s8 + $0x10] sm:$0xff]
        %v2215 = vld [vmem:[%s8 + $0x18] sm:$0xff]
        %v2217 = vsel %vm1571, %v1990, 0
        %2219 = vmatprep.subr.mxu0 0.0
        %2220 = vmatpush1.msra.mxu0 %v2212
        %2221 = vmatprep.subr.mxu0 0.0
        %2222 = vmatpush1.msra.mxu0 0.0
        %2223 = vmatprep.subr.mxu0 0.0
        %2224 = vmatpush1.msra.mxu0 0.0
        %2225 = vmatprep.subr.mxu0 0.0
        %2226 = vmatpush1.msra.mxu0 0.0
        %2227 = vmatprep.subr.mxu0 0.0
        %2228 = vmatpush1.msra.mxu0 0.0
        %2229 = vmatprep.subr.mxu0 0.0
        %2230 = vmatpush1.msra.mxu0 0.0
        %2231 = vmatprep.subr.mxu0 0.0
        %2232 = vmatpush1.msra.mxu0 0.0
        %2233 = vmatprep.subr.mxu0 0.0
        %2234 = vmatpush1.msra.mxu0 0.0
        %2235 = vmatprep.subr.mxu0 0.0
        %2236 = vmatpush1.msra.mxu0 0.0
        %2237 = vmatprep.subr.mxu0 0.0
        %2238 = vmatpush1.msra.mxu0 0.0
        %2239 = vmatprep.subr.mxu0 0.0
        %2240 = vmatpush1.msra.mxu0 0.0
        %2241 = vmatprep.subr.mxu0 0.0
        %2242 = vmatpush1.msra.mxu0 0.0
        %2243 = vmatprep.subr.mxu0 0.0
        %2244 = vmatpush1.msra.mxu0 0.0
        %2245 = vmatprep.subr.mxu0 0.0
        %2246 = vmatpush1.msra.mxu0 0.0
        %2247 = vmatprep.subr.mxu0 0.0
        %2248 = vmatpush1.msra.mxu0 0.0
        %2249 = vmatprep.subr.mxu0 0.0
        %2250 = vmatpush1.msra.mxu0 0.0
        %2251 = vmatprep.subr.mxu0 0.0
        %2252 = vmatpush1.msra.mxu0 0.0
        %2253 = vmatprep.subr.mxu0 0.0
        %2254 = vmatpush1.msra.mxu0 0.0
        %2255 = vmatprep.subr.mxu0 0.0
        %2256 = vmatpush1.msra.mxu0 0.0
        %2257 = vmatprep.subr.mxu0 0.0
        %2258 = vmatpush1.msra.mxu0 0.0
        %2259 = vmatprep.subr.mxu0 0.0
        %2260 = vmatpush1.msra.mxu0 0.0
        %2261 = vmatprep.subr.mxu0 0.0
        %2262 = vmatpush1.msra.mxu0 0.0
        %2263 = vmatprep.subr.mxu0 0.0
        %2264 = vmatpush1.msra.mxu0 0.0
        %2265 = vmatprep.subr.mxu0 0.0
        %2266 = vmatpush1.msra.mxu0 0.0
        %2267 = vmatprep.subr.mxu0 0.0
        %2268 = vmatpush1.msra.mxu0 0.0
        %2269 = vmatprep.subr.mxu0 0.0
        %2270 = vmatpush1.msra.mxu0 0.0
        %2271 = vmatprep.subr.mxu0 0.0
        %2272 = vmatpush1.msra.mxu0 0.0
        %2273 = vmatprep.subr.mxu0 0.0
        %2274 = vmatpush1.msra.mxu0 0.0
        %2275 = vmatprep.subr.mxu0 0.0
        %2276 = vmatpush1.msra.mxu0 0.0
        %2277 = vmatprep.subr.mxu0 0.0
        %2278 = vmatpush1.msra.mxu0 0.0
        %2279 = vmatprep.subr.mxu0 0.0
        %2280 = vmatpush1.msra.mxu0 0.0
        %2281 = vmatprep.subr.mxu0 0.0
        %2282 = vmatpush1.msra.mxu0 0.0
        %2283 = vmatprep.mubr.f32.mxu0 0.0
        %2284 = vmatmul.mubr.f32.gmra.mrb[0].mxu0 %v2217
        %v2285 = vpop.f32.mrb[0].mxu0
        %v2286 = vadd.f32 0.0, %v2285
        %v2287 = vpop.f32.mrb[0].mxu0
        %2288 = vdwg.mxu0
        %v2290 = vsel %vm1571, %v2063, 0
        %2292 = vmatprep.subr.mxu0 0.0
        %2293 = vmatpush1.msra.mxu0 %v2213
        %2294 = vmatprep.subr.mxu0 0.0
        %2295 = vmatpush1.msra.mxu0 0.0
        %2296 = vmatprep.subr.mxu0 0.0
        %2297 = vmatpush1.msra.mxu0 0.0
        %2298 = vmatprep.subr.mxu0 0.0
        %2299 = vmatpush1.msra.mxu0 0.0
        %2300 = vmatprep.subr.mxu0 0.0
        %2301 = vmatpush1.msra.mxu0 0.0
        %2302 = vmatprep.subr.mxu0 0.0
        %2303 = vmatpush1.msra.mxu0 0.0
        %2304 = vmatprep.subr.mxu0 0.0
        %2305 = vmatpush1.msra.mxu0 0.0
        %2306 = vmatprep.subr.mxu0 0.0
        %2307 = vmatpush1.msra.mxu0 0.0
        %2308 = vmatprep.subr.mxu0 0.0
        %2309 = vmatpush1.msra.mxu0 0.0
        %2310 = vmatprep.subr.mxu0 0.0
        %2311 = vmatpush1.msra.mxu0 0.0
        %2312 = vmatprep.subr.mxu0 0.0
        %2313 = vmatpush1.msra.mxu0 0.0
        %2314 = vmatprep.subr.mxu0 0.0
        %2315 = vmatpush1.msra.mxu0 0.0
        %2316 = vmatprep.subr.mxu0 0.0
        %2317 = vmatpush1.msra.mxu0 0.0
        %2318 = vmatprep.subr.mxu0 0.0
        %2319 = vmatpush1.msra.mxu0 0.0
        %2320 = vmatprep.subr.mxu0 0.0
        %2321 = vmatpush1.msra.mxu0 0.0
        %2322 = vmatprep.subr.mxu0 0.0
        %2323 = vmatpush1.msra.mxu0 0.0
        %2324 = vmatprep.subr.mxu0 0.0
        %2325 = vmatpush1.msra.mxu0 0.0
        %2326 = vmatprep.subr.mxu0 0.0
        %2327 = vmatpush1.msra.mxu0 0.0
        %2328 = vmatprep.subr.mxu0 0.0
        %2329 = vmatpush1.msra.mxu0 0.0
        %2330 = vmatprep.subr.mxu0 0.0
        %2331 = vmatpush1.msra.mxu0 0.0
        %2332 = vmatprep.subr.mxu0 0.0
        %2333 = vmatpush1.msra.mxu0 0.0
        %2334 = vmatprep.subr.mxu0 0.0
        %2335 = vmatpush1.msra.mxu0 0.0
        %2336 = vmatprep.subr.mxu0 0.0
        %2337 = vmatpush1.msra.mxu0 0.0
        %2338 = vmatprep.subr.mxu0 0.0
        %2339 = vmatpush1.msra.mxu0 0.0
        %2340 = vmatprep.subr.mxu0 0.0
        %2341 = vmatpush1.msra.mxu0 0.0
        %2342 = vmatprep.subr.mxu0 0.0
        %2343 = vmatpush1.msra.mxu0 0.0
        %2344 = vmatprep.subr.mxu0 0.0
        %2345 = vmatpush1.msra.mxu0 0.0
        %2346 = vmatprep.subr.mxu0 0.0
        %2347 = vmatpush1.msra.mxu0 0.0
        %2348 = vmatprep.subr.mxu0 0.0
        %2349 = vmatpush1.msra.mxu0 0.0
        %2350 = vmatprep.subr.mxu0 0.0
        %2351 = vmatpush1.msra.mxu0 0.0
        %2352 = vmatprep.subr.mxu0 0.0
        %2353 = vmatpush1.msra.mxu0 0.0
        %2354 = vmatprep.subr.mxu0 0.0
        %2355 = vmatpush1.msra.mxu0 0.0
        %2356 = vmatprep.mubr.f32.mxu0 0.0
        %2357 = vmatmul.mubr.f32.gmra.mrb[0].mxu0 %v2290
        %v2358 = vpop.f32.mrb[0].mxu0
        %v2359 = vadd.f32 0.0, %v2358
        %v2360 = vpop.f32.mrb[0].mxu0
        %2361 = vdwg.mxu0
        %v2363 = vsel %vm1571, %v2136, 0
        %2365 = vmatprep.subr.mxu0 0.0
        %2366 = vmatpush1.msra.mxu0 %v2214
        %2367 = vmatprep.subr.mxu0 0.0
        %2368 = vmatpush1.msra.mxu0 0.0
        %2369 = vmatprep.subr.mxu0 0.0
        %2370 = vmatpush1.msra.mxu0 0.0
        %2371 = vmatprep.subr.mxu0 0.0
        %2372 = vmatpush1.msra.mxu0 0.0
        %2373 = vmatprep.subr.mxu0 0.0
        %2374 = vmatpush1.msra.mxu0 0.0
        %2375 = vmatprep.subr.mxu0 0.0
        %2376 = vmatpush1.msra.mxu0 0.0
        %2377 = vmatprep.subr.mxu0 0.0
        %2378 = vmatpush1.msra.mxu0 0.0
        %2379 = vmatprep.subr.mxu0 0.0
        %2380 = vmatpush1.msra.mxu0 0.0
        %2381 = vmatprep.subr.mxu0 0.0
        %2382 = vmatpush1.msra.mxu0 0.0
        %2383 = vmatprep.subr.mxu0 0.0
        %2384 = vmatpush1.msra.mxu0 0.0
        %2385 = vmatprep.subr.mxu0 0.0
        %2386 = vmatpush1.msra.mxu0 0.0
        %2387 = vmatprep.subr.mxu0 0.0
        %2388 = vmatpush1.msra.mxu0 0.0
        %2389 = vmatprep.subr.mxu0 0.0
        %2390 = vmatpush1.msra.mxu0 0.0
        %2391 = vmatprep.subr.mxu0 0.0
        %2392 = vmatpush1.msra.mxu0 0.0
        %2393 = vmatprep.subr.mxu0 0.0
        %2394 = vmatpush1.msra.mxu0 0.0
        %2395 = vmatprep.subr.mxu0 0.0
        %2396 = vmatpush1.msra.mxu0 0.0
        %2397 = vmatprep.subr.mxu0 0.0
        %2398 = vmatpush1.msra.mxu0 0.0
        %2399 = vmatprep.subr.mxu0 0.0
        %2400 = vmatpush1.msra.mxu0 0.0
        %2401 = vmatprep.subr.mxu0 0.0
        %2402 = vmatpush1.msra.mxu0 0.0
        %2403 = vmatprep.subr.mxu0 0.0
        %2404 = vmatpush1.msra.mxu0 0.0
        %2405 = vmatprep.subr.mxu0 0.0
        %2406 = vmatpush1.msra.mxu0 0.0
        %2407 = vmatprep.subr.mxu0 0.0
        %2408 = vmatpush1.msra.mxu0 0.0
        %2409 = vmatprep.subr.mxu0 0.0
        %2410 = vmatpush1.msra.mxu0 0.0
        %2411 = vmatprep.subr.mxu0 0.0
        %2412 = vmatpush1.msra.mxu0 0.0
        %2413 = vmatprep.subr.mxu0 0.0
        %2414 = vmatpush1.msra.mxu0 0.0
        %2415 = vmatprep.subr.mxu0 0.0
        %2416 = vmatpush1.msra.mxu0 0.0
        %2417 = vmatprep.subr.mxu0 0.0
        %2418 = vmatpush1.msra.mxu0 0.0
        %2419 = vmatprep.subr.mxu0 0.0
        %2420 = vmatpush1.msra.mxu0 0.0
        %2421 = vmatprep.subr.mxu0 0.0
        %2422 = vmatpush1.msra.mxu0 0.0
        %2423 = vmatprep.subr.mxu0 0.0
        %2424 = vmatpush1.msra.mxu0 0.0
        %2425 = vmatprep.subr.mxu0 0.0
        %2426 = vmatpush1.msra.mxu0 0.0
        %2427 = vmatprep.subr.mxu0 0.0
        %2428 = vmatpush1.msra.mxu0 0.0
        %2429 = vmatprep.mubr.f32.mxu0 0.0
        %2430 = vmatmul.mubr.f32.gmra.mrb[0].mxu0 %v2363
        %v2431 = vpop.f32.mrb[0].mxu0
        %v2432 = vadd.f32 0.0, %v2431
        %v2433 = vpop.f32.mrb[0].mxu0
        %2434 = vdwg.mxu0
        %v2436 = vsel %vm1571, %v2209, 0
        %2438 = vmatprep.subr.mxu0 0.0
        %2439 = vmatpush1.msra.mxu0 %v2215
        %2440 = vmatprep.subr.mxu0 0.0
        %2441 = vmatpush1.msra.mxu0 0.0
        %2442 = vmatprep.subr.mxu0 0.0
        %2443 = vmatpush1.msra.mxu0 0.0
        %2444 = vmatprep.subr.mxu0 0.0
        %2445 = vmatpush1.msra.mxu0 0.0
        %2446 = vmatprep.subr.mxu0 0.0
        %2447 = vmatpush1.msra.mxu0 0.0
        %2448 = vmatprep.subr.mxu0 0.0
        %2449 = vmatpush1.msra.mxu0 0.0
        %2450 = vmatprep.subr.mxu0 0.0
        %2451 = vmatpush1.msra.mxu0 0.0
        %2452 = vmatprep.subr.mxu0 0.0
        %2453 = vmatpush1.msra.mxu0 0.0
        %2454 = vmatprep.subr.mxu0 0.0
        %2455 = vmatpush1.msra.mxu0 0.0
        %2456 = vmatprep.subr.mxu0 0.0
        %2457 = vmatpush1.msra.mxu0 0.0
        %2458 = vmatprep.subr.mxu0 0.0
        %2459 = vmatpush1.msra.mxu0 0.0
        %2460 = vmatprep.subr.mxu0 0.0
        %2461 = vmatpush1.msra.mxu0 0.0
        %2462 = vmatprep.subr.mxu0 0.0
        %2463 = vmatpush1.msra.mxu0 0.0
        %2464 = vmatprep.subr.mxu0 0.0
        %2465 = vmatpush1.msra.mxu0 0.0
        %2466 = vmatprep.subr.mxu0 0.0
        %2467 = vmatpush1.msra.mxu0 0.0
        %2468 = vmatprep.subr.mxu0 0.0
        %2469 = vmatpush1.msra.mxu0 0.0
        %2470 = vmatprep.subr.mxu0 0.0
        %2471 = vmatpush1.msra.mxu0 0.0
        %2472 = vmatprep.subr.mxu0 0.0
        %2473 = vmatpush1.msra.mxu0 0.0
        %2474 = vmatprep.subr.mxu0 0.0
        %2475 = vmatpush1.msra.mxu0 0.0
        %2476 = vmatprep.subr.mxu0 0.0
        %2477 = vmatpush1.msra.mxu0 0.0
        %2478 = vmatprep.subr.mxu0 0.0
        %2479 = vmatpush1.msra.mxu0 0.0
        %2480 = vmatprep.subr.mxu0 0.0
        %2481 = vmatpush1.msra.mxu0 0.0
        %2482 = vmatprep.subr.mxu0 0.0
        %2483 = vmatpush1.msra.mxu0 0.0
        %2484 = vmatprep.subr.mxu0 0.0
        %2485 = vmatpush1.msra.mxu0 0.0
        %2486 = vmatprep.subr.mxu0 0.0
        %2487 = vmatpush1.msra.mxu0 0.0
        %2488 = vmatprep.subr.mxu0 0.0
        %2489 = vmatpush1.msra.mxu0 0.0
        %2490 = vmatprep.subr.mxu0 0.0
        %2491 = vmatpush1.msra.mxu0 0.0
        %2492 = vmatprep.subr.mxu0 0.0
        %2493 = vmatpush1.msra.mxu0 0.0
        %2494 = vmatprep.subr.mxu0 0.0
        %2495 = vmatpush1.msra.mxu0 0.0
        %2496 = vmatprep.subr.mxu0 0.0
        %2497 = vmatpush1.msra.mxu0 0.0
        %2498 = vmatprep.subr.mxu0 0.0
        %2499 = vmatpush1.msra.mxu0 0.0
        %2500 = vmatprep.subr.mxu0 0.0
        %2501 = vmatpush1.msra.mxu0 0.0
        %2502 = vmatprep.mubr.f32.mxu0 0.0
        %2503 = vmatmul.mubr.f32.gmra.mrb[0].mxu0 %v2436
        %v2504 = vpop.f32.mrb[0].mxu0
        %v2505 = vadd.f32 0.0, %v2504
        %v2506 = vpop.f32.mrb[0].mxu0
        %2507 = vdwg.mxu0
        %v2508 = vsel %vm632, %v2286, 0.0
        %v2509 = vsel %vm632, %v2359, 0.0
        %v2510 = vadd.f32 %v2508, %v2509
        %v2511 = vsel %vm632, %v2432, 0.0
        %v2512 = vadd.f32 %v2510, %v2511
        %v2513 = vsel %vm632, %v2505, 0.0
        %v2514 = vadd.f32 %v2512, %v2513
        %v2515 = vadd.f32 %v586, %v2514
        %v2516 = vld [vmem:[%s9] sm:$0x1]
        %v2517 = vld [vmem:[%s10] sm:$0x1]
        %v2518 = vsel %vm632, %v2515, 0.0
        %2519 = vadd.xlane.f32.xlu0 %v2518
        %v2520 = vpop.xlane.xlu0 %2519
        %v2521 = vrcp.pop 32.0
        %v2522 = vmul.f32 %v2520, %v2521
        %v2523 = vsub.f32 %v2515, %v2522
        %v2524 = vmul.f32 %v2523, %v2523
        %v2525 = vsel %vm632, %v2524, 0.0
        %2526 = vadd.xlane.f32.xlu0 %v2525
        %v2527 = vpop.xlane.xlu0 %2526
        %v2528 = vmul.f32 %v2527, %v2521
        %v2529 = vadd.f32 %v2528, 1e-05
        %v2530 = vrsqrt.pop %v2529
        %v2531 = vmul.f32 %v2523, %v2530
        %v2533 = vlaneseq
        %v2534 = vshrl.u32 %v2533, 7
        %v2535 = vsub.s32 0, %v2534
        %v2536 = vrot.slane %v2516, %v2535
        %v2538 = vmul.f32 %v2531, %v2536
        %v2540 = vlaneseq
        %v2541 = vshrl.u32 %v2540, 7
        %v2542 = vsub.s32 0, %v2541
        %v2543 = vrot.slane %v2517, %v2542
        %v2545 = vadd.f32 %v2538, %v2543
        %v2546 = vld [vmem:[%s11] sm:$0xff]
        %v2547 = vld [vmem:[%s11 + $0x8] sm:$0xff]
        %v2548 = vld [vmem:[%s11 + $0x10] sm:$0xff]
        %v2549 = vld [vmem:[%s11 + $0x18] sm:$0xff]
        %v2550 = vld [vmem:[%s12] sm:$0x1]
        %v2552 = vlaneseq
        %v2553 = vshrl.u32 %v2552, 7
        %v2554 = vsub.s32 0, %v2553
        %v2555 = vrot.slane %v2550, %v2554
        %v2558 = vsel %vm632, %v2545, 0
        %2560 = vmatprep.subr.mxu0 0.0
        %2561 = vmatpush1.msra.mxu0 %v2546
        %2562 = vmatprep.subr.mxu0 0.0
        %2563 = vmatpush1.msra.mxu0 %v2547
        %2564 = vmatprep.subr.mxu0 0.0
        %2565 = vmatpush1.msra.mxu0 %v2548
        %2566 = vmatprep.subr.mxu0 0.0
        %2567 = vmatpush1.msra.mxu0 %v2549
        %2568 = vmatprep.subr.mxu0 0.0
        %2569 = vmatpush1.msra.mxu0 0.0
        %2570 = vmatprep.subr.mxu0 0.0
        %2571 = vmatpush1.msra.mxu0 0.0
        %2572 = vmatprep.subr.mxu0 0.0
        %2573 = vmatpush1.msra.mxu0 0.0
        %2574 = vmatprep.subr.mxu0 0.0
        %2575 = vmatpush1.msra.mxu0 0.0
        %2576 = vmatprep.subr.mxu0 0.0
        %2577 = vmatpush1.msra.mxu0 0.0
        %2578 = vmatprep.subr.mxu0 0.0
        %2579 = vmatpush1.msra.mxu0 0.0
        %2580 = vmatprep.subr.mxu0 0.0
        %2581 = vmatpush1.msra.mxu0 0.0
        %2582 = vmatprep.subr.mxu0 0.0
        %2583 = vmatpush1.msra.mxu0 0.0
        %2584 = vmatprep.subr.mxu0 0.0
        %2585 = vmatpush1.msra.mxu0 0.0
        %2586 = vmatprep.subr.mxu0 0.0
        %2587 = vmatpush1.msra.mxu0 0.0
        %2588 = vmatprep.subr.mxu0 0.0
        %2589 = vmatpush1.msra.mxu0 0.0
        %2590 = vmatprep.subr.mxu0 0.0
        %2591 = vmatpush1.msra.mxu0 0.0
        %2592 = vmatprep.subr.mxu0 0.0
        %2593 = vmatpush1.msra.mxu0 0.0
        %2594 = vmatprep.subr.mxu0 0.0
        %2595 = vmatpush1.msra.mxu0 0.0
        %2596 = vmatprep.subr.mxu0 0.0
        %2597 = vmatpush1.msra.mxu0 0.0
        %2598 = vmatprep.subr.mxu0 0.0
        %2599 = vmatpush1.msra.mxu0 0.0
        %2600 = vmatprep.subr.mxu0 0.0
        %2601 = vmatpush1.msra.mxu0 0.0
        %2602 = vmatprep.subr.mxu0 0.0
        %2603 = vmatpush1.msra.mxu0 0.0
        %2604 = vmatprep.subr.mxu0 0.0
        %2605 = vmatpush1.msra.mxu0 0.0
        %2606 = vmatprep.subr.mxu0 0.0
        %2607 = vmatpush1.msra.mxu0 0.0
        %2608 = vmatprep.subr.mxu0 0.0
        %2609 = vmatpush1.msra.mxu0 0.0
        %2610 = vmatprep.subr.mxu0 0.0
        %2611 = vmatpush1.msra.mxu0 0.0
        %2612 = vmatprep.subr.mxu0 0.0
        %2613 = vmatpush1.msra.mxu0 0.0
        %2614 = vmatprep.subr.mxu0 0.0
        %2615 = vmatpush1.msra.mxu0 0.0
        %2616 = vmatprep.subr.mxu0 0.0
        %2617 = vmatpush1.msra.mxu0 0.0
        %2618 = vmatprep.subr.mxu0 0.0
        %2619 = vmatpush1.msra.mxu0 0.0
        %2620 = vmatprep.subr.mxu0 0.0
        %2621 = vmatpush1.msra.mxu0 0.0
        %2622 = vmatprep.subr.mxu0 0.0
        %2623 = vmatpush1.msra.mxu0 0.0
        %2624 = vmatprep.mubr.f32.mxu0 0.0
        %2625 = vmatmul.mubr.f32.gmra.mrb[0].mxu0 %v2558
        %v2626 = vpop.f32.mrb[0].mxu0
        %v2627 = vadd.f32 %v2555, %v2626
        %v2628 = vpop.f32.mrb[0].mxu0
        %2629 = vdwg.mxu0
        %v2630 = vmul.f32 %v2627, 0.5
        %v2631 = vmul.f32 %v2627, 0.70710677
        %v2632 = verf.f32.pop %v2631
        %v2633 = vadd.f32 %v2632, 1.0
        %v2634 = vmul.f32 %v2630, %v2633
        %v2635 = vld [vmem:[%s13] sm:$0xff]
        %v2636 = vld [vmem:[%s13 + $0x8] sm:$0xff]
        %v2637 = vld [vmem:[%s13 + $0x10] sm:$0xff]
        %v2638 = vld [vmem:[%s13 + $0x18] sm:$0xff]
        %v2639 = vld [vmem:[%s13 + $0x20] sm:$0xff]
        %v2640 = vld [vmem:[%s13 + $0x28] sm:$0xff]
        %v2641 = vld [vmem:[%s13 + $0x30] sm:$0xff]
        %v2642 = vld [vmem:[%s13 + $0x38] sm:$0xff]
        %v2643 = vld [vmem:[%s14] sm:$0x1]
        %v2645 = vlaneseq
        %v2646 = vshrl.u32 %v2645, 7
        %v2647 = vsub.s32 0, %v2646
        %v2648 = vrot.slane %v2643, %v2647
        %vm2650 = vcmask 523264
        %v2652 = vsel %vm2650, %v2634, 0
        %2654 = vmatprep.subr.mxu0 0.0
        %2655 = vmatpush1.msra.mxu0 %v2635
        %2656 = vmatprep.subr.mxu0 0.0
        %2657 = vmatpush1.msra.mxu0 %v2636
        %2658 = vmatprep.subr.mxu0 0.0
        %2659 = vmatpush1.msra.mxu0 %v2637
        %2660 = vmatprep.subr.mxu0 0.0
        %2661 = vmatpush1.msra.mxu0 %v2638
        %2662 = vmatprep.subr.mxu0 0.0
        %2663 = vmatpush1.msra.mxu0 %v2639
        %2664 = vmatprep.subr.mxu0 0.0
        %2665 = vmatpush1.msra.mxu0 %v2640
        %2666 = vmatprep.subr.mxu0 0.0
        %2667 = vmatpush1.msra.mxu0 %v2641
        %2668 = vmatprep.subr.mxu0 0.0
        %2669 = vmatpush1.msra.mxu0 %v2642
        %2670 = vmatprep.subr.mxu0 0.0
        %2671 = vmatpush1.msra.mxu0 0.0
        %2672 = vmatprep.subr.mxu0 0.0
        %2673 = vmatpush1.msra.mxu0 0.0
        %2674 = vmatprep.subr.mxu0 0.0
        %2675 = vmatpush1.msra.mxu0 0.0
        %2676 = vmatprep.subr.mxu0 0.0
        %2677 = vmatpush1.msra.mxu0 0.0
        %2678 = vmatprep.subr.mxu0 0.0
        %2679 = vmatpush1.msra.mxu0 0.0
        %2680 = vmatprep.subr.mxu0 0.0
        %2681 = vmatpush1.msra.mxu0 0.0
        %2682 = vmatprep.subr.mxu0 0.0
        %2683 = vmatpush1.msra.mxu0 0.0
        %2684 = vmatprep.subr.mxu0 0.0
        %2685 = vmatpush1.msra.mxu0 0.0
        %2686 = vmatprep.subr.mxu0 0.0
        %2687 = vmatpush1.msra.mxu0 0.0
        %2688 = vmatprep.subr.mxu0 0.0
        %2689 = vmatpush1.msra.mxu0 0.0
        %2690 = vmatprep.subr.mxu0 0.0
        %2691 = vmatpush1.msra.mxu0 0.0
        %2692 = vmatprep.subr.mxu0 0.0
        %2693 = vmatpush1.msra.mxu0 0.0
        %2694 = vmatprep.subr.mxu0 0.0
        %2695 = vmatpush1.msra.mxu0 0.0
        %2696 = vmatprep.subr.mxu0 0.0
        %2697 = vmatpush1.msra.mxu0 0.0
        %2698 = vmatprep.subr.mxu0 0.0
        %2699 = vmatpush1.msra.mxu0 0.0
        %2700 = vmatprep.subr.mxu0 0.0
        %2701 = vmatpush1.msra.mxu0 0.0
        %2702 = vmatprep.subr.mxu0 0.0
        %2703 = vmatpush1.msra.mxu0 0.0
        %2704 = vmatprep.subr.mxu0 0.0
        %2705 = vmatpush1.msra.mxu0 0.0
        %2706 = vmatprep.subr.mxu0 0.0
        %2707 = vmatpush1.msra.mxu0 0.0
        %2708 = vmatprep.subr.mxu0 0.0
        %2709 = vmatpush1.msra.mxu0 0.0
        %2710 = vmatprep.subr.mxu0 0.0
        %2711 = vmatpush1.msra.mxu0 0.0
        %2712 = vmatprep.subr.mxu0 0.0
        %2713 = vmatpush1.msra.mxu0 0.0
        %2714 = vmatprep.subr.mxu0 0.0
        %2715 = vmatpush1.msra.mxu0 0.0
        %2716 = vmatprep.subr.mxu0 0.0
        %2717 = vmatpush1.msra.mxu0 0.0
        %2718 = vmatprep.mubr.f32.mxu0 0.0
        %2719 = vmatmul.mubr.f32.gmra.mrb[0].mxu0 %v2652
        %v2720 = vpop.f32.mrb[0].mxu0
        %v2721 = vadd.f32 %v2648, %v2720
        %v2722 = vpop.f32.mrb[0].mxu0
        %2723 = vdwg.mxu0
        %v2724 = vadd.f32 %v2545, %v2721
        %v2725 = vld [vmem:[%s15] sm:$0x1]
        %v2726 = vld [vmem:[%s16] sm:$0x1]
        %v2727 = vsel %vm632, %v2724, 0.0
        %2728 = vadd.xlane.f32.xlu0 %v2727
        %v2729 = vpop.xlane.xlu0 %2728
        %v2730 = vmul.f32 %v2729, %v2521
        %v2731 = vsub.f32 %v2724, %v2730
        %v2732 = vmul.f32 %v2731, %v2731
        %v2733 = vsel %vm632, %v2732, 0.0
        %2734 = vadd.xlane.f32.xlu0 %v2733
        %v2735 = vpop.xlane.xlu0 %2734
        %v2736 = vmul.f32 %v2735, %v2521
        %v2737 = vadd.f32 %v2736, 1e-05
        %v2738 = vrsqrt.pop %v2737
        %v2739 = vmul.f32 %v2731, %v2738
        %v2741 = vlaneseq
        %v2742 = vshrl.u32 %v2741, 7
        %v2743 = vsub.s32 0, %v2742
        %v2744 = vrot.slane %v2725, %v2743
        %v2746 = vmul.f32 %v2739, %v2744
        %v2748 = vlaneseq
        %v2749 = vshrl.u32 %v2748, 7
        %v2750 = vsub.s32 0, %v2749
        %v2751 = vrot.slane %v2726, %v2750
        %v2753 = vadd.f32 %v2746, %v2751
        %2754 = vst.msk [vmem:[%s574] sm:$0xff] %vm632, %v2753
        %s2755 = sand.u32 %s422, 1
        %s2756 = scalar_lea.sflag [#allocation3], %s2755
        %s2757 = sand.u32 %s422, 1
        %s2758 = smul.addr %s2757, 8
        %s2759 = scalar_lea.vmem [#allocation2], %s2758
        // Predicated region
        $region89: #{tpu_custom_call.1} parent=87 // pred_check
          %p2760 = pneg %p432
        $region90: #{tpu_custom_call.1} parent=87 // pred_check_branch
          %2762 = sbr.rel (%p2760) target = $region92
        $region91: #{tpu_custom_call.1} parent=87 // pred_region
          %s2764 = ssub.s32 128, 128
          %2765 = vsyncadd %s2756, %s2764
          %s2766 = sadd.s32 %s36, %s35
          %s2767 = smul.addr %s2766, 128
          %s2768 = scalar_lea.hbm %s17, %s2767
          %s2770 = sshll.u32 %s2759, 4
          %s2771 = int_to_ptr.vmem [resolvable:$true] %s2770
          %2773 = dma.vmem_to_hbm [thread:$0]  %s2771, 128, %s2768, %s2756
        $region92: #{tpu_custom_call.1} parent=87 // pred_fallthru
          _
      $region88: #{tpu_custom_call.1} parent=5 // pred_fallthru
        _
      %p2774 = scmp.le.s32.totalorder 2, %s26
      // Predicated region
      $region93: #{tpu_custom_call.1} parent=5 // pred_check
        %p2775 = pneg %p2774
      $region94: #{tpu_custom_call.1} parent=5 // pred_check_branch
        %2777 = sbr.rel (%p2775) target = $region96
      $region95: #{tpu_custom_call.1} parent=5 // pred_region
        %s2778 = ssub.s32 %s26, 2
        // Predicated region
        $region97: #{tpu_custom_call.1} parent=95 // pred_check
          %p2779 = pneg %p438
        $region98: #{tpu_custom_call.1} parent=95 // pred_check_branch
          %2781 = sbr.rel (%p2779) target = $region100
        $region99: #{tpu_custom_call.1} parent=95 // pred_region
          %s2782 = sand.u32 %s423, 1
          %s2783 = scalar_lea.sflag [#allocation3], %s2782
          %s2784 = sand.u32 %s423, 1
          %s2785 = smul.addr %s2784, 8
          %s2786 = scalar_lea.vmem [#allocation2], %s2785
          %2787 = dma.done %s2783, 128
        $region100: #{tpu_custom_call.1} parent=95 // pred_fallthru
          _
      $region96: #{tpu_custom_call.1} parent=5 // pred_fallthru
        _
    $region6: #{tpu_custom_call.1} parent=1 // loop_footer
      %s30 = sadd.s32 1, %s26
    $region7: #{tpu_custom_call.1} parent=1 // loop_footer_branch
      %25 = sbr.rel target = $region3
    $region8: #{tpu_custom_call.1} parent=1 // loop_exit
      _
    %2788 = vsyncpa [#allocation3], 1
    %s2789 = scalar_lea.sflag [#allocation3], 1
    %2790 = vsyncpa %s2789, 1

</llo_original>
